<compile_context>
chip_gen: v7x
topology: tpu7x:2x2x1
jax: 0.10.0
libtpu: 0.0.40
codegen_flags: <defaults>
</compile_context>

<pallas_src>
import functools

import numpy as np
import jax
import jax.numpy as jnp
from jax.experimental import pallas as pl
from jax.experimental.pallas import tpu as pltpu


# --------------------------------------------------------------------------- #
# Pallas kernels
# --------------------------------------------------------------------------- #
def _enc_red_kernel(cols_ref, ew_ref, eb_ref, rw_ref, rb_ref, o_ref):
    """Per-cluster fused Encoder(3x3, 1->256, ReLU) + channel_reduction(1x1,
    256->128, ReLU).  bf16 operands, f32 MXU accumulation; bias+ReLU in f32;
    the (TM, 256) intermediate stays on-chip; the output is stored bf16
    (HBM writeback dominates this kernel: ~18 B in vs 256 B out per row)."""
    h = jnp.dot(cols_ref[...], ew_ref[...],
                preferred_element_type=jnp.float32)          # (TM, 256) f32
    h = jnp.maximum(h + eb_ref[...], 0.0)
    r = jnp.dot(h.astype(jnp.bfloat16), rw_ref[...],
                preferred_element_type=jnp.float32)          # (TM, 128) f32
    o_ref[...] = jnp.maximum(r + rb_ref[...], 0.0).astype(o_ref.dtype)


def _tail_kernel(feat_ref, sa_ref, ca_ref, gmat_ref, o_ref, acc_ref,
                 *, hw, num_enc, bb):
    """Fused CBAM rescale + AdaptiveAvgPool2d(1) + group-mean + softmax*k +
    standardize(+1).  Grid = (B-block [parallel], HW-tile [arbitrary]);
    pooled sum accumulated in an f32 VMEM scratch.

    Uses pooled(x * ca * sa) == ca * pooled(x * sa) (ca constant over HW).
    The HW reduction is mapped onto the MXU as bb unrolled (1,THW)x(THW,C)
    dots (sa's contraction dim already sits on lanes), instead of a
    broadcast-multiply + sublane reduce on the VPU/XLU."""
    t = pl.program_id(1)

    @pl.when(t == 0)
    def _():
        acc_ref[...] = jnp.zeros_like(acc_ref)

    # bb is a small static Python int -> this loop fully unrolls.
    for i in range(bb):
        acc_ref[i:i + 1, :] += jnp.dot(
            sa_ref[i:i + 1, :], feat_ref[i],
            preferred_element_type=jnp.float32)              # (1, C) f32

    @pl.when(t == pl.num_programs(1) - 1)
    def _():
        pooled = acc_ref[...] * ca_ref[...] * (1.0 / hw)     # (bb, C)
        g = jnp.dot(pooled, gmat_ref[...],
                    preferred_element_type=jnp.float32)      # (bb, num_enc)
        g = g - jnp.max(g, axis=1, keepdims=True)
        e = jnp.exp(g)
        p = e / jnp.sum(e, axis=1, keepdims=True)
        out = p * num_enc
        mu = jnp.mean(out, axis=1, keepdims=True)
        # torch.std default is unbiased (ddof=1); num_enc must be >= 2
        # (num_enc == 1 is NaN in the reference model as well).
        var = jnp.sum((out - mu) ** 2, axis=1, keepdims=True) / (num_enc - 1)
        o_ref[...] = (out - mu) * jax.lax.rsqrt(var) + 1.0


# --------------------------------------------------------------------------- #
# Pallas wrappers
# --------------------------------------------------------------------------- #
def _round_up(x, m):
    return (x + m - 1) // m * m


def _pick_m_tile(M):
    """Largest of (512, 256, 128) dividing M -> no HBM zero-pad copy and no
    out[:M] slice copy.  Fallback pads (rare)."""
    for c in (512, 256, 128):
        if M % c == 0:
            return c, M
    c = 128 if M >= 128 else _round_up(M, 16)
    return c, _round_up(M, c)


def _pick_hw_tile(HW, bb, C):
    """Largest of (512, 256, 128) dividing HW whose bf16 feat block stays
    under ~4 MiB (double-buffered tail then fits v5e's 16 MiB default scoped
    VMEM); fallback: any divisor, then pad (rare)."""
    budget = 4 << 20
    for c in (512, 256, 128):
        if HW % c == 0 and bb * c * C * 2 <= budget:
            return c, HW
    for c in (128, 256, 512):
        if HW % c == 0:
            return c, HW
    c = 128 if HW >= 128 else _round_up(HW, 16)
    return c, _round_up(HW, c)


def pallas_encode_reduce(cols, prep):
    """cols: (num_enc, M, 9) -> feat: (M, num_enc*128) bf16."""
    num_enc, M, K = cols.shape
    c_enc = prep["enc_w"].shape[-1]          # 256
    c_red = prep["red_w"].shape[-1]          # 128
    Cout = num_enc * c_red

    tm, Mp = _pick_m_tile(M)
    cols_b = cols.astype(jnp.bfloat16)
    if Mp != M:
        cols_b = jnp.zeros((num_enc, Mp, K), jnp.bfloat16).at[:, :M, :].set(cols_b)

    out = pl.pallas_call(
        _enc_red_kernel,
        out_shape=jax.ShapeDtypeStruct((Mp, Cout), jnp.bfloat16),
        grid_spec=pltpu.PrefetchScalarGridSpec(
            num_scalar_prefetch=0,
            grid=(num_enc, Mp // tm),
            in_specs=[
                # full-extent K (=9) block: do NOT pad the contraction to 128
                pl.BlockSpec((None, tm, K), lambda c, m: (c, m, 0)),
                pl.BlockSpec((None, K, c_enc), lambda c, m: (c, 0, 0)),
                pl.BlockSpec((None, 1, c_enc), lambda c, m: (c, 0, 0)),
                pl.BlockSpec((c_enc, c_red), lambda c, m: (0, 0)),
                pl.BlockSpec((1, c_red), lambda c, m: (0, 0)),
            ],
            # write straight into the channel-concatenated layout
            out_specs=pl.BlockSpec((tm, c_red), lambda c, m: (m, c)),
        ),
        compiler_params=pltpu.CompilerParams(
            dimension_semantics=("parallel", "parallel")),
    )(cols_b, prep["enc_w"], prep["enc_b"], prep["red_w"], prep["red_b"])
    if Mp != M:
        out = out[:M]
    return out


def pallas_tail(feat3, sa, ca, gmat, num_enc):
    """feat3 (B, HW, C) bf16, sa (B, HW) bf16, ca (B, C) f32 -> (B, num_enc)."""
    B, HW, C = feat3.shape
    # Batch-block axis: gives v7x's 2 TensorCores a parallel axis when B is
    # large; must satisfy the (8,128) rule -> bb % 8 == 0 or bb == B.
    bb = 8 if (B >= 16 and B % 8 == 0) else B
    thw, HWp = _pick_hw_tile(HW, bb, C)
    if HWp != HW:
        feat3 = jnp.zeros((B, HWp, C), feat3.dtype).at[:, :HW, :].set(feat3)
        sa = jnp.zeros((B, HWp), sa.dtype).at[:, :HW].set(sa)

    return pl.pallas_call(
        functools.partial(_tail_kernel, hw=HW, num_enc=num_enc, bb=bb),
        out_shape=jax.ShapeDtypeStruct((B, num_enc), jnp.float32),
        grid_spec=pltpu.PrefetchScalarGridSpec(
            num_scalar_prefetch=0,
            grid=(B // bb, HWp // thw),
            in_specs=[
                pl.BlockSpec((bb, thw, C), lambda b, t: (b, t, 0)),
                pl.BlockSpec((bb, thw), lambda b, t: (b, t)),
                pl.BlockSpec((bb, C), lambda b, t: (b, 0)),
                pl.BlockSpec((C, num_enc), lambda b, t: (0, 0)),
            ],
            out_specs=pl.BlockSpec((bb, num_enc), lambda b, t: (b, 0)),
            scratch_shapes=[pltpu.VMEM((bb, C), jnp.float32)],
        ),
        compiler_params=pltpu.CompilerParams(
            dimension_semantics=("parallel", "arbitrary")),
    )(feat3, sa, ca, gmat)


# --------------------------------------------------------------------------- #
# JAX glue (FFT extraction, im2col, clustering substitutes)
# --------------------------------------------------------------------------- #
def get_small_region(image_size, angle, length, preserve_range):
    # TODO(synk): original angle/length sector selection is not provided; use
    # a deterministic annulus preserve_range < r <= length around the centre.
    c = image_size // 2
    ii, jj = np.meshgrid(np.arange(image_size), np.arange(image_size),
                         indexing="ij")
    r = np.sqrt((ii - c) ** 2 + (jj - c) ** 2)
    sel = (r > preserve_range) & (r <= length)
    idxx, idxy = np.nonzero(sel)
    return idxx.astype(np.int32), idxy.astype(np.int32)


def fourier_intensity_extraction(x_spectrum, idxx, idxy, num_enc):
    # TODO(synk): original performs k-means on spectral intensities; replaced
    # with a deterministic equal-size partition by sorted mean log-intensity.
    vals = jnp.mean(jnp.log1p(x_spectrum[:, idxx, idxy]), axis=0)   # (P,)
    order = jnp.argsort(vals)
    P = idxx.shape[0]
    ranks = jnp.arange(P)
    labels = jnp.zeros((P,), jnp.int32).at[order].set(
        ((ranks * num_enc) // P).astype(jnp.int32))
    return labels


def im2col(x, kh, kw, pad):
    """x: (B, H, W, C) -> (B*H*W, kh*kw*C)."""
    B, H, W, C = x.shape
    xp = jnp.pad(x, ((0, 0), (pad, pad), (pad, pad), (0, 0)))
    cols = []
    for di in range(kh):
        for dj in range(kw):
            cols.append(xp[:, di:di + H, dj:dj + W, :])
    return jnp.concatenate(cols, axis=-1).reshape(B * H * W, kh * kw * C)


def extract(x, idxx, idxy, num_enc):
    B, H, W = x.shape
    # torch.fft.fftshift / ifftshift default to shifting ALL dims -- replicated.
    x_fft = jnp.fft.fftshift(jnp.fft.fft2(x))
    x_spec = jnp.abs(x_fft)
    labels = fourier_intensity_extraction(x_spec, idxx, idxy, num_enc)
    masks = jnp.zeros((num_enc, H, W), jnp.float32).at[labels, idxx, idxy].set(1.0)
    patt_c = x_fft[None, :, :, :] * masks[:, None, :, :].astype(x_fft.dtype)
    # TODO(synk): reference writes complex values into a float32 tensor before
    # ifft2 (would error in torch); we keep the complex values (intended math).
    patterns = jnp.abs(jnp.fft.ifft2(jnp.fft.ifftshift(patt_c)))
    return patterns.astype(jnp.float32)          # (num_enc, B, H, W)


def extract_model_forward(x, prep, num_enc, idxx, idxy):
    assert num_enc >= 2, "unbiased std over clusters requires k_clusters >= 2"
    B, H, W = x.shape
    HW = H * W

    patterns = extract(x, idxx, idxy, num_enc)               # (k, B, H, W)

    # ---- fused per-cluster Encoder (3x3, 1->256, ReLU) + channel_reduction
    #      (1x1, 256->128, ReLU).  [TODO(synk): Encoder arch assumed]
    p = patterns.reshape(num_enc * B, H, W, 1).astype(jnp.bfloat16)
    cols = im2col(p, 3, 3, 1).reshape(num_enc, B * HW, 9)    # (k, BHW, 9) bf16
    feat = pallas_encode_reduce(cols, prep)                  # (BHW, k*128) bf16
    C = feat.shape[-1]
    feat3 = feat.reshape(B, HW, C)

    # ---- CBAM channel attention  [TODO(synk): standard CBAM assumed]
    #      degenerate (M = B) matmuls stay in plain XLA.
    avg_p = jnp.mean(feat3, axis=1, dtype=jnp.float32)       # (B, C)
    max_p = jnp.max(feat3, axis=1).astype(jnp.float32)       # (B, C)

    def ca_mlp(v):
        return jnp.maximum(v @ prep["ca_w1"], 0.0) @ prep["ca_w2"]

    ca = jax.nn.sigmoid(ca_mlp(avg_p) + ca_mlp(max_p))       # (B, C)

    # ---- CBAM spatial attention: 7x7 conv on the 2-channel mean/max map of
    #      x1 = feat3 * ca.  The channel-mean is a contraction and the
    #      channel-max fuses the multiply into the reduce, so x1 never
    #      materializes in HBM.  The N=1-output-channel conv stays in XLA
    #      (avoids a 49x im2col expansion).
    mean_c = jnp.einsum("bhc,bc->bh", feat3, ca.astype(jnp.bfloat16),
                        preferred_element_type=jnp.float32) * (1.0 / C)
    max_c = jnp.max(feat3.astype(jnp.float32) * ca[:, None, :], axis=-1)
    s_in = jnp.stack([mean_c, max_c], axis=-1).reshape(B, H, W, 2)
    s_logit = jax.lax.conv_general_dilated(
        s_in, prep["sa_w"], window_strides=(1, 1), padding="SAME",
        dimension_numbers=("NHWC", "HWIO", "NHWC"))          # (B, H, W, 1)
    sa = jax.nn.sigmoid(s_logit[..., 0]).reshape(B, HW)      # (B, HW)

    # ---- fused channel-scale * spatial-scale * avg-pool + head (one pass)
    return pallas_tail(feat3, sa.astype(jnp.bfloat16), ca,
                       prep["gmat"], num_enc)                # (B, num_enc)


# --------------------------------------------------------------------------- #
# Parameter init (synthetic; shapes from the module defaults) + one-time prep
# --------------------------------------------------------------------------- #
def init_params(key, num_enc, c_enc=256, c_red=128, ratio=16):
    C = num_enc * c_red
    ks = jax.random.split(key, 2 * num_enc + 5)
    return {
        "enc_w": [0.1 * jax.random.normal(ks[2 * i], (9, c_enc), jnp.float32)
                  for i in range(num_enc)],
        "enc_b": [0.01 * jax.random.normal(ks[2 * i + 1], (c_enc,), jnp.float32)
                  for i in range(num_enc)],
        "red_w": 0.1 * jax.random.normal(ks[2 * num_enc], (c_enc, c_red), jnp.float32),
        "red_b": 0.01 * jax.random.normal(ks[2 * num_enc + 1], (c_red,), jnp.float32),
        "ca_w1": 0.1 * jax.random.normal(ks[2 * num_enc + 2], (C, C // ratio), jnp.float32),
        "ca_w2": 0.1 * jax.random.normal(ks[2 * num_enc + 3], (C // ratio, C), jnp.float32),
        "sa_w": 0.1 * jax.random.normal(ks[2 * num_enc + 4], (7, 7, 2, 1), jnp.float32),
    }


def prepare_params(params, num_enc):
    """One-time: stack / cast (bf16) / lay out weights for the kernels.
    Done outside the jit'd forward so nothing is re-padded per call."""
    c_red = params["red_w"].shape[1]
    C = num_enc * c_red
    group = C // num_enc
    gmat = jnp.repeat(jnp.eye(num_enc, dtype=jnp.float32), group, axis=0) / group
    return {
        "enc_w": jnp.stack(params["enc_w"]).astype(jnp.bfloat16),         # (k, 9, 256)
        "enc_b": jnp.stack(params["enc_b"])[:, None, :].astype(jnp.float32),
        "red_w": params["red_w"].astype(jnp.bfloat16),                    # (256, 128)
        "red_b": params["red_b"][None, :].astype(jnp.float32),
        "ca_w1": params["ca_w1"],
        "ca_w2": params["ca_w2"],
        "sa_w": params["sa_w"],                                           # (7,7,2,1)
        "gmat": gmat,                                                     # (C, k)
    }


if __name__ == "__main__":
    B, IMG = 2, 16
    NUM_ENC = 2                    # args.k_clusters (must be >= 2, see std)
    ANGLE, LENGTH, PRESERVE = 45, 7.0, 2.0

    key = jax.random.PRNGKey(0)
    kx, kp = jax.random.split(key)
    x = jax.random.normal(kx, (B, IMG, IMG), jnp.float32)

    idxx, idxy = get_small_region(IMG, ANGLE, LENGTH, PRESERVE)
    params = init_params(kp, NUM_ENC)
    prep = prepare_params(params, NUM_ENC)   # weights stacked/cast once

    fwd = jax.jit(lambda xx: extract_model_forward(xx, prep, NUM_ENC, idxx, idxy))
    out = fwd(x)
    jax.block_until_ready(out)
    assert out.shape == (B, NUM_ENC)
    assert not bool(jnp.isnan(out).any())
    print("KERNEL_OK")
</pallas_src>

<mosaic_0001>
module attributes {stable_mosaic.version = 11 : i64} {
  func.func @_enc_red_kernel(%arg0: i32, %arg1: i32, %arg2: memref<1x512x9xbf16, #tpu.memory_space<vmem>>, %arg3: memref<1x9x256xbf16, #tpu.memory_space<vmem>>, %arg4: memref<1x1x256xf32, #tpu.memory_space<vmem>>, %arg5: memref<256x128xbf16, #tpu.memory_space<vmem>>, %arg6: memref<1x128xf32, #tpu.memory_space<vmem>>, %arg7: memref<512x128xbf16, #tpu.memory_space<vmem>>) attributes {dimension_semantics = [#tpu.dimension_semantics<parallel>, #tpu.dimension_semantics<parallel>], iteration_bounds = array<i64: 2, 1>, scalar_prefetch = 0 : i64, scratch_operands = 0 : i64, tpu.core_type = #tpu.core_type<tc>, window_params = [{transform_indices = @transform_0, window_bounds = array<i64: 1, 512, 9>}, {transform_indices = @transform_1, window_bounds = array<i64: 1, 9, 256>}, {transform_indices = @transform_2, window_bounds = array<i64: 1, 1, 256>}, {pipeline_mode = #tpu.pipeline_mode<synchronous>, transform_indices = @transform_3, window_bounds = array<i64: 256, 128>}, {pipeline_mode = #tpu.pipeline_mode<synchronous>, transform_indices = @transform_4, window_bounds = array<i64: 1, 128>}, {transform_indices = @transform_5, window_bounds = array<i64: 512, 128>}]} {
    %c0 = arith.constant 0 : index
    %c0_0 = arith.constant 0 : index
    %c0_1 = arith.constant 0 : index
    %0 = vector.load %arg2[%c0, %c0_0, %c0_1] : memref<1x512x9xbf16, #tpu.memory_space<vmem>>, vector<1x512x9xbf16>
    %1 = vector.shape_cast %0 : vector<1x512x9xbf16> to vector<512x9xbf16>
    %c0_2 = arith.constant 0 : index
    %c0_3 = arith.constant 0 : index
    %c0_4 = arith.constant 0 : index
    %2 = vector.load %arg3[%c0_2, %c0_3, %c0_4] : memref<1x9x256xbf16, #tpu.memory_space<vmem>>, vector<1x9x256xbf16>
    %3 = vector.shape_cast %2 : vector<1x9x256xbf16> to vector<9x256xbf16>
    %cst = arith.constant dense<0.000000e+00> : vector<512x256xf32>
    %4 = tpu.matmul %1, %3, %cst {dimension_numbers = #tpu.dot_dimension_numbers<[1], [0], [0], [1], [0, 0, 1, 1], [], []>} : vector<512x9xbf16>, vector<9x256xbf16>, vector<512x256xf32> -> vector<512x256xf32>
    %c0_5 = arith.constant 0 : index
    %c0_6 = arith.constant 0 : index
    %c0_7 = arith.constant 0 : index
    %5 = vector.load %arg4[%c0_5, %c0_6, %c0_7] : memref<1x1x256xf32, #tpu.memory_space<vmem>>, vector<1x1x256xf32>
    %6 = vector.shape_cast %5 : vector<1x1x256xf32> to vector<1x256xf32>
    %7 = vector.broadcast %6 : vector<1x256xf32> to vector<512x256xf32>
    %8 = arith.addf %4, %7 : vector<512x256xf32>
    %cst_8 = arith.constant 0.000000e+00 : f32
    %9 = vector.broadcast %cst_8 : f32 to vector<512x256xf32>
    %10 = arith.maximumf %8, %9 : vector<512x256xf32>
    %11 = arith.truncf %10 : vector<512x256xf32> to vector<512x256xbf16>
    %c0_9 = arith.constant 0 : index
    %c0_10 = arith.constant 0 : index
    %12 = vector.load %arg5[%c0_9, %c0_10] : memref<256x128xbf16, #tpu.memory_space<vmem>>, vector<256x128xbf16>
    %cst_11 = arith.constant dense<0.000000e+00> : vector<512x128xf32>
    %13 = tpu.matmul %11, %12, %cst_11 {dimension_numbers = #tpu.dot_dimension_numbers<[1], [0], [0], [1], [0, 0, 1, 1], [], []>} : vector<512x256xbf16>, vector<256x128xbf16>, vector<512x128xf32> -> vector<512x128xf32>
    %c0_12 = arith.constant 0 : index
    %c0_13 = arith.constant 0 : index
    %14 = vector.load %arg6[%c0_12, %c0_13] : memref<1x128xf32, #tpu.memory_space<vmem>>, vector<1x128xf32>
    %15 = vector.broadcast %14 : vector<1x128xf32> to vector<512x128xf32>
    %16 = arith.addf %13, %15 : vector<512x128xf32>
    %cst_14 = arith.constant 0.000000e+00 : f32
    %17 = vector.broadcast %cst_14 : f32 to vector<512x128xf32>
    %18 = arith.maximumf %16, %17 : vector<512x128xf32>
    %19 = arith.truncf %18 : vector<512x128xf32> to vector<512x128xbf16>
    %c0_15 = arith.constant 0 : index
    %c0_16 = arith.constant 0 : index
    %20 = vector.load %arg7[%c0_15, %c0_16] : memref<512x128xbf16, #tpu.memory_space<vmem>>, vector<512x128xbf16>
    tpu.vector_store %arg7[%c0_15, %c0_16], %19 {strides = array<i32>} : memref<512x128xbf16, #tpu.memory_space<vmem>>, vector<512x128xbf16>,
    return
  }
  func.func @transform_0(%arg0: i32, %arg1: i32) -> (i32, i32, i32) {
    %c0_i32 = arith.constant 0 : i32
    %c0_i32_0 = arith.constant 0 : i32
    return %arg0, %arg1, %c0_i32 : i32, i32, i32
  }
  func.func @transform_1(%arg0: i32, %arg1: i32) -> (i32, i32, i32) {
    %c0_i32 = arith.constant 0 : i32
    %c0_i32_0 = arith.constant 0 : i32
    %c0_i32_1 = arith.constant 0 : i32
    return %arg0, %c0_i32, %c0_i32_0 : i32, i32, i32
  }
  func.func @transform_2(%arg0: i32, %arg1: i32) -> (i32, i32, i32) {
    %c0_i32 = arith.constant 0 : i32
    %c0_i32_0 = arith.constant 0 : i32
    %c0_i32_1 = arith.constant 0 : i32
    return %arg0, %c0_i32, %c0_i32_0 : i32, i32, i32
  }
  func.func @transform_3(%arg0: i32, %arg1: i32) -> (i32, i32) {
    %c0_i32 = arith.constant 0 : i32
    %c0_i32_0 = arith.constant 0 : i32
    %c0_i32_1 = arith.constant 0 : i32
    return %c0_i32, %c0_i32_0 : i32, i32
  }
  func.func @transform_4(%arg0: i32, %arg1: i32) -> (i32, i32) {
    %c0_i32 = arith.constant 0 : i32
    %c0_i32_0 = arith.constant 0 : i32
    %c0_i32_1 = arith.constant 0 : i32
    return %c0_i32, %c0_i32_0 : i32, i32
  }
  func.func @transform_5(%arg0: i32, %arg1: i32) -> (i32, i32) {
    %c0_i32 = arith.constant 0 : i32
    return %arg1, %arg0 : i32, i32
  }
}

module attributes {stable_mosaic.version = 11 : i64} {
  func.func @_tail_kernel(%arg0: i32, %arg1: i32, %arg2: memref<2x256x256xbf16, #tpu.memory_space<vmem>>, %arg3: memref<2x256xbf16, #tpu.memory_space<vmem>>, %arg4: memref<2x256xf32, #tpu.memory_space<vmem>>, %arg5: memref<256x2xf32, #tpu.memory_space<vmem>>, %arg6: memref<2x2xf32, #tpu.memory_space<vmem>>, %arg7: memref<2x256xf32, #tpu.memory_space<vmem>>) attributes {dimension_semantics = [#tpu.dimension_semantics<parallel>, #tpu.dimension_semantics<arbitrary>], iteration_bounds = array<i64: 1, 1>, scalar_prefetch = 0 : i64, scratch_operands = 1 : i64, tpu.core_type = #tpu.core_type<tc>, window_params = [{transform_indices = @transform_0, window_bounds = array<i64: 2, 256, 256>}, {transform_indices = @transform_1, window_bounds = array<i64: 2, 256>}, {transform_indices = @transform_2, window_bounds = array<i64: 2, 256>}, {pipeline_mode = #tpu.pipeline_mode<synchronous>, transform_indices = @transform_3, window_bounds = array<i64: 256, 2>}, {transform_indices = @transform_4, window_bounds = array<i64: 2, 2>}]} {
    %c0_i32 = arith.constant 0 : i32
    %0 = arith.cmpi eq, %arg1, %c0_i32 : i32
    %1 = arith.extui %0 : i1 to i32
    %c0_i32_0 = arith.constant 0 : i32
    %2 = arith.cmpi ne, %1, %c0_i32_0 : i32
    scf.if %2 {
      %cst_20 = arith.constant 0.000000e+00 : f32
      %20 = vector.broadcast %cst_20 : f32 to vector<2x256xf32>
      %c0_21 = arith.constant 0 : index
      %c0_22 = arith.constant 0 : index
      %21 = vector.load %arg7[%c0_21, %c0_22] : memref<2x256xf32, #tpu.memory_space<vmem>>, vector<2x256xf32>
      tpu.vector_store %arg7[%c0_21, %c0_22], %20 {strides = array<i32>} : memref<2x256xf32, #tpu.memory_space<vmem>>, vector<2x256xf32>,
    } else {
    }
    %c0 = arith.constant 0 : index
    %c0_1 = arith.constant 0 : index
    %3 = vector.load %arg7[%c0, %c0_1] : memref<2x256xf32, #tpu.memory_space<vmem>>, vector<1x256xf32>
    %c0_2 = arith.constant 0 : index
    %c0_3 = arith.constant 0 : index
    %4 = vector.load %arg3[%c0_2, %c0_3] : memref<2x256xbf16, #tpu.memory_space<vmem>>, vector<1x256xbf16>
    %c0_4 = arith.constant 0 : index
    %c0_5 = arith.constant 0 : index
    %c0_6 = arith.constant 0 : index
    %5 = vector.load %arg2[%c0_4, %c0_5, %c0_6] : memref<2x256x256xbf16, #tpu.memory_space<vmem>>, vector<1x256x256xbf16>
    %6 = vector.shape_cast %5 : vector<1x256x256xbf16> to vector<256x256xbf16>
    %cst = arith.constant dense<0.000000e+00> : vector<1x256xf32>
    %7 = tpu.matmul %4, %6, %cst {dimension_numbers = #tpu.dot_dimension_numbers<[1], [0], [0], [1], [0, 0, 1, 1], [], []>} : vector<1x256xbf16>, vector<256x256xbf16>, vector<1x256xf32> -> vector<1x256xf32>
    %8 = arith.addf %3, %7 : vector<1x256xf32>
    %c0_7 = arith.constant 0 : index
    %c0_8 = arith.constant 0 : index
    %9 = vector.load %arg7[%c0_7, %c0_8] : memref<2x256xf32, #tpu.memory_space<vmem>>, vector<1x256xf32>
    tpu.vector_store %arg7[%c0_7, %c0_8], %8 {strides = array<i32>} : memref<2x256xf32, #tpu.memory_space<vmem>>, vector<1x256xf32>,
    %c1 = arith.constant 1 : index
    %c0_9 = arith.constant 0 : index
    %10 = vector.load %arg7[%c1, %c0_9] : memref<2x256xf32, #tpu.memory_space<vmem>>, vector<1x256xf32>
    %c1_10 = arith.constant 1 : index
    %c0_11 = arith.constant 0 : index
    %11 = vector.load %arg3[%c1_10, %c0_11] : memref<2x256xbf16, #tpu.memory_space<vmem>>, vector<1x256xbf16>
    %c1_12 = arith.constant 1 : index
    %c0_13 = arith.constant 0 : index
    %c0_14 = arith.constant 0 : index
    %12 = vector.load %arg2[%c1_12, %c0_13, %c0_14] : memref<2x256x256xbf16, #tpu.memory_space<vmem>>, vector<1x256x256xbf16>
    %13 = vector.shape_cast %12 : vector<1x256x256xbf16> to vector<256x256xbf16>
    %cst_15 = arith.constant dense<0.000000e+00> : vector<1x256xf32>
    %14 = tpu.matmul %11, %13, %cst_15 {dimension_numbers = #tpu.dot_dimension_numbers<[1], [0], [0], [1], [0, 0, 1, 1], [], []>} : vector<1x256xbf16>, vector<256x256xbf16>, vector<1x256xf32> -> vector<1x256xf32>
    %15 = arith.addf %10, %14 : vector<1x256xf32>
    %c1_16 = arith.constant 1 : index
    %c0_17 = arith.constant 0 : index
    %16 = vector.load %arg7[%c1_16, %c0_17] : memref<2x256xf32, #tpu.memory_space<vmem>>, vector<1x256xf32>
    tpu.vector_store %arg7[%c1_16, %c0_17], %15 {strides = array<i32>} : memref<2x256xf32, #tpu.memory_space<vmem>>, vector<1x256xf32>,
    %c0_i32_18 = arith.constant 0 : i32
    %17 = arith.cmpi eq, %arg1, %c0_i32_18 : i32
    %18 = arith.extui %17 : i1 to i32
    %c0_i32_19 = arith.constant 0 : i32
    %19 = arith.cmpi ne, %18, %c0_i32_19 : i32
    scf.if %19 {
      %c0_20 = arith.constant 0 : index
      %c0_21 = arith.constant 0 : index
      %20 = vector.load %arg7[%c0_20, %c0_21] : memref<2x256xf32, #tpu.memory_space<vmem>>, vector<2x256xf32>
      %c0_22 = arith.constant 0 : index
      %c0_23 = arith.constant 0 : index
      %21 = vector.load %arg4[%c0_22, %c0_23] : memref<2x256xf32, #tpu.memory_space<vmem>>, vector<2x256xf32>
      %22 = arith.mulf %20, %21 : vector<2x256xf32>
      %cst_24 = arith.constant 3.906250e-03 : f32
      %23 = vector.broadcast %cst_24 : f32 to vector<2x256xf32>
      %24 = arith.mulf %22, %23 : vector<2x256xf32>
      %c0_25 = arith.constant 0 : index
      %c0_26 = arith.constant 0 : index
      %25 = vector.load %arg5[%c0_25, %c0_26] : memref<256x2xf32, #tpu.memory_space<vmem>>, vector<256x2xf32>
      %cst_27 = arith.constant dense<0.000000e+00> : vector<2x2xf32>
      %26 = tpu.matmul %24, %25, %cst_27 {dimension_numbers = #tpu.dot_dimension_numbers<[1], [0], [0], [1], [0, 0, 1, 1], [], []>} : vector<2x256xf32>, vector<256x2xf32>, vector<2x2xf32> -> vector<2x2xf32>
      %cst_28 = arith.constant dense<0xFF800000> : vector<2xf32>
      %27 = vector.multi_reduction <maximumf>, %26, %cst_28 [1] : vector<2x2xf32> to vector<2xf32>
      %28 = vector.shape_cast %27 : vector<2xf32> to vector<2x1xf32>
      %29 = vector.broadcast %28 : vector<2x1xf32> to vector<2x2xf32>
      %30 = arith.subf %26, %29 : vector<2x2xf32>
      %31 = math.exp %30 : vector<2x2xf32>
      %cst_29 = arith.constant dense<0.000000e+00> : vector<2xf32>
      %32 = vector.multi_reduction <add>, %31, %cst_29 [1] : vector<2x2xf32> to vector<2xf32>
      %33 = vector.shape_cast %32 : vector<2xf32> to vector<2x1xf32>
      %34 = vector.broadcast %33 : vector<2x1xf32> to vector<2x2xf32>
      %35 = arith.divf %31, %34 : vector<2x2xf32>
      %cst_30 = arith.constant 2.000000e+00 : f32
      %36 = vector.broadcast %cst_30 : f32 to vector<2x2xf32>
      %37 = arith.mulf %35, %36 : vector<2x2xf32>
      %cst_31 = arith.constant dense<0.000000e+00> : vector<2xf32>
      %38 = vector.multi_reduction <add>, %37, %cst_31 [1] : vector<2x2xf32> to vector<2xf32>
      %39 = vector.shape_cast %38 : vector<2xf32> to vector<2x1xf32>
      %cst_32 = arith.constant 2.000000e+00 : f32
      %40 = vector.broadcast %cst_32 : f32 to vector<2x1xf32>
      %41 = arith.divf %39, %40 : vector<2x1xf32>
      %42 = vector.broadcast %41 : vector<2x1xf32> to vector<2x2xf32>
      %43 = arith.subf %37, %42 : vector<2x2xf32>
      %44 = arith.mulf %43, %43 : vector<2x2xf32>
      %cst_33 = arith.constant dense<0.000000e+00> : vector<2xf32>
      %45 = vector.multi_reduction <add>, %44, %cst_33 [1] : vector<2x2xf32> to vector<2xf32>
      %46 = vector.shape_cast %45 : vector<2xf32> to vector<2x1xf32>
      %cst_34 = arith.constant 1.000000e+00 : f32
      %47 = vector.broadcast %cst_34 : f32 to vector<2x1xf32>
      %48 = arith.divf %46, %47 : vector<2x1xf32>
      %49 = vector.broadcast %41 : vector<2x1xf32> to vector<2x2xf32>
      %50 = arith.subf %37, %49 : vector<2x2xf32>
      %51 = math.rsqrt %48 : vector<2x1xf32>
      %52 = vector.broadcast %51 : vector<2x1xf32> to vector<2x2xf32>
      %53 = arith.mulf %50, %52 : vector<2x2xf32>
      %cst_35 = arith.constant 1.000000e+00 : f32
      %54 = vector.broadcast %cst_35 : f32 to vector<2x2xf32>
      %55 = arith.addf %53, %54 : vector<2x2xf32>
      %c0_36 = arith.constant 0 : index
      %c0_37 = arith.constant 0 : index
      %56 = vector.load %arg6[%c0_36, %c0_37] : memref<2x2xf32, #tpu.memory_space<vmem>>, vector<2x2xf32>
      tpu.vector_store %arg6[%c0_36, %c0_37], %55 {strides = array<i32>} : memref<2x2xf32, #tpu.memory_space<vmem>>, vector<2x2xf32>,
    } else {
    }
    return
  }
  func.func @transform_0(%arg0: i32, %arg1: i32) -> (i32, i32, i32) {
    %c0_i32 = arith.constant 0 : i32
    %c0_i32_0 = arith.constant 0 : i32
    return %arg0, %arg1, %c0_i32 : i32, i32, i32
  }
  func.func @transform_1(%arg0: i32, %arg1: i32) -> (i32, i32) {
    %c0_i32 = arith.constant 0 : i32
    return %arg0, %arg1 : i32, i32
  }
  func.func @transform_2(%arg0: i32, %arg1: i32) -> (i32, i32) {
    %c0_i32 = arith.constant 0 : i32
    %c0_i32_0 = arith.constant 0 : i32
    return %arg0, %c0_i32 : i32, i32
  }
  func.func @transform_3(%arg0: i32, %arg1: i32) -> (i32, i32) {
    %c0_i32 = arith.constant 0 : i32
    %c0_i32_0 = arith.constant 0 : i32
    %c0_i32_1 = arith.constant 0 : i32
    return %c0_i32, %c0_i32_0 : i32, i32
  }
  func.func @transform_4(%arg0: i32, %arg1: i32) -> (i32, i32) {
    %c0_i32 = arith.constant 0 : i32
    %c0_i32_0 = arith.constant 0 : i32
    return %arg0, %c0_i32 : i32, i32
  }
}

</mosaic_0001>

<llo_original>
// kernel: _lambda_.2
$region0: #{_lambda_.2}
  #allocation0 [shape = 'u32[]', space=smem, size = 0x4, offset = 0x4, fixed_abs, tag = 'smem constant byte address 0x4 - core index']
  #allocation1 [shape = 'u32[144,128]{1,0:T(1,128)}', space=vmem, size = 0x12000, scoped, tag = 'internal scratch']
  %s0 = inlined_call_operand.vmem [shape: bf16[2,512,9], index: 0, kind: input, shape index: {}]
  %s1 = inlined_call_operand.vmem [shape: bf16[2,9,256], index: 1, kind: input, shape index: {}]
  %s2 = inlined_call_operand.vmem [shape: f32[2,1,256], index: 2, kind: input, shape index: {}]
  %s3 = inlined_call_operand.vmem [shape: bf16[256,128], index: 3, kind: input, shape index: {}]
  %s4 = inlined_call_operand.vmem [shape: f32[1,128], index: 4, kind: input, shape index: {}]
  %s5 = inlined_call_operand.vmem [shape: bf16[512,256], index: 5, kind: output, shape index: {}]
  %s6 = sld [smem:[#allocation0]]
  $region90: #{_lambda_.2} parent=0
    _
  %s8 = ssub.s32 1, %s6
  %s9 = scalar_select 0, %s8, %s6
  $region1: #{_lambda_.2} parent=0
    #allocation2 [shape = 'u8[262144]{0}', space=vmem, size = 0x40000, scoped, tag = 'output window, operand 0']
    loop: start=0, step=1, limit=4
    $region2: #{_lambda_.2} parent=1 // loop_pre_header
      _
    $region3: #{_lambda_.2} parent=1 // loop_header
      %s11 = sphi 0, %s15
      %p12 = scmp.ge.s32.totalorder %s11, 4
      %s18 = sphi 0, %s30
      %s19 = sphi 0, %s26
      %s20 = sphi 0, %s18
      %s21 = sphi 0, %s19
      %s22 = sphi 0, %s20
      %s23 = sphi 0, %s21
      %s35 = sphi 0, %s37
      %s38 = sphi 0, %s35
      %s39 = sphi 0, %s38
      %s55 = sphi 0, %s39
      %s61 = sphi 0, %s63
      %s64 = sphi 0, %s61
      %s65 = sphi 0, %s64
      %s81 = sphi 0, %s65
      %s87 = sphi 0, %s89
      %s90 = sphi 0, %s87
      %s91 = sphi 0, %s90
      %s107 = sphi 0, %s91
      %s111 = sphi 0, %s111
      %s113 = sphi 0, %s111
      %s114 = sphi 0, %s113
      %s128 = sphi 0, %s114
      %s132 = sphi 0, %s132
      %s134 = sphi 0, %s132
      %s135 = sphi 0, %s134
      %s149 = sphi 0, %s135
      %s157 = sphi 0, %s159
      %s160 = sphi 0, %s157
      %s161 = sphi 0, %s160
      %s177 = sphi 0, %s161
    $region4: #{_lambda_.2} parent=1 // loop_header_branch
      %14 = sbr.rel (%p12) target = $region8
    $region5: #{_lambda_.2} parent=1 // loop_body
      %s16 = ssub.s32 %s11, 1
      %s17 = ssub.s32 %s11, 2
      %s24 = sadd.s32 1, %s19
      %p25 = scmp.ge.s32.totalorder %s24, 1
      %s26 = scalar_select %p25, 0, %s24
      %s27 = sadd.s32 1, %s18
      %s28 = scalar_select %p25, %s27, %s18
      %p29 = scmp.ge.s32.totalorder %s28, 2
      %s30 = scalar_select %p29, 0, %s28
      %s31 = ssub.s32 %s18, %s30
      %s32 = ssub.s32 %s19, %s26
      %s33 = sor.u32 %s31, %s32
      %p34 = scmp.eq.s32.totalorder %s33, 0
      %s36 = sadd.s32 %s35, 1
      %s37 = scalar_select %p34, %s35, %s36
      %p40 = pneg %p34
      %p41 = scmp.eq.s32.totalorder %s11, 1
      %p42 = por %p40, %p41
      %p43 = scmp.ne.s32.totalorder %s35, %s38
      %p44 = scmp.eq.s32.totalorder %s11, 0
      %p45 = por %p43, %p44
      %p46 = scmp.ne.s32.totalorder %s35, %s38
      %p47 = scmp.eq.s32.totalorder %s16, 1
      %p48 = por %p46, %p47
      %p49 = scmp.ne.s32.totalorder %s38, %s39
      %p50 = scmp.eq.s32.totalorder %s16, 0
      %p51 = por %p49, %p50
      %p52 = scmp.ne.s32.totalorder %s38, %s39
      %p53 = scmp.eq.s32.totalorder %s17, 1
      %p54 = por %p52, %p53
      %p56 = scmp.ne.s32.totalorder %s39, %s55
      %p57 = scmp.eq.s32.totalorder %s17, 0
      %p58 = por %p56, %p57
      %s59 = ssub.s32 %s18, %s30
      %p60 = scmp.eq.s32.totalorder %s59, 0
      %s62 = sadd.s32 %s61, 1
      %s63 = scalar_select %p60, %s61, %s62
      %p66 = pneg %p60
      %p67 = scmp.eq.s32.totalorder %s11, 1
      %p68 = por %p66, %p67
      %p69 = scmp.ne.s32.totalorder %s61, %s64
      %p70 = scmp.eq.s32.totalorder %s11, 0
      %p71 = por %p69, %p70
      %p72 = scmp.ne.s32.totalorder %s61, %s64
      %p73 = scmp.eq.s32.totalorder %s16, 1
      %p74 = por %p72, %p73
      %p75 = scmp.ne.s32.totalorder %s64, %s65
      %p76 = scmp.eq.s32.totalorder %s16, 0
      %p77 = por %p75, %p76
      %p78 = scmp.ne.s32.totalorder %s64, %s65
      %p79 = scmp.eq.s32.totalorder %s17, 1
      %p80 = por %p78, %p79
      %p82 = scmp.ne.s32.totalorder %s65, %s81
      %p83 = scmp.eq.s32.totalorder %s17, 0
      %p84 = por %p82, %p83
      %s85 = ssub.s32 %s18, %s30
      %p86 = scmp.eq.s32.totalorder %s85, 0
      %s88 = sadd.s32 %s87, 1
      %s89 = scalar_select %p86, %s87, %s88
      %p92 = pneg %p86
      %p93 = scmp.eq.s32.totalorder %s11, 1
      %p94 = por %p92, %p93
      %p95 = scmp.ne.s32.totalorder %s87, %s90
      %p96 = scmp.eq.s32.totalorder %s11, 0
      %p97 = por %p95, %p96
      %p98 = scmp.ne.s32.totalorder %s87, %s90
      %p99 = scmp.eq.s32.totalorder %s16, 1
      %p100 = por %p98, %p99
      %p101 = scmp.ne.s32.totalorder %s90, %s91
      %p102 = scmp.eq.s32.totalorder %s16, 0
      %p103 = por %p101, %p102
      %p104 = scmp.ne.s32.totalorder %s90, %s91
      %p105 = scmp.eq.s32.totalorder %s17, 1
      %p106 = por %p104, %p105
      %p108 = scmp.ne.s32.totalorder %s91, %s107
      %p109 = scmp.eq.s32.totalorder %s17, 0
      %p110 = por %p108, %p109
      %s112 = sadd.s32 %s111, 1
      %p115 = scmp.eq.s32.totalorder %s11, 1
      %p116 = scmp.ne.s32.totalorder %s111, %s113
      %p117 = scmp.eq.s32.totalorder %s11, 0
      %p118 = por %p116, %p117
      %p119 = scmp.ne.s32.totalorder %s111, %s113
      %p120 = scmp.eq.s32.totalorder %s16, 1
      %p121 = por %p119, %p120
      %p122 = scmp.ne.s32.totalorder %s113, %s114
      %p123 = scmp.eq.s32.totalorder %s16, 0
      %p124 = por %p122, %p123
      %p125 = scmp.ne.s32.totalorder %s113, %s114
      %p126 = scmp.eq.s32.totalorder %s17, 1
      %p127 = por %p125, %p126
      %p129 = scmp.ne.s32.totalorder %s114, %s128
      %p130 = scmp.eq.s32.totalorder %s17, 0
      %p131 = por %p129, %p130
      %s133 = sadd.s32 %s132, 1
      %p136 = scmp.eq.s32.totalorder %s11, 1
      %p137 = scmp.ne.s32.totalorder %s132, %s134
      %p138 = scmp.eq.s32.totalorder %s11, 0
      %p139 = por %p137, %p138
      %p140 = scmp.ne.s32.totalorder %s132, %s134
      %p141 = scmp.eq.s32.totalorder %s16, 1
      %p142 = por %p140, %p141
      %p143 = scmp.ne.s32.totalorder %s134, %s135
      %p144 = scmp.eq.s32.totalorder %s16, 0
      %p145 = por %p143, %p144
      %p146 = scmp.ne.s32.totalorder %s134, %s135
      %p147 = scmp.eq.s32.totalorder %s17, 1
      %p148 = por %p146, %p147
      %p150 = scmp.ne.s32.totalorder %s135, %s149
      %p151 = scmp.eq.s32.totalorder %s17, 0
      %p152 = por %p150, %p151
      %s153 = ssub.s32 %s19, %s26
      %s154 = ssub.s32 %s18, %s30
      %s155 = sor.u32 %s153, %s154
      %p156 = scmp.eq.s32.totalorder %s155, 0
      %s158 = sadd.s32 %s157, 1
      %s159 = scalar_select %p156, %s157, %s158
      %p162 = pneg %p156
      %p163 = scmp.eq.s32.totalorder %s11, 1
      %p164 = por %p162, %p163
      %p165 = scmp.ne.s32.totalorder %s157, %s160
      %p166 = scmp.eq.s32.totalorder %s11, 0
      %p167 = por %p165, %p166
      %p168 = scmp.ne.s32.totalorder %s157, %s160
      %p169 = scmp.eq.s32.totalorder %s16, 1
      %p170 = por %p168, %p169
      %p171 = scmp.ne.s32.totalorder %s160, %s161
      %p172 = scmp.eq.s32.totalorder %s16, 0
      %p173 = por %p171, %p172
      %p174 = scmp.ne.s32.totalorder %s160, %s161
      %p175 = scmp.eq.s32.totalorder %s17, 1
      %p176 = por %p174, %p175
      %p178 = scmp.ne.s32.totalorder %s161, %s177
      %p179 = scmp.eq.s32.totalorder %s17, 0
      %p180 = por %p178, %p179
      %p181 = scmp.le.s32.totalorder 1, %s11
      %p182 = scmp.lt.s32.totalorder %s11, 3
      %p183 = pnand %p181, %p182
      %p184 = pneg %p183
      // Predicated region
      $region9: #{_lambda_.2} parent=5 // pred_check
        _
      $region10: #{_lambda_.2} parent=5 // pred_check_branch
        %186 = sbr.rel (%p183) target = $region12
      $region11: #{_lambda_.2} parent=5 // pred_region
        %s187 = ssub.s32 %s11, 1
        // Predicated region
        $region13: #{_lambda_.2} parent=11 // pred_check
          %p188 = pneg %p124
        $region14: #{_lambda_.2} parent=11 // pred_check_branch
          %190 = sbr.rel (%p188) target = $region16
        $region15: #{_lambda_.2} parent=11 // pred_region
          _
        $region16: #{_lambda_.2} parent=11 // pred_fallthru
          _
        // Predicated region
        $region17: #{_lambda_.2} parent=11 // pred_check
          %p191 = pneg %p145
        $region18: #{_lambda_.2} parent=11 // pred_check_branch
          %193 = sbr.rel (%p191) target = $region20
        $region19: #{_lambda_.2} parent=11 // pred_region
          _
        $region20: #{_lambda_.2} parent=11 // pred_fallthru
          _
      $region12: #{_lambda_.2} parent=5 // pred_fallthru
        _
      %p194 = scmp.lt.s32.totalorder %s11, 2
      // Predicated region
      $region21: #{_lambda_.2} parent=5 // pred_check
        %p195 = pneg %p194
      $region22: #{_lambda_.2} parent=5 // pred_check_branch
        %197 = sbr.rel (%p195) target = $region24
      $region23: #{_lambda_.2} parent=5 // pred_region
        // Predicated region
        $region25: #{_lambda_.2} parent=23 // pred_check
          %p198 = pneg %p45
        $region26: #{_lambda_.2} parent=23 // pred_check_branch
          %200 = sbr.rel (%p198) target = $region28
        $region27: #{_lambda_.2} parent=23 // pred_region
          %s201 = smul.u32 64, %s19
          %p202 = scmp.lt.s32.totalorder %s18, 1
          %s203 = scalar_select %p202, %s18, 1
          %p204 = scmp.lt.s32.totalorder %s201, 63
          %s205 = scalar_select %p204, %s201, 63
          %s206 = smul.addr %s203, 64
          %s207 = sadd.s32 %s205, %s206
          %s208 = smul.addr %s207, 4
          %s209 = scalar_lea.vmem %s0, %s208
          %s210 = smul.u32 64, %s19
        $region28: #{_lambda_.2} parent=23 // pred_fallthru
          _
        // Predicated region
        $region29: #{_lambda_.2} parent=23 // pred_check
          %p211 = pneg %p71
        $region30: #{_lambda_.2} parent=23 // pred_check_branch
          %213 = sbr.rel (%p211) target = $region32
        $region31: #{_lambda_.2} parent=23 // pred_region
          %p214 = scmp.lt.s32.totalorder %s18, 1
          %s215 = scalar_select %p214, %s18, 1
          %s216 = smul.addr %s215, 4
          %s217 = smul.addr %s216, 4
          %s218 = scalar_lea.vmem %s1, %s217
        $region32: #{_lambda_.2} parent=23 // pred_fallthru
          _
        // Predicated region
        $region33: #{_lambda_.2} parent=23 // pred_check
          %p219 = pneg %p97
        $region34: #{_lambda_.2} parent=23 // pred_check_branch
          %221 = sbr.rel (%p219) target = $region36
        $region35: #{_lambda_.2} parent=23 // pred_region
          %p222 = scmp.lt.s32.totalorder %s18, 1
          %s223 = scalar_select %p222, %s18, 1
          %s224 = smul.addr %s223, 2
          %s225 = scalar_lea.vmem %s2, %s224
        $region36: #{_lambda_.2} parent=23 // pred_fallthru
          _
      $region24: #{_lambda_.2} parent=5 // pred_fallthru
        _
      %p226 = scmp.le.s32.totalorder 1, %s11
      %p227 = scmp.lt.s32.totalorder %s11, 3
      %p228 = pnand %p226, %p227
      %p229 = pneg %p228
      // Predicated region
      $region37: #{_lambda_.2} parent=5 // pred_check
        _
      $region38: #{_lambda_.2} parent=5 // pred_check_branch
        %231 = sbr.rel (%p228) target = $region40
      $region39: #{_lambda_.2} parent=5 // pred_region
        %s232 = ssub.s32 %s11, 1
        %s233 = smul.u32 64, %s21
        %p234 = scmp.lt.s32.totalorder %s20, 1
        %s235 = scalar_select %p234, %s20, 1
        %p236 = scmp.lt.s32.totalorder %s233, 63
        %s237 = scalar_select %p236, %s233, 63
        %s238 = smul.addr %s235, 64
        %s239 = sadd.s32 %s237, %s238
        %s240 = smul.addr %s239, 4
        %s241 = scalar_lea.vmem %s0, %s240
        %p242 = pneg %p51
        %p243 = pneg %p48
        %p244 = scmp.lt.s32.totalorder %s20, 1
        %s245 = scalar_select %p244, %s20, 1
        %s246 = smul.addr %s245, 4
        %s247 = smul.addr %s246, 4
        %s248 = scalar_lea.vmem %s1, %s247
        %p249 = pneg %p77
        %p250 = pneg %p74
        %p251 = scmp.lt.s32.totalorder %s20, 1
        %s252 = scalar_select %p251, %s20, 1
        %s253 = smul.addr %s252, 2
        %s254 = scalar_lea.vmem %s2, %s253
        %p255 = pneg %p103
        %p256 = pneg %p100
        %p257 = pneg %p124
        %p258 = pneg %p121
        %p259 = pneg %p145
        %p260 = pneg %p142
        %p261 = pneg %p173
        %p262 = pneg %p170
        %s263 = sand.u32 %s160, 1
        %s264 = sand.u32 %s160, 1
        %s265 = smul.addr %s264, 256
        %s266 = scalar_lea.vmem [#allocation2], %s265
        %s267 = smul.u32 64, %s21
        %p268 = scmp.lt.s32.totalorder %s20, 1
        %s269 = scalar_select %p268, %s20, 1
        %p270 = scmp.lt.s32.totalorder %s267, 63
        %s271 = scalar_select %p270, %s267, 63
        %s272 = smul.addr %s269, 64
        %s273 = sadd.s32 %s271, %s272
        %s274 = smul.addr %s273, 4
        %s275 = scalar_lea.vmem %s0, %s274
        %s276 = smul.u32 64, %s21
        %p277 = scmp.lt.s32.totalorder %s20, 1
        %s278 = scalar_select %p277, %s20, 1
        %s279 = smul.addr %s278, 4
        %s280 = smul.addr %s279, 4
        %s281 = scalar_lea.vmem %s1, %s280
        %p282 = scmp.lt.s32.totalorder %s20, 1
        %s283 = scalar_select %p282, %s20, 1
        %s284 = smul.addr %s283, 2
        %s285 = scalar_lea.vmem %s2, %s284
        %s286 = smul.u32 64, %s21
        %v288 = vld [vmem:[%s275] sm:$0xf]
        %v289 = vld [vmem:[%s275 + $0x4] sm:$0xf]
        %v290 = vld [vmem:[%s275 + $0x8] sm:$0xf]
        %v291 = vld [vmem:[%s275 + $0xc] sm:$0xf]
        %v292 = vld [vmem:[%s275 + $0x10] sm:$0xf]
        %v293 = vld [vmem:[%s275 + $0x14] sm:$0xf]
        %v294 = vld [vmem:[%s275 + $0x18] sm:$0xf]
        %v295 = vld [vmem:[%s275 + $0x1c] sm:$0xf]
        %v296 = vld [vmem:[%s275 + $0x20] sm:$0xf]
        %v297 = vld [vmem:[%s275 + $0x24] sm:$0xf]
        %v298 = vld [vmem:[%s275 + $0x28] sm:$0xf]
        %v299 = vld [vmem:[%s275 + $0x2c] sm:$0xf]
        %v300 = vld [vmem:[%s275 + $0x30] sm:$0xf]
        %v301 = vld [vmem:[%s275 + $0x34] sm:$0xf]
        %v302 = vld [vmem:[%s275 + $0x38] sm:$0xf]
        %v303 = vld [vmem:[%s275 + $0x3c] sm:$0xf]
        %v304 = vld [vmem:[%s275 + $0x40] sm:$0xf]
        %v305 = vld [vmem:[%s275 + $0x44] sm:$0xf]
        %v306 = vld [vmem:[%s275 + $0x48] sm:$0xf]
        %v307 = vld [vmem:[%s275 + $0x4c] sm:$0xf]
        %v308 = vld [vmem:[%s275 + $0x50] sm:$0xf]
        %v309 = vld [vmem:[%s275 + $0x54] sm:$0xf]
        %v310 = vld [vmem:[%s275 + $0x58] sm:$0xf]
        %v311 = vld [vmem:[%s275 + $0x5c] sm:$0xf]
        %v312 = vld [vmem:[%s275 + $0x60] sm:$0xf]
        %v313 = vld [vmem:[%s275 + $0x64] sm:$0xf]
        %v314 = vld [vmem:[%s275 + $0x68] sm:$0xf]
        %v315 = vld [vmem:[%s275 + $0x6c] sm:$0xf]
        %v316 = vld [vmem:[%s275 + $0x70] sm:$0xf]
        %v317 = vld [vmem:[%s275 + $0x74] sm:$0xf]
        %v318 = vld [vmem:[%s275 + $0x78] sm:$0xf]
        %v319 = vld [vmem:[%s275 + $0x7c] sm:$0xf]
        %v320 = vld [vmem:[%s275 + $0x80] sm:$0xf]
        %v321 = vld [vmem:[%s275 + $0x84] sm:$0xf]
        %v322 = vld [vmem:[%s275 + $0x88] sm:$0xf]
        %v323 = vld [vmem:[%s275 + $0x8c] sm:$0xf]
        %v324 = vld [vmem:[%s275 + $0x90] sm:$0xf]
        %v325 = vld [vmem:[%s275 + $0x94] sm:$0xf]
        %v326 = vld [vmem:[%s275 + $0x98] sm:$0xf]
        %v327 = vld [vmem:[%s275 + $0x9c] sm:$0xf]
        %v328 = vld [vmem:[%s275 + $0xa0] sm:$0xf]
        %v329 = vld [vmem:[%s275 + $0xa4] sm:$0xf]
        %v330 = vld [vmem:[%s275 + $0xa8] sm:$0xf]
        %v331 = vld [vmem:[%s275 + $0xac] sm:$0xf]
        %v332 = vld [vmem:[%s275 + $0xb0] sm:$0xf]
        %v333 = vld [vmem:[%s275 + $0xb4] sm:$0xf]
        %v334 = vld [vmem:[%s275 + $0xb8] sm:$0xf]
        %v335 = vld [vmem:[%s275 + $0xbc] sm:$0xf]
        %v336 = vld [vmem:[%s275 + $0xc0] sm:$0xf]
        %v337 = vld [vmem:[%s275 + $0xc4] sm:$0xf]
        %v338 = vld [vmem:[%s275 + $0xc8] sm:$0xf]
        %v339 = vld [vmem:[%s275 + $0xcc] sm:$0xf]
        %v340 = vld [vmem:[%s275 + $0xd0] sm:$0xf]
        %v341 = vld [vmem:[%s275 + $0xd4] sm:$0xf]
        %v342 = vld [vmem:[%s275 + $0xd8] sm:$0xf]
        %v343 = vld [vmem:[%s275 + $0xdc] sm:$0xf]
        %v344 = vld [vmem:[%s275 + $0xe0] sm:$0xf]
        %v345 = vld [vmem:[%s275 + $0xe4] sm:$0xf]
        %v346 = vld [vmem:[%s275 + $0xe8] sm:$0xf]
        %v347 = vld [vmem:[%s275 + $0xec] sm:$0xf]
        %v348 = vld [vmem:[%s275 + $0xf0] sm:$0xf]
        %v349 = vld [vmem:[%s275 + $0xf4] sm:$0xf]
        %v350 = vld [vmem:[%s275 + $0xf8] sm:$0xf]
        %v351 = vld [vmem:[%s275 + $0xfc] sm:$0xf]
        %v352 = vld [vmem:[%s281] sm:$0xff]
        %v353 = vld [vmem:[%s281 + $0x8] sm:$0x11]
        %v354 = vld [vmem:[%s285] sm:$0x3]
        %v356 = vlaneseq
        %v357 = vshrl.u32 %v356, 7
        %v358 = vsub.s32 0, %v357
        %v359 = vrot.slane %v354, %v358
        %v360 = vlaneseq
        %v361 = vshrl.u32 %v360, 7
        %v362 = vsub.s32 1, %v361
        %v363 = vrot.slane %v354, %v362
        %v430 = vunpack.c.l.b16 %v288
        %v431 = vunpack.c.l.b16 %v289
        %v432 = vunpack.c.l.b16 %v290
        %v433 = vunpack.c.l.b16 %v291
        %v434 = vunpack.c.l.b16 %v292
        %v435 = vunpack.c.l.b16 %v293
        %v436 = vunpack.c.l.b16 %v294
        %v437 = vunpack.c.l.b16 %v295
        %v438 = vunpack.c.l.b16 %v296
        %v439 = vunpack.c.l.b16 %v297
        %v440 = vunpack.c.l.b16 %v298
        %v441 = vunpack.c.l.b16 %v299
        %v442 = vunpack.c.l.b16 %v300
        %v443 = vunpack.c.l.b16 %v301
        %v444 = vunpack.c.l.b16 %v302
        %v445 = vunpack.c.l.b16 %v303
        %v446 = vunpack.c.l.b16 %v304
        %v447 = vunpack.c.l.b16 %v305
        %v448 = vunpack.c.l.b16 %v306
        %v449 = vunpack.c.l.b16 %v307
        %v450 = vunpack.c.l.b16 %v308
        %v451 = vunpack.c.l.b16 %v309
        %v452 = vunpack.c.l.b16 %v310
        %v453 = vunpack.c.l.b16 %v311
        %v454 = vunpack.c.l.b16 %v312
        %v455 = vunpack.c.l.b16 %v313
        %v456 = vunpack.c.l.b16 %v314
        %v457 = vunpack.c.l.b16 %v315
        %v458 = vunpack.c.l.b16 %v316
        %v459 = vunpack.c.l.b16 %v317
        %v460 = vunpack.c.l.b16 %v318
        %v461 = vunpack.c.l.b16 %v319
        %v462 = vunpack.c.l.b16 %v320
        %v463 = vunpack.c.l.b16 %v321
        %v464 = vunpack.c.l.b16 %v322
        %v465 = vunpack.c.l.b16 %v323
        %v466 = vunpack.c.l.b16 %v324
        %v467 = vunpack.c.l.b16 %v325
        %v468 = vunpack.c.l.b16 %v326
        %v469 = vunpack.c.l.b16 %v327
        %v470 = vunpack.c.l.b16 %v328
        %v471 = vunpack.c.l.b16 %v329
        %v472 = vunpack.c.l.b16 %v330
        %v473 = vunpack.c.l.b16 %v331
        %v474 = vunpack.c.l.b16 %v332
        %v475 = vunpack.c.l.b16 %v333
        %v476 = vunpack.c.l.b16 %v334
        %v477 = vunpack.c.l.b16 %v335
        %v478 = vunpack.c.l.b16 %v336
        %v479 = vunpack.c.l.b16 %v337
        %v480 = vunpack.c.l.b16 %v338
        %v481 = vunpack.c.l.b16 %v339
        %v482 = vunpack.c.l.b16 %v340
        %v483 = vunpack.c.l.b16 %v341
        %v484 = vunpack.c.l.b16 %v342
        %v485 = vunpack.c.l.b16 %v343
        %v486 = vunpack.c.l.b16 %v344
        %v487 = vunpack.c.l.b16 %v345
        %v488 = vunpack.c.l.b16 %v346
        %v489 = vunpack.c.l.b16 %v347
        %v490 = vunpack.c.l.b16 %v348
        %v491 = vunpack.c.l.b16 %v349
        %v492 = vunpack.c.l.b16 %v350
        %v493 = vunpack.c.l.b16 %v351
        %v494 = vpack.c.b16 %v431, %v430
        %v495 = vpack.c.b16 %v433, %v432
        %v496 = vpack.c.b16 %v435, %v434
        %v497 = vpack.c.b16 %v437, %v436
        %v498 = vpack.c.b16 %v439, %v438
        %v499 = vpack.c.b16 %v441, %v440
        %v500 = vpack.c.b16 %v443, %v442
        %v501 = vpack.c.b16 %v445, %v444
        %v502 = vpack.c.b16 %v447, %v446
        %v503 = vpack.c.b16 %v449, %v448
        %v504 = vpack.c.b16 %v451, %v450
        %v505 = vpack.c.b16 %v453, %v452
        %v506 = vpack.c.b16 %v455, %v454
        %v507 = vpack.c.b16 %v457, %v456
        %v508 = vpack.c.b16 %v459, %v458
        %v509 = vpack.c.b16 %v461, %v460
        %v510 = vpack.c.b16 %v463, %v462
        %v511 = vpack.c.b16 %v465, %v464
        %v512 = vpack.c.b16 %v467, %v466
        %v513 = vpack.c.b16 %v469, %v468
        %v514 = vpack.c.b16 %v471, %v470
        %v515 = vpack.c.b16 %v473, %v472
        %v516 = vpack.c.b16 %v475, %v474
        %v517 = vpack.c.b16 %v477, %v476
        %v518 = vpack.c.b16 %v479, %v478
        %v519 = vpack.c.b16 %v481, %v480
        %v520 = vpack.c.b16 %v483, %v482
        %v521 = vpack.c.b16 %v485, %v484
        %v522 = vpack.c.b16 %v487, %v486
        %v523 = vpack.c.b16 %v489, %v488
        %v524 = vpack.c.b16 %v491, %v490
        %v525 = vpack.c.b16 %v493, %v492
        %v528 = vunpack.c.l.b16 %v352
        %v529 = vunpack.c.h.b16 %v352
        %v530 = vunpack.c.l.b16 %v353
        %v531 = vunpack.c.h.b16 %v353
        %v532 = vpack.c.b16 %v530, %v528
        %v533 = vpack.c.b16 %v531, %v529
        %vm534 = vcmask 72704
        %v536 = vsel %vm534, %v494, 0
        %v539 = vsel %vm534, %v495, 0
        %v542 = vsel %vm534, %v496, 0
        %v545 = vsel %vm534, %v497, 0
        %v548 = vsel %vm534, %v498, 0
        %v551 = vsel %vm534, %v499, 0
        %v554 = vsel %vm534, %v500, 0
        %v557 = vsel %vm534, %v501, 0
        %v560 = vsel %vm534, %v502, 0
        %v563 = vsel %vm534, %v503, 0
        %v566 = vsel %vm534, %v504, 0
        %v569 = vsel %vm534, %v505, 0
        %v572 = vsel %vm534, %v506, 0
        %v575 = vsel %vm534, %v507, 0
        %v578 = vsel %vm534, %v508, 0
        %v581 = vsel %vm534, %v509, 0
        %v584 = vsel %vm534, %v510, 0
        %v587 = vsel %vm534, %v511, 0
        %v590 = vsel %vm534, %v512, 0
        %v593 = vsel %vm534, %v513, 0
        %v596 = vsel %vm534, %v514, 0
        %v599 = vsel %vm534, %v515, 0
        %v602 = vsel %vm534, %v516, 0
        %v605 = vsel %vm534, %v517, 0
        %v608 = vsel %vm534, %v518, 0
        %v611 = vsel %vm534, %v519, 0
        %v614 = vsel %vm534, %v520, 0
        %v617 = vsel %vm534, %v521, 0
        %v620 = vsel %vm534, %v522, 0
        %v623 = vsel %vm534, %v523, 0
        %v626 = vsel %vm534, %v524, 0
        %v629 = vsel %vm534, %v525, 0
        %vm631 = vcmask 1043456
        %vm632 = vcmask 1044480
        %v633 = vsel %vm631, 4294967295, 65535
        %v634 = vsel %vm632, %v633, 0
        %v636 = vand.u32 %v532, %v634
        %v639 = vand.u32 %v533, %v634
        %641 = vmatprep.subr.bf16.mxu0 %v639
        %642 = vmatpush1.bf16.msra.mxu0 %v636
        %643 = vmatprep.subr.bf16.mxu0 0
        %644 = vmatpush1.bf16.msra.mxu0 0
        %645 = vmatprep.subr.bf16.mxu0 0
        %646 = vmatpush1.bf16.msra.mxu0 0
        %647 = vmatprep.subr.bf16.mxu0 0
        %648 = vmatpush1.bf16.msra.mxu0 0
        %649 = vmatprep.subr.bf16.mxu0 0
        %650 = vmatpush1.bf16.msra.mxu0 0
        %651 = vmatprep.subr.bf16.mxu0 0
        %652 = vmatpush1.bf16.msra.mxu0 0
        %653 = vmatprep.subr.bf16.mxu0 0
        %654 = vmatpush1.bf16.msra.mxu0 0
        %655 = vmatprep.subr.bf16.mxu0 0
        %656 = vmatpush1.bf16.msra.mxu0 0
        %657 = vmatprep.subr.bf16.mxu0 0
        %658 = vmatpush1.bf16.msra.mxu0 0
        %659 = vmatprep.subr.bf16.mxu0 0
        %660 = vmatpush1.bf16.msra.mxu0 0
        %661 = vmatprep.subr.bf16.mxu0 0
        %662 = vmatpush1.bf16.msra.mxu0 0
        %663 = vmatprep.subr.bf16.mxu0 0
        %664 = vmatpush1.bf16.msra.mxu0 0
        %665 = vmatprep.subr.bf16.mxu0 0
        %666 = vmatpush1.bf16.msra.mxu0 0
        %667 = vmatprep.subr.bf16.mxu0 0
        %668 = vmatpush1.bf16.msra.mxu0 0
        %669 = vmatprep.subr.bf16.mxu0 0
        %670 = vmatpush1.bf16.msra.mxu0 0
        %671 = vmatprep.subr.bf16.mxu0 0
        %672 = vmatpush1.bf16.msra.mxu0 0
        %673 = vmatprep.mubr.bf16.mxu0 0
        %674 = vmatmul.mubr.bf16.gmra.mrb[0].mxu0 %v536
        %v675 = vpop.f32.mrb[0].mxu0
        %v676 = vadd.f32 %v359, %v675
        %v677 = vpop.f32.mrb[0].mxu0
        %v678 = vadd.f32 %v363, %v677
        %v679 = vpop.f32.mrb[0].mxu0
        %v680 = vadd.f32 %v359, %v679
        %v681 = vpop.f32.mrb[0].mxu0
        %v682 = vadd.f32 %v363, %v681
        %683 = vmatprep.mubr.bf16.mxu0 0
        %684 = vmatmul.mubr.bf16.gmra.mrb[0].mxu0 %v539
        %v685 = vpop.f32.mrb[0].mxu0
        %v686 = vadd.f32 %v359, %v685
        %v687 = vpop.f32.mrb[0].mxu0
        %v688 = vadd.f32 %v363, %v687
        %v689 = vpop.f32.mrb[0].mxu0
        %v690 = vadd.f32 %v359, %v689
        %v691 = vpop.f32.mrb[0].mxu0
        %v692 = vadd.f32 %v363, %v691
        %693 = vmatprep.mubr.bf16.mxu0 0
        %694 = vmatmul.mubr.bf16.gmra.mrb[0].mxu0 %v542
        %v695 = vpop.f32.mrb[0].mxu0
        %v696 = vadd.f32 %v359, %v695
        %v697 = vpop.f32.mrb[0].mxu0
        %v698 = vadd.f32 %v363, %v697
        %v699 = vpop.f32.mrb[0].mxu0
        %v700 = vadd.f32 %v359, %v699
        %v701 = vpop.f32.mrb[0].mxu0
        %v702 = vadd.f32 %v363, %v701
        %703 = vmatprep.mubr.bf16.mxu0 0
        %704 = vmatmul.mubr.bf16.gmra.mrb[0].mxu0 %v545
        %v705 = vpop.f32.mrb[0].mxu0
        %v706 = vadd.f32 %v359, %v705
        %v707 = vpop.f32.mrb[0].mxu0
        %v708 = vadd.f32 %v363, %v707
        %v709 = vpop.f32.mrb[0].mxu0
        %v710 = vadd.f32 %v359, %v709
        %v711 = vpop.f32.mrb[0].mxu0
        %v712 = vadd.f32 %v363, %v711
        %713 = vmatprep.mubr.bf16.mxu0 0
        %714 = vmatmul.mubr.bf16.gmra.mrb[0].mxu0 %v548
        %v715 = vpop.f32.mrb[0].mxu0
        %v716 = vadd.f32 %v359, %v715
        %v717 = vpop.f32.mrb[0].mxu0
        %v718 = vadd.f32 %v363, %v717
        %v719 = vpop.f32.mrb[0].mxu0
        %v720 = vadd.f32 %v359, %v719
        %v721 = vpop.f32.mrb[0].mxu0
        %v722 = vadd.f32 %v363, %v721
        %723 = vmatprep.mubr.bf16.mxu0 0
        %724 = vmatmul.mubr.bf16.gmra.mrb[0].mxu0 %v551
        %v725 = vpop.f32.mrb[0].mxu0
        %v726 = vadd.f32 %v359, %v725
        %v727 = vpop.f32.mrb[0].mxu0
        %v728 = vadd.f32 %v363, %v727
        %v729 = vpop.f32.mrb[0].mxu0
        %v730 = vadd.f32 %v359, %v729
        %v731 = vpop.f32.mrb[0].mxu0
        %v732 = vadd.f32 %v363, %v731
        %733 = vmatprep.mubr.bf16.mxu0 0
        %734 = vmatmul.mubr.bf16.gmra.mrb[0].mxu0 %v554
        %v735 = vpop.f32.mrb[0].mxu0
        %v736 = vadd.f32 %v359, %v735
        %v737 = vpop.f32.mrb[0].mxu0
        %v738 = vadd.f32 %v363, %v737
        %v739 = vpop.f32.mrb[0].mxu0
        %v740 = vadd.f32 %v359, %v739
        %v741 = vpop.f32.mrb[0].mxu0
        %v742 = vadd.f32 %v363, %v741
        %743 = vmatprep.mubr.bf16.mxu0 0
        %744 = vmatmul.mubr.bf16.gmra.mrb[0].mxu0 %v557
        %v745 = vpop.f32.mrb[0].mxu0
        %v746 = vadd.f32 %v359, %v745
        %v747 = vpop.f32.mrb[0].mxu0
        %v748 = vadd.f32 %v363, %v747
        %v749 = vpop.f32.mrb[0].mxu0
        %v750 = vadd.f32 %v359, %v749
        %v751 = vpop.f32.mrb[0].mxu0
        %v752 = vadd.f32 %v363, %v751
        %753 = vmatprep.mubr.bf16.mxu0 0
        %754 = vmatmul.mubr.bf16.gmra.mrb[0].mxu0 %v560
        %v755 = vpop.f32.mrb[0].mxu0
        %v756 = vadd.f32 %v359, %v755
        %v757 = vpop.f32.mrb[0].mxu0
        %v758 = vadd.f32 %v363, %v757
        %v759 = vpop.f32.mrb[0].mxu0
        %v760 = vadd.f32 %v359, %v759
        %v761 = vpop.f32.mrb[0].mxu0
        %v762 = vadd.f32 %v363, %v761
        %763 = vmatprep.mubr.bf16.mxu0 0
        %764 = vmatmul.mubr.bf16.gmra.mrb[0].mxu0 %v563
        %v765 = vpop.f32.mrb[0].mxu0
        %v766 = vadd.f32 %v359, %v765
        %v767 = vpop.f32.mrb[0].mxu0
        %v768 = vadd.f32 %v363, %v767
        %v769 = vpop.f32.mrb[0].mxu0
        %v770 = vadd.f32 %v359, %v769
        %v771 = vpop.f32.mrb[0].mxu0
        %v772 = vadd.f32 %v363, %v771
        %773 = vmatprep.mubr.bf16.mxu0 0
        %774 = vmatmul.mubr.bf16.gmra.mrb[0].mxu0 %v566
        %v775 = vpop.f32.mrb[0].mxu0
        %v776 = vadd.f32 %v359, %v775
        %v777 = vpop.f32.mrb[0].mxu0
        %v778 = vadd.f32 %v363, %v777
        %v779 = vpop.f32.mrb[0].mxu0
        %v780 = vadd.f32 %v359, %v779
        %v781 = vpop.f32.mrb[0].mxu0
        %v782 = vadd.f32 %v363, %v781
        %783 = vmatprep.mubr.bf16.mxu0 0
        %784 = vmatmul.mubr.bf16.gmra.mrb[0].mxu0 %v569
        %v785 = vpop.f32.mrb[0].mxu0
        %v786 = vadd.f32 %v359, %v785
        %v787 = vpop.f32.mrb[0].mxu0
        %v788 = vadd.f32 %v363, %v787
        %v789 = vpop.f32.mrb[0].mxu0
        %v790 = vadd.f32 %v359, %v789
        %v791 = vpop.f32.mrb[0].mxu0
        %v792 = vadd.f32 %v363, %v791
        %793 = vmatprep.mubr.bf16.mxu0 0
        %794 = vmatmul.mubr.bf16.gmra.mrb[0].mxu0 %v572
        %v795 = vpop.f32.mrb[0].mxu0
        %v796 = vadd.f32 %v359, %v795
        %v797 = vpop.f32.mrb[0].mxu0
        %v798 = vadd.f32 %v363, %v797
        %v799 = vpop.f32.mrb[0].mxu0
        %v800 = vadd.f32 %v359, %v799
        %v801 = vpop.f32.mrb[0].mxu0
        %v802 = vadd.f32 %v363, %v801
        %803 = vmatprep.mubr.bf16.mxu0 0
        %804 = vmatmul.mubr.bf16.gmra.mrb[0].mxu0 %v575
        %v805 = vpop.f32.mrb[0].mxu0
        %v806 = vadd.f32 %v359, %v805
        %v807 = vpop.f32.mrb[0].mxu0
        %v808 = vadd.f32 %v363, %v807
        %v809 = vpop.f32.mrb[0].mxu0
        %v810 = vadd.f32 %v359, %v809
        %v811 = vpop.f32.mrb[0].mxu0
        %v812 = vadd.f32 %v363, %v811
        %813 = vmatprep.mubr.bf16.mxu0 0
        %814 = vmatmul.mubr.bf16.gmra.mrb[0].mxu0 %v578
        %v815 = vpop.f32.mrb[0].mxu0
        %v816 = vadd.f32 %v359, %v815
        %v817 = vpop.f32.mrb[0].mxu0
        %v818 = vadd.f32 %v363, %v817
        %v819 = vpop.f32.mrb[0].mxu0
        %v820 = vadd.f32 %v359, %v819
        %v821 = vpop.f32.mrb[0].mxu0
        %v822 = vadd.f32 %v363, %v821
        %823 = vmatprep.mubr.bf16.mxu0 0
        %824 = vmatmul.mubr.bf16.gmra.mrb[0].mxu0 %v581
        %v825 = vpop.f32.mrb[0].mxu0
        %v826 = vadd.f32 %v359, %v825
        %v827 = vpop.f32.mrb[0].mxu0
        %v828 = vadd.f32 %v363, %v827
        %v829 = vpop.f32.mrb[0].mxu0
        %v830 = vadd.f32 %v359, %v829
        %v831 = vpop.f32.mrb[0].mxu0
        %v832 = vadd.f32 %v363, %v831
        %833 = vmatprep.mubr.bf16.mxu0 0
        %834 = vmatmul.mubr.bf16.gmra.mrb[0].mxu0 %v584
        %v835 = vpop.f32.mrb[0].mxu0
        %v836 = vadd.f32 %v359, %v835
        %v837 = vpop.f32.mrb[0].mxu0
        %v838 = vadd.f32 %v363, %v837
        %v839 = vpop.f32.mrb[0].mxu0
        %v840 = vadd.f32 %v359, %v839
        %v841 = vpop.f32.mrb[0].mxu0
        %v842 = vadd.f32 %v363, %v841
        %843 = vmatprep.mubr.bf16.mxu0 0
        %844 = vmatmul.mubr.bf16.gmra.mrb[0].mxu0 %v587
        %v845 = vpop.f32.mrb[0].mxu0
        %v846 = vadd.f32 %v359, %v845
        %v847 = vpop.f32.mrb[0].mxu0
        %v848 = vadd.f32 %v363, %v847
        %v849 = vpop.f32.mrb[0].mxu0
        %v850 = vadd.f32 %v359, %v849
        %v851 = vpop.f32.mrb[0].mxu0
        %v852 = vadd.f32 %v363, %v851
        %853 = vmatprep.mubr.bf16.mxu0 0
        %854 = vmatmul.mubr.bf16.gmra.mrb[0].mxu0 %v590
        %v855 = vpop.f32.mrb[0].mxu0
        %v856 = vadd.f32 %v359, %v855
        %v857 = vpop.f32.mrb[0].mxu0
        %v858 = vadd.f32 %v363, %v857
        %v859 = vpop.f32.mrb[0].mxu0
        %v860 = vadd.f32 %v359, %v859
        %v861 = vpop.f32.mrb[0].mxu0
        %v862 = vadd.f32 %v363, %v861
        %863 = vmatprep.mubr.bf16.mxu0 0
        %864 = vmatmul.mubr.bf16.gmra.mrb[0].mxu0 %v593
        %v865 = vpop.f32.mrb[0].mxu0
        %v866 = vadd.f32 %v359, %v865
        %v867 = vpop.f32.mrb[0].mxu0
        %v868 = vadd.f32 %v363, %v867
        %v869 = vpop.f32.mrb[0].mxu0
        %v870 = vadd.f32 %v359, %v869
        %v871 = vpop.f32.mrb[0].mxu0
        %v872 = vadd.f32 %v363, %v871
        %873 = vmatprep.mubr.bf16.mxu0 0
        %874 = vmatmul.mubr.bf16.gmra.mrb[0].mxu0 %v596
        %v875 = vpop.f32.mrb[0].mxu0
        %v876 = vadd.f32 %v359, %v875
        %v877 = vpop.f32.mrb[0].mxu0
        %v878 = vadd.f32 %v363, %v877
        %v879 = vpop.f32.mrb[0].mxu0
        %v880 = vadd.f32 %v359, %v879
        %v881 = vpop.f32.mrb[0].mxu0
        %v882 = vadd.f32 %v363, %v881
        %883 = vmatprep.mubr.bf16.mxu0 0
        %884 = vmatmul.mubr.bf16.gmra.mrb[0].mxu0 %v599
        %v885 = vpop.f32.mrb[0].mxu0
        %v886 = vadd.f32 %v359, %v885
        %v887 = vpop.f32.mrb[0].mxu0
        %v888 = vadd.f32 %v363, %v887
        %v889 = vpop.f32.mrb[0].mxu0
        %v890 = vadd.f32 %v359, %v889
        %v891 = vpop.f32.mrb[0].mxu0
        %v892 = vadd.f32 %v363, %v891
        %893 = vmatprep.mubr.bf16.mxu0 0
        %894 = vmatmul.mubr.bf16.gmra.mrb[0].mxu0 %v602
        %v895 = vpop.f32.mrb[0].mxu0
        %v896 = vadd.f32 %v359, %v895
        %v897 = vpop.f32.mrb[0].mxu0
        %v898 = vadd.f32 %v363, %v897
        %v899 = vpop.f32.mrb[0].mxu0
        %v900 = vadd.f32 %v359, %v899
        %v901 = vpop.f32.mrb[0].mxu0
        %v902 = vadd.f32 %v363, %v901
        %903 = vmatprep.mubr.bf16.mxu0 0
        %904 = vmatmul.mubr.bf16.gmra.mrb[0].mxu0 %v605
        %v905 = vpop.f32.mrb[0].mxu0
        %v906 = vadd.f32 %v359, %v905
        %v907 = vpop.f32.mrb[0].mxu0
        %v908 = vadd.f32 %v363, %v907
        %v909 = vpop.f32.mrb[0].mxu0
        %v910 = vadd.f32 %v359, %v909
        %v911 = vpop.f32.mrb[0].mxu0
        %v912 = vadd.f32 %v363, %v911
        %913 = vmatprep.mubr.bf16.mxu0 0
        %914 = vmatmul.mubr.bf16.gmra.mrb[0].mxu0 %v608
        %v915 = vpop.f32.mrb[0].mxu0
        %v916 = vadd.f32 %v359, %v915
        %v917 = vpop.f32.mrb[0].mxu0
        %v918 = vadd.f32 %v363, %v917
        %v919 = vpop.f32.mrb[0].mxu0
        %v920 = vadd.f32 %v359, %v919
        %v921 = vpop.f32.mrb[0].mxu0
        %v922 = vadd.f32 %v363, %v921
        %923 = vmatprep.mubr.bf16.mxu0 0
        %924 = vmatmul.mubr.bf16.gmra.mrb[0].mxu0 %v611
        %v925 = vpop.f32.mrb[0].mxu0
        %v926 = vadd.f32 %v359, %v925
        %v927 = vpop.f32.mrb[0].mxu0
        %v928 = vadd.f32 %v363, %v927
        %v929 = vpop.f32.mrb[0].mxu0
        %v930 = vadd.f32 %v359, %v929
        %v931 = vpop.f32.mrb[0].mxu0
        %v932 = vadd.f32 %v363, %v931
        %933 = vmatprep.mubr.bf16.mxu0 0
        %934 = vmatmul.mubr.bf16.gmra.mrb[0].mxu0 %v614
        %v935 = vpop.f32.mrb[0].mxu0
        %v936 = vadd.f32 %v359, %v935
        %v937 = vpop.f32.mrb[0].mxu0
        %v938 = vadd.f32 %v363, %v937
        %v939 = vpop.f32.mrb[0].mxu0
        %v940 = vadd.f32 %v359, %v939
        %v941 = vpop.f32.mrb[0].mxu0
        %v942 = vadd.f32 %v363, %v941
        %943 = vmatprep.mubr.bf16.mxu0 0
        %944 = vmatmul.mubr.bf16.gmra.mrb[0].mxu0 %v617
        %v945 = vpop.f32.mrb[0].mxu0
        %v946 = vadd.f32 %v359, %v945
        %v947 = vpop.f32.mrb[0].mxu0
        %v948 = vadd.f32 %v363, %v947
        %v949 = vpop.f32.mrb[0].mxu0
        %v950 = vadd.f32 %v359, %v949
        %v951 = vpop.f32.mrb[0].mxu0
        %v952 = vadd.f32 %v363, %v951
        %953 = vmatprep.mubr.bf16.mxu0 0
        %954 = vmatmul.mubr.bf16.gmra.mrb[0].mxu0 %v620
        %v955 = vpop.f32.mrb[0].mxu0
        %v956 = vadd.f32 %v359, %v955
        %v957 = vpop.f32.mrb[0].mxu0
        %v958 = vadd.f32 %v363, %v957
        %v959 = vpop.f32.mrb[0].mxu0
        %v960 = vadd.f32 %v359, %v959
        %v961 = vpop.f32.mrb[0].mxu0
        %v962 = vadd.f32 %v363, %v961
        %963 = vmatprep.mubr.bf16.mxu0 0
        %964 = vmatmul.mubr.bf16.gmra.mrb[0].mxu0 %v623
        %v965 = vpop.f32.mrb[0].mxu0
        %v966 = vadd.f32 %v359, %v965
        %v967 = vpop.f32.mrb[0].mxu0
        %v968 = vadd.f32 %v363, %v967
        %v969 = vpop.f32.mrb[0].mxu0
        %v970 = vadd.f32 %v359, %v969
        %v971 = vpop.f32.mrb[0].mxu0
        %v972 = vadd.f32 %v363, %v971
        %973 = vmatprep.mubr.bf16.mxu0 0
        %974 = vmatmul.mubr.bf16.gmra.mrb[0].mxu0 %v626
        %v975 = vpop.f32.mrb[0].mxu0
        %v976 = vadd.f32 %v359, %v975
        %v977 = vpop.f32.mrb[0].mxu0
        %v978 = vadd.f32 %v363, %v977
        %v979 = vpop.f32.mrb[0].mxu0
        %v980 = vadd.f32 %v359, %v979
        %v981 = vpop.f32.mrb[0].mxu0
        %v982 = vadd.f32 %v363, %v981
        %983 = vmatprep.mubr.bf16.mxu0 0
        %984 = vmatmul.mubr.bf16.gmra.mrb[0].mxu0 %v629
        %v985 = vpop.f32.mrb[0].mxu0
        %v986 = vadd.f32 %v359, %v985
        %v987 = vpop.f32.mrb[0].mxu0
        %v988 = vadd.f32 %v363, %v987
        %v989 = vpop.f32.mrb[0].mxu0
        %v990 = vadd.f32 %v359, %v989
        %v991 = vpop.f32.mrb[0].mxu0
        %v992 = vadd.f32 %v363, %v991
        %993 = vdwg.mxu0
        %v994 = vmax.f32 %v676, 0.0
        %v995 = vmax.f32 %v678, 0.0
        %v996 = vmax.f32 %v680, 0.0
        %v997 = vmax.f32 %v682, 0.0
        %v998 = vmax.f32 %v686, 0.0
        %v999 = vmax.f32 %v688, 0.0
        %v1000 = vmax.f32 %v690, 0.0
        %v1001 = vmax.f32 %v692, 0.0
        %v1002 = vmax.f32 %v696, 0.0
        %v1003 = vmax.f32 %v698, 0.0
        %v1004 = vmax.f32 %v700, 0.0
        %v1005 = vmax.f32 %v702, 0.0
        %v1006 = vmax.f32 %v706, 0.0
        %v1007 = vmax.f32 %v708, 0.0
        %v1008 = vmax.f32 %v710, 0.0
        %v1009 = vmax.f32 %v712, 0.0
        %v1010 = vmax.f32 %v716, 0.0
        %v1011 = vmax.f32 %v718, 0.0
        %v1012 = vmax.f32 %v720, 0.0
        %v1013 = vmax.f32 %v722, 0.0
        %v1014 = vmax.f32 %v726, 0.0
        %v1015 = vmax.f32 %v728, 0.0
        %v1016 = vmax.f32 %v730, 0.0
        %v1017 = vmax.f32 %v732, 0.0
        %v1018 = vmax.f32 %v736, 0.0
        %v1019 = vmax.f32 %v738, 0.0
        %v1020 = vmax.f32 %v740, 0.0
        %v1021 = vmax.f32 %v742, 0.0
        %v1022 = vmax.f32 %v746, 0.0
        %v1023 = vmax.f32 %v748, 0.0
        %v1024 = vmax.f32 %v750, 0.0
        %v1025 = vmax.f32 %v752, 0.0
        %v1026 = vmax.f32 %v756, 0.0
        %v1027 = vmax.f32 %v758, 0.0
        %v1028 = vmax.f32 %v760, 0.0
        %v1029 = vmax.f32 %v762, 0.0
        %v1030 = vmax.f32 %v766, 0.0
        %v1031 = vmax.f32 %v768, 0.0
        %v1032 = vmax.f32 %v770, 0.0
        %v1033 = vmax.f32 %v772, 0.0
        %v1034 = vmax.f32 %v776, 0.0
        %v1035 = vmax.f32 %v778, 0.0
        %v1036 = vmax.f32 %v780, 0.0
        %v1037 = vmax.f32 %v782, 0.0
        %v1038 = vmax.f32 %v786, 0.0
        %v1039 = vmax.f32 %v788, 0.0
        %v1040 = vmax.f32 %v790, 0.0
        %v1041 = vmax.f32 %v792, 0.0
        %v1042 = vmax.f32 %v796, 0.0
        %v1043 = vmax.f32 %v798, 0.0
        %v1044 = vmax.f32 %v800, 0.0
        %v1045 = vmax.f32 %v802, 0.0
        %v1046 = vmax.f32 %v806, 0.0
        %v1047 = vmax.f32 %v808, 0.0
        %v1048 = vmax.f32 %v810, 0.0
        %v1049 = vmax.f32 %v812, 0.0
        %v1050 = vmax.f32 %v816, 0.0
        %v1051 = vmax.f32 %v818, 0.0
        %v1052 = vmax.f32 %v820, 0.0
        %v1053 = vmax.f32 %v822, 0.0
        %v1054 = vmax.f32 %v826, 0.0
        %v1055 = vmax.f32 %v828, 0.0
        %v1056 = vmax.f32 %v830, 0.0
        %v1057 = vmax.f32 %v832, 0.0
        %v1058 = vmax.f32 %v836, 0.0
        %v1059 = vmax.f32 %v838, 0.0
        %v1060 = vmax.f32 %v840, 0.0
        %v1061 = vmax.f32 %v842, 0.0
        %v1062 = vmax.f32 %v846, 0.0
        %v1063 = vmax.f32 %v848, 0.0
        %v1064 = vmax.f32 %v850, 0.0
        %v1065 = vmax.f32 %v852, 0.0
        %v1066 = vmax.f32 %v856, 0.0
        %v1067 = vmax.f32 %v858, 0.0
        %v1068 = vmax.f32 %v860, 0.0
        %v1069 = vmax.f32 %v862, 0.0
        %v1070 = vmax.f32 %v866, 0.0
        %v1071 = vmax.f32 %v868, 0.0
        %v1072 = vmax.f32 %v870, 0.0
        %v1073 = vmax.f32 %v872, 0.0
        %v1074 = vmax.f32 %v876, 0.0
        %v1075 = vmax.f32 %v878, 0.0
        %v1076 = vmax.f32 %v880, 0.0
        %v1077 = vmax.f32 %v882, 0.0
        %v1078 = vmax.f32 %v886, 0.0
        %v1079 = vmax.f32 %v888, 0.0
        %v1080 = vmax.f32 %v890, 0.0
        %v1081 = vmax.f32 %v892, 0.0
        %v1082 = vmax.f32 %v896, 0.0
        %v1083 = vmax.f32 %v898, 0.0
        %v1084 = vmax.f32 %v900, 0.0
        %v1085 = vmax.f32 %v902, 0.0
        %v1086 = vmax.f32 %v906, 0.0
        %v1087 = vmax.f32 %v908, 0.0
        %v1088 = vmax.f32 %v910, 0.0
        %v1089 = vmax.f32 %v912, 0.0
        %v1090 = vmax.f32 %v916, 0.0
        %v1091 = vmax.f32 %v918, 0.0
        %v1092 = vmax.f32 %v920, 0.0
        %v1093 = vmax.f32 %v922, 0.0
        %v1094 = vmax.f32 %v926, 0.0
        %v1095 = vmax.f32 %v928, 0.0
        %v1096 = vmax.f32 %v930, 0.0
        %v1097 = vmax.f32 %v932, 0.0
        %v1098 = vmax.f32 %v936, 0.0
        %v1099 = vmax.f32 %v938, 0.0
        %v1100 = vmax.f32 %v940, 0.0
        %v1101 = vmax.f32 %v942, 0.0
        %v1102 = vmax.f32 %v946, 0.0
        %v1103 = vmax.f32 %v948, 0.0
        %v1104 = vmax.f32 %v950, 0.0
        %v1105 = vmax.f32 %v952, 0.0
        %v1106 = vmax.f32 %v956, 0.0
        %v1107 = vmax.f32 %v958, 0.0
        %v1108 = vmax.f32 %v960, 0.0
        %v1109 = vmax.f32 %v962, 0.0
        %v1110 = vmax.f32 %v966, 0.0
        %v1111 = vmax.f32 %v968, 0.0
        %v1112 = vmax.f32 %v970, 0.0
        %v1113 = vmax.f32 %v972, 0.0
        %v1114 = vmax.f32 %v976, 0.0
        %v1115 = vmax.f32 %v978, 0.0
        %v1116 = vmax.f32 %v980, 0.0
        %v1117 = vmax.f32 %v982, 0.0
        %v1118 = vmax.f32 %v986, 0.0
        %v1119 = vmax.f32 %v988, 0.0
        %v1120 = vmax.f32 %v990, 0.0
        %v1121 = vmax.f32 %v992, 0.0
        %v1122 = vpack.c.bf16 %v996, %v994
        %v1123 = vpack.c.bf16 %v997, %v995
        %v1124 = vpack.c.bf16 %v1000, %v998
        %v1125 = vpack.c.bf16 %v1001, %v999
        %v1126 = vpack.c.bf16 %v1004, %v1002
        %v1127 = vpack.c.bf16 %v1005, %v1003
        %v1128 = vpack.c.bf16 %v1008, %v1006
        %v1129 = vpack.c.bf16 %v1009, %v1007
        %v1130 = vpack.c.bf16 %v1012, %v1010
        %v1131 = vpack.c.bf16 %v1013, %v1011
        %v1132 = vpack.c.bf16 %v1016, %v1014
        %v1133 = vpack.c.bf16 %v1017, %v1015
        %v1134 = vpack.c.bf16 %v1020, %v1018
        %v1135 = vpack.c.bf16 %v1021, %v1019
        %v1136 = vpack.c.bf16 %v1024, %v1022
        %v1137 = vpack.c.bf16 %v1025, %v1023
        %v1138 = vpack.c.bf16 %v1028, %v1026
        %v1139 = vpack.c.bf16 %v1029, %v1027
        %v1140 = vpack.c.bf16 %v1032, %v1030
        %v1141 = vpack.c.bf16 %v1033, %v1031
        %v1142 = vpack.c.bf16 %v1036, %v1034
        %v1143 = vpack.c.bf16 %v1037, %v1035
        %v1144 = vpack.c.bf16 %v1040, %v1038
        %v1145 = vpack.c.bf16 %v1041, %v1039
        %v1146 = vpack.c.bf16 %v1044, %v1042
        %v1147 = vpack.c.bf16 %v1045, %v1043
        %v1148 = vpack.c.bf16 %v1048, %v1046
        %v1149 = vpack.c.bf16 %v1049, %v1047
        %v1150 = vpack.c.bf16 %v1052, %v1050
        %v1151 = vpack.c.bf16 %v1053, %v1051
        %v1152 = vpack.c.bf16 %v1056, %v1054
        %v1153 = vpack.c.bf16 %v1057, %v1055
        %v1154 = vpack.c.bf16 %v1060, %v1058
        %v1155 = vpack.c.bf16 %v1061, %v1059
        %v1156 = vpack.c.bf16 %v1064, %v1062
        %v1157 = vpack.c.bf16 %v1065, %v1063
        %v1158 = vpack.c.bf16 %v1068, %v1066
        %v1159 = vpack.c.bf16 %v1069, %v1067
        %v1160 = vpack.c.bf16 %v1072, %v1070
        %v1161 = vpack.c.bf16 %v1073, %v1071
        %v1162 = vpack.c.bf16 %v1076, %v1074
        %v1163 = vpack.c.bf16 %v1077, %v1075
        %v1164 = vpack.c.bf16 %v1080, %v1078
        %v1165 = vpack.c.bf16 %v1081, %v1079
        %v1166 = vpack.c.bf16 %v1084, %v1082
        %v1167 = vpack.c.bf16 %v1085, %v1083
        %v1168 = vpack.c.bf16 %v1088, %v1086
        %v1169 = vpack.c.bf16 %v1089, %v1087
        %v1170 = vpack.c.bf16 %v1092, %v1090
        %v1171 = vpack.c.bf16 %v1093, %v1091
        %v1172 = vpack.c.bf16 %v1096, %v1094
        %v1173 = vpack.c.bf16 %v1097, %v1095
        %v1174 = vpack.c.bf16 %v1100, %v1098
        %v1175 = vpack.c.bf16 %v1101, %v1099
        %v1176 = vpack.c.bf16 %v1104, %v1102
        %v1177 = vpack.c.bf16 %v1105, %v1103
        %v1178 = vpack.c.bf16 %v1108, %v1106
        %v1179 = vpack.c.bf16 %v1109, %v1107
        %v1180 = vpack.c.bf16 %v1112, %v1110
        %v1181 = vpack.c.bf16 %v1113, %v1111
        %v1182 = vpack.c.bf16 %v1116, %v1114
        %v1183 = vpack.c.bf16 %v1117, %v1115
        %v1184 = vpack.c.bf16 %v1120, %v1118
        %v1185 = vpack.c.bf16 %v1121, %v1119
        %v1186 = vld [vmem:[%s3] sm:$0xf]
        %v1187 = vld [vmem:[%s3 + $0x4] sm:$0xf]
        %v1188 = vld [vmem:[%s3 + $0x8] sm:$0xf]
        %v1189 = vld [vmem:[%s3 + $0xc] sm:$0xf]
        %v1190 = vld [vmem:[%s3 + $0x10] sm:$0xf]
        %v1191 = vld [vmem:[%s3 + $0x14] sm:$0xf]
        %v1192 = vld [vmem:[%s3 + $0x18] sm:$0xf]
        %v1193 = vld [vmem:[%s3 + $0x1c] sm:$0xf]
        %v1194 = vld [vmem:[%s3 + $0x20] sm:$0xf]
        %v1195 = vld [vmem:[%s3 + $0x24] sm:$0xf]
        %v1196 = vld [vmem:[%s3 + $0x28] sm:$0xf]
        %v1197 = vld [vmem:[%s3 + $0x2c] sm:$0xf]
        %v1198 = vld [vmem:[%s3 + $0x30] sm:$0xf]
        %v1199 = vld [vmem:[%s3 + $0x34] sm:$0xf]
        %v1200 = vld [vmem:[%s3 + $0x38] sm:$0xf]
        %v1201 = vld [vmem:[%s3 + $0x3c] sm:$0xf]
        %v1202 = vld [vmem:[%s3 + $0x40] sm:$0xf]
        %v1203 = vld [vmem:[%s3 + $0x44] sm:$0xf]
        %v1204 = vld [vmem:[%s3 + $0x48] sm:$0xf]
        %v1205 = vld [vmem:[%s3 + $0x4c] sm:$0xf]
        %v1206 = vld [vmem:[%s3 + $0x50] sm:$0xf]
        %v1207 = vld [vmem:[%s3 + $0x54] sm:$0xf]
        %v1208 = vld [vmem:[%s3 + $0x58] sm:$0xf]
        %v1209 = vld [vmem:[%s3 + $0x5c] sm:$0xf]
        %v1210 = vld [vmem:[%s3 + $0x60] sm:$0xf]
        %v1211 = vld [vmem:[%s3 + $0x64] sm:$0xf]
        %v1212 = vld [vmem:[%s3 + $0x68] sm:$0xf]
        %v1213 = vld [vmem:[%s3 + $0x6c] sm:$0xf]
        %v1214 = vld [vmem:[%s3 + $0x70] sm:$0xf]
        %v1215 = vld [vmem:[%s3 + $0x74] sm:$0xf]
        %v1216 = vld [vmem:[%s3 + $0x78] sm:$0xf]
        %v1217 = vld [vmem:[%s3 + $0x7c] sm:$0xf]
        %v1218 = vld [vmem:[%s4] sm:$0x1]
        %v1220 = vlaneseq
        %v1221 = vshrl.u32 %v1220, 7
        %v1222 = vsub.s32 0, %v1221
        %v1223 = vrot.slane %v1218, %v1222
        %v1257 = vunpack.c.l.b16 %v1186
        %v1258 = vunpack.c.l.b16 %v1187
        %v1259 = vunpack.c.l.b16 %v1188
        %v1260 = vunpack.c.l.b16 %v1189
        %v1261 = vunpack.c.l.b16 %v1190
        %v1262 = vunpack.c.l.b16 %v1191
        %v1263 = vunpack.c.l.b16 %v1192
        %v1264 = vunpack.c.l.b16 %v1193
        %v1265 = vunpack.c.l.b16 %v1194
        %v1266 = vunpack.c.l.b16 %v1195
        %v1267 = vunpack.c.l.b16 %v1196
        %v1268 = vunpack.c.l.b16 %v1197
        %v1269 = vunpack.c.l.b16 %v1198
        %v1270 = vunpack.c.l.b16 %v1199
        %v1271 = vunpack.c.l.b16 %v1200
        %v1272 = vunpack.c.l.b16 %v1201
        %v1273 = vunpack.c.l.b16 %v1202
        %v1274 = vunpack.c.l.b16 %v1203
        %v1275 = vunpack.c.l.b16 %v1204
        %v1276 = vunpack.c.l.b16 %v1205
        %v1277 = vunpack.c.l.b16 %v1206
        %v1278 = vunpack.c.l.b16 %v1207
        %v1279 = vunpack.c.l.b16 %v1208
        %v1280 = vunpack.c.l.b16 %v1209
        %v1281 = vunpack.c.l.b16 %v1210
        %v1282 = vunpack.c.l.b16 %v1211
        %v1283 = vunpack.c.l.b16 %v1212
        %v1284 = vunpack.c.l.b16 %v1213
        %v1285 = vunpack.c.l.b16 %v1214
        %v1286 = vunpack.c.l.b16 %v1215
        %v1287 = vunpack.c.l.b16 %v1216
        %v1288 = vunpack.c.l.b16 %v1217
        %v1289 = vpack.c.b16 %v1258, %v1257
        %v1290 = vpack.c.b16 %v1260, %v1259
        %v1291 = vpack.c.b16 %v1262, %v1261
        %v1292 = vpack.c.b16 %v1264, %v1263
        %v1293 = vpack.c.b16 %v1266, %v1265
        %v1294 = vpack.c.b16 %v1268, %v1267
        %v1295 = vpack.c.b16 %v1270, %v1269
        %v1296 = vpack.c.b16 %v1272, %v1271
        %v1297 = vpack.c.b16 %v1274, %v1273
        %v1298 = vpack.c.b16 %v1276, %v1275
        %v1299 = vpack.c.b16 %v1278, %v1277
        %v1300 = vpack.c.b16 %v1280, %v1279
        %v1301 = vpack.c.b16 %v1282, %v1281
        %v1302 = vpack.c.b16 %v1284, %v1283
        %v1303 = vpack.c.b16 %v1286, %v1285
        %v1304 = vpack.c.b16 %v1288, %v1287
        %1321 = vmatprep.subr.bf16.mxu0 0
        %1322 = vmatpush1.bf16.msra.mxu0 %v1289
        %1323 = vmatprep.subr.bf16.mxu0 0
        %1324 = vmatpush1.bf16.msra.mxu0 %v1290
        %1325 = vmatprep.subr.bf16.mxu0 0
        %1326 = vmatpush1.bf16.msra.mxu0 %v1291
        %1327 = vmatprep.subr.bf16.mxu0 0
        %1328 = vmatpush1.bf16.msra.mxu0 %v1292
        %1329 = vmatprep.subr.bf16.mxu0 0
        %1330 = vmatpush1.bf16.msra.mxu0 %v1293
        %1331 = vmatprep.subr.bf16.mxu0 0
        %1332 = vmatpush1.bf16.msra.mxu0 %v1294
        %1333 = vmatprep.subr.bf16.mxu0 0
        %1334 = vmatpush1.bf16.msra.mxu0 %v1295
        %1335 = vmatprep.subr.bf16.mxu0 0
        %1336 = vmatpush1.bf16.msra.mxu0 %v1296
        %1337 = vmatprep.subr.bf16.mxu0 0
        %1338 = vmatpush1.bf16.msra.mxu0 %v1297
        %1339 = vmatprep.subr.bf16.mxu0 0
        %1340 = vmatpush1.bf16.msra.mxu0 %v1298
        %1341 = vmatprep.subr.bf16.mxu0 0
        %1342 = vmatpush1.bf16.msra.mxu0 %v1299
        %1343 = vmatprep.subr.bf16.mxu0 0
        %1344 = vmatpush1.bf16.msra.mxu0 %v1300
        %1345 = vmatprep.subr.bf16.mxu0 0
        %1346 = vmatpush1.bf16.msra.mxu0 %v1301
        %1347 = vmatprep.subr.bf16.mxu0 0
        %1348 = vmatpush1.bf16.msra.mxu0 %v1302
        %1349 = vmatprep.subr.bf16.mxu0 0
        %1350 = vmatpush1.bf16.msra.mxu0 %v1303
        %1351 = vmatprep.subr.bf16.mxu0 0
        %1352 = vmatpush1.bf16.msra.mxu0 %v1304
        %1353 = vmatprep.mubr.bf16.mxu0 %v1123
        %1354 = vmatmul.mubr.bf16.gmra.mrb[0].mxu0 %v1122
        %v1355 = vpop.f32.mrb[0].mxu0
        %v1356 = vadd.f32 %v1223, %v1355
        %v1357 = vpop.f32.mrb[0].mxu0
        %v1358 = vpop.f32.mrb[0].mxu0
        %v1359 = vadd.f32 %v1223, %v1358
        %v1360 = vpop.f32.mrb[0].mxu0
        %1361 = vmatprep.mubr.bf16.mxu0 %v1125
        %1362 = vmatmul.mubr.bf16.gmra.mrb[0].mxu0 %v1124
        %v1363 = vpop.f32.mrb[0].mxu0
        %v1364 = vadd.f32 %v1223, %v1363
        %v1365 = vpop.f32.mrb[0].mxu0
        %v1366 = vpop.f32.mrb[0].mxu0
        %v1367 = vadd.f32 %v1223, %v1366
        %v1368 = vpop.f32.mrb[0].mxu0
        %1369 = vmatprep.mubr.bf16.mxu0 %v1127
        %1370 = vmatmul.mubr.bf16.gmra.mrb[0].mxu0 %v1126
        %v1371 = vpop.f32.mrb[0].mxu0
        %v1372 = vadd.f32 %v1223, %v1371
        %v1373 = vpop.f32.mrb[0].mxu0
        %v1374 = vpop.f32.mrb[0].mxu0
        %v1375 = vadd.f32 %v1223, %v1374
        %v1376 = vpop.f32.mrb[0].mxu0
        %1377 = vmatprep.mubr.bf16.mxu0 %v1129
        %1378 = vmatmul.mubr.bf16.gmra.mrb[0].mxu0 %v1128
        %v1379 = vpop.f32.mrb[0].mxu0
        %v1380 = vadd.f32 %v1223, %v1379
        %v1381 = vpop.f32.mrb[0].mxu0
        %v1382 = vpop.f32.mrb[0].mxu0
        %v1383 = vadd.f32 %v1223, %v1382
        %v1384 = vpop.f32.mrb[0].mxu0
        %1385 = vmatprep.mubr.bf16.mxu0 %v1131
        %1386 = vmatmul.mubr.bf16.gmra.mrb[0].mxu0 %v1130
        %v1387 = vpop.f32.mrb[0].mxu0
        %v1388 = vadd.f32 %v1223, %v1387
        %v1389 = vpop.f32.mrb[0].mxu0
        %v1390 = vpop.f32.mrb[0].mxu0
        %v1391 = vadd.f32 %v1223, %v1390
        %v1392 = vpop.f32.mrb[0].mxu0
        %1393 = vmatprep.mubr.bf16.mxu0 %v1133
        %1394 = vmatmul.mubr.bf16.gmra.mrb[0].mxu0 %v1132
        %v1395 = vpop.f32.mrb[0].mxu0
        %v1396 = vadd.f32 %v1223, %v1395
        %v1397 = vpop.f32.mrb[0].mxu0
        %v1398 = vpop.f32.mrb[0].mxu0
        %v1399 = vadd.f32 %v1223, %v1398
        %v1400 = vpop.f32.mrb[0].mxu0
        %1401 = vmatprep.mubr.bf16.mxu0 %v1135
        %1402 = vmatmul.mubr.bf16.gmra.mrb[0].mxu0 %v1134
        %v1403 = vpop.f32.mrb[0].mxu0
        %v1404 = vadd.f32 %v1223, %v1403
        %v1405 = vpop.f32.mrb[0].mxu0
        %v1406 = vpop.f32.mrb[0].mxu0
        %v1407 = vadd.f32 %v1223, %v1406
        %v1408 = vpop.f32.mrb[0].mxu0
        %1409 = vmatprep.mubr.bf16.mxu0 %v1137
        %1410 = vmatmul.mubr.bf16.gmra.mrb[0].mxu0 %v1136
        %v1411 = vpop.f32.mrb[0].mxu0
        %v1412 = vadd.f32 %v1223, %v1411
        %v1413 = vpop.f32.mrb[0].mxu0
        %v1414 = vpop.f32.mrb[0].mxu0
        %v1415 = vadd.f32 %v1223, %v1414
        %v1416 = vpop.f32.mrb[0].mxu0
        %1417 = vmatprep.mubr.bf16.mxu0 %v1139
        %1418 = vmatmul.mubr.bf16.gmra.mrb[0].mxu0 %v1138
        %v1419 = vpop.f32.mrb[0].mxu0
        %v1420 = vadd.f32 %v1223, %v1419
        %v1421 = vpop.f32.mrb[0].mxu0
        %v1422 = vpop.f32.mrb[0].mxu0
        %v1423 = vadd.f32 %v1223, %v1422
        %v1424 = vpop.f32.mrb[0].mxu0
        %1425 = vmatprep.mubr.bf16.mxu0 %v1141
        %1426 = vmatmul.mubr.bf16.gmra.mrb[0].mxu0 %v1140
        %v1427 = vpop.f32.mrb[0].mxu0
        %v1428 = vadd.f32 %v1223, %v1427
        %v1429 = vpop.f32.mrb[0].mxu0
        %v1430 = vpop.f32.mrb[0].mxu0
        %v1431 = vadd.f32 %v1223, %v1430
        %v1432 = vpop.f32.mrb[0].mxu0
        %1433 = vmatprep.mubr.bf16.mxu0 %v1143
        %1434 = vmatmul.mubr.bf16.gmra.mrb[0].mxu0 %v1142
        %v1435 = vpop.f32.mrb[0].mxu0
        %v1436 = vadd.f32 %v1223, %v1435
        %v1437 = vpop.f32.mrb[0].mxu0
        %v1438 = vpop.f32.mrb[0].mxu0
        %v1439 = vadd.f32 %v1223, %v1438
        %v1440 = vpop.f32.mrb[0].mxu0
        %1441 = vmatprep.mubr.bf16.mxu0 %v1145
        %1442 = vmatmul.mubr.bf16.gmra.mrb[0].mxu0 %v1144
        %v1443 = vpop.f32.mrb[0].mxu0
        %v1444 = vadd.f32 %v1223, %v1443
        %v1445 = vpop.f32.mrb[0].mxu0
        %v1446 = vpop.f32.mrb[0].mxu0
        %v1447 = vadd.f32 %v1223, %v1446
        %v1448 = vpop.f32.mrb[0].mxu0
        %1449 = vmatprep.mubr.bf16.mxu0 %v1147
        %1450 = vmatmul.mubr.bf16.gmra.mrb[0].mxu0 %v1146
        %v1451 = vpop.f32.mrb[0].mxu0
        %v1452 = vadd.f32 %v1223, %v1451
        %v1453 = vpop.f32.mrb[0].mxu0
        %v1454 = vpop.f32.mrb[0].mxu0
        %v1455 = vadd.f32 %v1223, %v1454
        %v1456 = vpop.f32.mrb[0].mxu0
        %1457 = vmatprep.mubr.bf16.mxu0 %v1149
        %1458 = vmatmul.mubr.bf16.gmra.mrb[0].mxu0 %v1148
        %v1459 = vpop.f32.mrb[0].mxu0
        %v1460 = vadd.f32 %v1223, %v1459
        %v1461 = vpop.f32.mrb[0].mxu0
        %v1462 = vpop.f32.mrb[0].mxu0
        %v1463 = vadd.f32 %v1223, %v1462
        %v1464 = vpop.f32.mrb[0].mxu0
        %1465 = vmatprep.mubr.bf16.mxu0 %v1151
        %1466 = vmatmul.mubr.bf16.gmra.mrb[0].mxu0 %v1150
        %v1467 = vpop.f32.mrb[0].mxu0
        %v1468 = vadd.f32 %v1223, %v1467
        %v1469 = vpop.f32.mrb[0].mxu0
        %v1470 = vpop.f32.mrb[0].mxu0
        %v1471 = vadd.f32 %v1223, %v1470
        %v1472 = vpop.f32.mrb[0].mxu0
        %1473 = vmatprep.mubr.bf16.mxu0 %v1153
        %1474 = vmatmul.mubr.bf16.gmra.mrb[0].mxu0 %v1152
        %v1475 = vpop.f32.mrb[0].mxu0
        %v1476 = vadd.f32 %v1223, %v1475
        %v1477 = vpop.f32.mrb[0].mxu0
        %v1478 = vpop.f32.mrb[0].mxu0
        %v1479 = vadd.f32 %v1223, %v1478
        %v1480 = vpop.f32.mrb[0].mxu0
        %1481 = vmatprep.mubr.bf16.mxu0 %v1155
        %1482 = vmatmul.mubr.bf16.gmra.mrb[0].mxu0 %v1154
        %v1483 = vpop.f32.mrb[0].mxu0
        %v1484 = vadd.f32 %v1223, %v1483
        %v1485 = vpop.f32.mrb[0].mxu0
        %v1486 = vpop.f32.mrb[0].mxu0
        %v1487 = vadd.f32 %v1223, %v1486
        %v1488 = vpop.f32.mrb[0].mxu0
        %1489 = vmatprep.mubr.bf16.mxu0 %v1157
        %1490 = vmatmul.mubr.bf16.gmra.mrb[0].mxu0 %v1156
        %v1491 = vpop.f32.mrb[0].mxu0
        %v1492 = vadd.f32 %v1223, %v1491
        %v1493 = vpop.f32.mrb[0].mxu0
        %v1494 = vpop.f32.mrb[0].mxu0
        %v1495 = vadd.f32 %v1223, %v1494
        %v1496 = vpop.f32.mrb[0].mxu0
        %1497 = vmatprep.mubr.bf16.mxu0 %v1159
        %1498 = vmatmul.mubr.bf16.gmra.mrb[0].mxu0 %v1158
        %v1499 = vpop.f32.mrb[0].mxu0
        %v1500 = vadd.f32 %v1223, %v1499
        %v1501 = vpop.f32.mrb[0].mxu0
        %v1502 = vpop.f32.mrb[0].mxu0
        %v1503 = vadd.f32 %v1223, %v1502
        %v1504 = vpop.f32.mrb[0].mxu0
        %1505 = vmatprep.mubr.bf16.mxu0 %v1161
        %1506 = vmatmul.mubr.bf16.gmra.mrb[0].mxu0 %v1160
        %v1507 = vpop.f32.mrb[0].mxu0
        %v1508 = vadd.f32 %v1223, %v1507
        %v1509 = vpop.f32.mrb[0].mxu0
        %v1510 = vpop.f32.mrb[0].mxu0
        %v1511 = vadd.f32 %v1223, %v1510
        %v1512 = vpop.f32.mrb[0].mxu0
        %1513 = vmatprep.mubr.bf16.mxu0 %v1163
        %1514 = vmatmul.mubr.bf16.gmra.mrb[0].mxu0 %v1162
        %v1515 = vpop.f32.mrb[0].mxu0
        %v1516 = vadd.f32 %v1223, %v1515
        %v1517 = vpop.f32.mrb[0].mxu0
        %v1518 = vpop.f32.mrb[0].mxu0
        %v1519 = vadd.f32 %v1223, %v1518
        %v1520 = vpop.f32.mrb[0].mxu0
        %1521 = vmatprep.mubr.bf16.mxu0 %v1165
        %1522 = vmatmul.mubr.bf16.gmra.mrb[0].mxu0 %v1164
        %v1523 = vpop.f32.mrb[0].mxu0
        %v1524 = vadd.f32 %v1223, %v1523
        %v1525 = vpop.f32.mrb[0].mxu0
        %v1526 = vpop.f32.mrb[0].mxu0
        %v1527 = vadd.f32 %v1223, %v1526
        %v1528 = vpop.f32.mrb[0].mxu0
        %1529 = vmatprep.mubr.bf16.mxu0 %v1167
        %1530 = vmatmul.mubr.bf16.gmra.mrb[0].mxu0 %v1166
        %v1531 = vpop.f32.mrb[0].mxu0
        %v1532 = vadd.f32 %v1223, %v1531
        %v1533 = vpop.f32.mrb[0].mxu0
        %v1534 = vpop.f32.mrb[0].mxu0
        %v1535 = vadd.f32 %v1223, %v1534
        %v1536 = vpop.f32.mrb[0].mxu0
        %1537 = vmatprep.mubr.bf16.mxu0 %v1169
        %1538 = vmatmul.mubr.bf16.gmra.mrb[0].mxu0 %v1168
        %v1539 = vpop.f32.mrb[0].mxu0
        %v1540 = vadd.f32 %v1223, %v1539
        %v1541 = vpop.f32.mrb[0].mxu0
        %v1542 = vpop.f32.mrb[0].mxu0
        %v1543 = vadd.f32 %v1223, %v1542
        %v1544 = vpop.f32.mrb[0].mxu0
        %1545 = vmatprep.mubr.bf16.mxu0 %v1171
        %1546 = vmatmul.mubr.bf16.gmra.mrb[0].mxu0 %v1170
        %v1547 = vpop.f32.mrb[0].mxu0
        %v1548 = vadd.f32 %v1223, %v1547
        %v1549 = vpop.f32.mrb[0].mxu0
        %v1550 = vpop.f32.mrb[0].mxu0
        %v1551 = vadd.f32 %v1223, %v1550
        %v1552 = vpop.f32.mrb[0].mxu0
        %1553 = vmatprep.mubr.bf16.mxu0 %v1173
        %1554 = vmatmul.mubr.bf16.gmra.mrb[0].mxu0 %v1172
        %v1555 = vpop.f32.mrb[0].mxu0
        %v1556 = vadd.f32 %v1223, %v1555
        %v1557 = vpop.f32.mrb[0].mxu0
        %v1558 = vpop.f32.mrb[0].mxu0
        %v1559 = vadd.f32 %v1223, %v1558
        %v1560 = vpop.f32.mrb[0].mxu0
        %1561 = vmatprep.mubr.bf16.mxu0 %v1175
        %1562 = vmatmul.mubr.bf16.gmra.mrb[0].mxu0 %v1174
        %v1563 = vpop.f32.mrb[0].mxu0
        %v1564 = vadd.f32 %v1223, %v1563
        %v1565 = vpop.f32.mrb[0].mxu0
        %v1566 = vpop.f32.mrb[0].mxu0
        %v1567 = vadd.f32 %v1223, %v1566
        %v1568 = vpop.f32.mrb[0].mxu0
        %1569 = vmatprep.mubr.bf16.mxu0 %v1177
        %1570 = vmatmul.mubr.bf16.gmra.mrb[0].mxu0 %v1176
        %v1571 = vpop.f32.mrb[0].mxu0
        %v1572 = vadd.f32 %v1223, %v1571
        %v1573 = vpop.f32.mrb[0].mxu0
        %v1574 = vpop.f32.mrb[0].mxu0
        %v1575 = vadd.f32 %v1223, %v1574
        %v1576 = vpop.f32.mrb[0].mxu0
        %1577 = vmatprep.mubr.bf16.mxu0 %v1179
        %1578 = vmatmul.mubr.bf16.gmra.mrb[0].mxu0 %v1178
        %v1579 = vpop.f32.mrb[0].mxu0
        %v1580 = vadd.f32 %v1223, %v1579
        %v1581 = vpop.f32.mrb[0].mxu0
        %v1582 = vpop.f32.mrb[0].mxu0
        %v1583 = vadd.f32 %v1223, %v1582
        %v1584 = vpop.f32.mrb[0].mxu0
        %1585 = vmatprep.mubr.bf16.mxu0 %v1181
        %1586 = vmatmul.mubr.bf16.gmra.mrb[0].mxu0 %v1180
        %v1587 = vpop.f32.mrb[0].mxu0
        %v1588 = vadd.f32 %v1223, %v1587
        %v1589 = vpop.f32.mrb[0].mxu0
        %v1590 = vpop.f32.mrb[0].mxu0
        %v1591 = vadd.f32 %v1223, %v1590
        %v1592 = vpop.f32.mrb[0].mxu0
        %1593 = vmatprep.mubr.bf16.mxu0 %v1183
        %1594 = vmatmul.mubr.bf16.gmra.mrb[0].mxu0 %v1182
        %v1595 = vpop.f32.mrb[0].mxu0
        %v1596 = vadd.f32 %v1223, %v1595
        %v1597 = vpop.f32.mrb[0].mxu0
        %v1598 = vpop.f32.mrb[0].mxu0
        %v1599 = vadd.f32 %v1223, %v1598
        %v1600 = vpop.f32.mrb[0].mxu0
        %1601 = vmatprep.mubr.bf16.mxu0 %v1185
        %1602 = vmatmul.mubr.bf16.gmra.mrb[0].mxu0 %v1184
        %v1603 = vpop.f32.mrb[0].mxu0
        %v1604 = vadd.f32 %v1223, %v1603
        %v1605 = vpop.f32.mrb[0].mxu0
        %v1606 = vpop.f32.mrb[0].mxu0
        %v1607 = vadd.f32 %v1223, %v1606
        %v1608 = vpop.f32.mrb[0].mxu0
        %1609 = vdwg.mxu0
        %v1610 = vmax.f32 %v1356, 0.0
        %v1611 = vmax.f32 %v1359, 0.0
        %v1612 = vmax.f32 %v1364, 0.0
        %v1613 = vmax.f32 %v1367, 0.0
        %v1614 = vmax.f32 %v1372, 0.0
        %v1615 = vmax.f32 %v1375, 0.0
        %v1616 = vmax.f32 %v1380, 0.0
        %v1617 = vmax.f32 %v1383, 0.0
        %v1618 = vmax.f32 %v1388, 0.0
        %v1619 = vmax.f32 %v1391, 0.0
        %v1620 = vmax.f32 %v1396, 0.0
        %v1621 = vmax.f32 %v1399, 0.0
        %v1622 = vmax.f32 %v1404, 0.0
        %v1623 = vmax.f32 %v1407, 0.0
        %v1624 = vmax.f32 %v1412, 0.0
        %v1625 = vmax.f32 %v1415, 0.0
        %v1626 = vmax.f32 %v1420, 0.0
        %v1627 = vmax.f32 %v1423, 0.0
        %v1628 = vmax.f32 %v1428, 0.0
        %v1629 = vmax.f32 %v1431, 0.0
        %v1630 = vmax.f32 %v1436, 0.0
        %v1631 = vmax.f32 %v1439, 0.0
        %v1632 = vmax.f32 %v1444, 0.0
        %v1633 = vmax.f32 %v1447, 0.0
        %v1634 = vmax.f32 %v1452, 0.0
        %v1635 = vmax.f32 %v1455, 0.0
        %v1636 = vmax.f32 %v1460, 0.0
        %v1637 = vmax.f32 %v1463, 0.0
        %v1638 = vmax.f32 %v1468, 0.0
        %v1639 = vmax.f32 %v1471, 0.0
        %v1640 = vmax.f32 %v1476, 0.0
        %v1641 = vmax.f32 %v1479, 0.0
        %v1642 = vmax.f32 %v1484, 0.0
        %v1643 = vmax.f32 %v1487, 0.0
        %v1644 = vmax.f32 %v1492, 0.0
        %v1645 = vmax.f32 %v1495, 0.0
        %v1646 = vmax.f32 %v1500, 0.0
        %v1647 = vmax.f32 %v1503, 0.0
        %v1648 = vmax.f32 %v1508, 0.0
        %v1649 = vmax.f32 %v1511, 0.0
        %v1650 = vmax.f32 %v1516, 0.0
        %v1651 = vmax.f32 %v1519, 0.0
        %v1652 = vmax.f32 %v1524, 0.0
        %v1653 = vmax.f32 %v1527, 0.0
        %v1654 = vmax.f32 %v1532, 0.0
        %v1655 = vmax.f32 %v1535, 0.0
        %v1656 = vmax.f32 %v1540, 0.0
        %v1657 = vmax.f32 %v1543, 0.0
        %v1658 = vmax.f32 %v1548, 0.0
        %v1659 = vmax.f32 %v1551, 0.0
        %v1660 = vmax.f32 %v1556, 0.0
        %v1661 = vmax.f32 %v1559, 0.0
        %v1662 = vmax.f32 %v1564, 0.0
        %v1663 = vmax.f32 %v1567, 0.0
        %v1664 = vmax.f32 %v1572, 0.0
        %v1665 = vmax.f32 %v1575, 0.0
        %v1666 = vmax.f32 %v1580, 0.0
        %v1667 = vmax.f32 %v1583, 0.0
        %v1668 = vmax.f32 %v1588, 0.0
        %v1669 = vmax.f32 %v1591, 0.0
        %v1670 = vmax.f32 %v1596, 0.0
        %v1671 = vmax.f32 %v1599, 0.0
        %v1672 = vmax.f32 %v1604, 0.0
        %v1673 = vmax.f32 %v1607, 0.0
        %v1674 = vpack.c.bf16 %v1611, %v1610
        %v1675 = vpack.c.bf16 %v1613, %v1612
        %v1676 = vpack.c.bf16 %v1615, %v1614
        %v1677 = vpack.c.bf16 %v1617, %v1616
        %v1678 = vpack.c.bf16 %v1619, %v1618
        %v1679 = vpack.c.bf16 %v1621, %v1620
        %v1680 = vpack.c.bf16 %v1623, %v1622
        %v1681 = vpack.c.bf16 %v1625, %v1624
        %v1682 = vpack.c.bf16 %v1627, %v1626
        %v1683 = vpack.c.bf16 %v1629, %v1628
        %v1684 = vpack.c.bf16 %v1631, %v1630
        %v1685 = vpack.c.bf16 %v1633, %v1632
        %v1686 = vpack.c.bf16 %v1635, %v1634
        %v1687 = vpack.c.bf16 %v1637, %v1636
        %v1688 = vpack.c.bf16 %v1639, %v1638
        %v1689 = vpack.c.bf16 %v1641, %v1640
        %v1690 = vpack.c.bf16 %v1643, %v1642
        %v1691 = vpack.c.bf16 %v1645, %v1644
        %v1692 = vpack.c.bf16 %v1647, %v1646
        %v1693 = vpack.c.bf16 %v1649, %v1648
        %v1694 = vpack.c.bf16 %v1651, %v1650
        %v1695 = vpack.c.bf16 %v1653, %v1652
        %v1696 = vpack.c.bf16 %v1655, %v1654
        %v1697 = vpack.c.bf16 %v1657, %v1656
        %v1698 = vpack.c.bf16 %v1659, %v1658
        %v1699 = vpack.c.bf16 %v1661, %v1660
        %v1700 = vpack.c.bf16 %v1663, %v1662
        %v1701 = vpack.c.bf16 %v1665, %v1664
        %v1702 = vpack.c.bf16 %v1667, %v1666
        %v1703 = vpack.c.bf16 %v1669, %v1668
        %v1704 = vpack.c.bf16 %v1671, %v1670
        %v1705 = vpack.c.bf16 %v1673, %v1672
        %v1738 = vunpack.c.l.b16 %v1674
        %v1739 = vunpack.c.h.b16 %v1674
        %v1740 = vunpack.c.l.b16 %v1675
        %v1741 = vunpack.c.h.b16 %v1675
        %v1742 = vunpack.c.l.b16 %v1676
        %v1743 = vunpack.c.h.b16 %v1676
        %v1744 = vunpack.c.l.b16 %v1677
        %v1745 = vunpack.c.h.b16 %v1677
        %v1746 = vunpack.c.l.b16 %v1678
        %v1747 = vunpack.c.h.b16 %v1678
        %v1748 = vunpack.c.l.b16 %v1679
        %v1749 = vunpack.c.h.b16 %v1679
        %v1750 = vunpack.c.l.b16 %v1680
        %v1751 = vunpack.c.h.b16 %v1680
        %v1752 = vunpack.c.l.b16 %v1681
        %v1753 = vunpack.c.h.b16 %v1681
        %v1754 = vunpack.c.l.b16 %v1682
        %v1755 = vunpack.c.h.b16 %v1682
        %v1756 = vunpack.c.l.b16 %v1683
        %v1757 = vunpack.c.h.b16 %v1683
        %v1758 = vunpack.c.l.b16 %v1684
        %v1759 = vunpack.c.h.b16 %v1684
        %v1760 = vunpack.c.l.b16 %v1685
        %v1761 = vunpack.c.h.b16 %v1685
        %v1762 = vunpack.c.l.b16 %v1686
        %v1763 = vunpack.c.h.b16 %v1686
        %v1764 = vunpack.c.l.b16 %v1687
        %v1765 = vunpack.c.h.b16 %v1687
        %v1766 = vunpack.c.l.b16 %v1688
        %v1767 = vunpack.c.h.b16 %v1688
        %v1768 = vunpack.c.l.b16 %v1689
        %v1769 = vunpack.c.h.b16 %v1689
        %v1770 = vunpack.c.l.b16 %v1690
        %v1771 = vunpack.c.h.b16 %v1690
        %v1772 = vunpack.c.l.b16 %v1691
        %v1773 = vunpack.c.h.b16 %v1691
        %v1774 = vunpack.c.l.b16 %v1692
        %v1775 = vunpack.c.h.b16 %v1692
        %v1776 = vunpack.c.l.b16 %v1693
        %v1777 = vunpack.c.h.b16 %v1693
        %v1778 = vunpack.c.l.b16 %v1694
        %v1779 = vunpack.c.h.b16 %v1694
        %v1780 = vunpack.c.l.b16 %v1695
        %v1781 = vunpack.c.h.b16 %v1695
        %v1782 = vunpack.c.l.b16 %v1696
        %v1783 = vunpack.c.h.b16 %v1696
        %v1784 = vunpack.c.l.b16 %v1697
        %v1785 = vunpack.c.h.b16 %v1697
        %v1786 = vunpack.c.l.b16 %v1698
        %v1787 = vunpack.c.h.b16 %v1698
        %v1788 = vunpack.c.l.b16 %v1699
        %v1789 = vunpack.c.h.b16 %v1699
        %v1790 = vunpack.c.l.b16 %v1700
        %v1791 = vunpack.c.h.b16 %v1700
        %v1792 = vunpack.c.l.b16 %v1701
        %v1793 = vunpack.c.h.b16 %v1701
        %v1794 = vunpack.c.l.b16 %v1702
        %v1795 = vunpack.c.h.b16 %v1702
        %v1796 = vunpack.c.l.b16 %v1703
        %v1797 = vunpack.c.h.b16 %v1703
        %v1798 = vunpack.c.l.b16 %v1704
        %v1799 = vunpack.c.h.b16 %v1704
        %v1800 = vunpack.c.l.b16 %v1705
        %v1801 = vunpack.c.h.b16 %v1705
        %v1802 = vpack.c.b16 %v1738, %v1738
        %v1803 = vpack.c.b16 %v1739, %v1739
        %v1804 = vpack.c.b16 %v1740, %v1740
        %v1805 = vpack.c.b16 %v1741, %v1741
        %v1806 = vpack.c.b16 %v1742, %v1742
        %v1807 = vpack.c.b16 %v1743, %v1743
        %v1808 = vpack.c.b16 %v1744, %v1744
        %v1809 = vpack.c.b16 %v1745, %v1745
        %v1810 = vpack.c.b16 %v1746, %v1746
        %v1811 = vpack.c.b16 %v1747, %v1747
        %v1812 = vpack.c.b16 %v1748, %v1748
        %v1813 = vpack.c.b16 %v1749, %v1749
        %v1814 = vpack.c.b16 %v1750, %v1750
        %v1815 = vpack.c.b16 %v1751, %v1751
        %v1816 = vpack.c.b16 %v1752, %v1752
        %v1817 = vpack.c.b16 %v1753, %v1753
        %v1818 = vpack.c.b16 %v1754, %v1754
        %v1819 = vpack.c.b16 %v1755, %v1755
        %v1820 = vpack.c.b16 %v1756, %v1756
        %v1821 = vpack.c.b16 %v1757, %v1757
        %v1822 = vpack.c.b16 %v1758, %v1758
        %v1823 = vpack.c.b16 %v1759, %v1759
        %v1824 = vpack.c.b16 %v1760, %v1760
        %v1825 = vpack.c.b16 %v1761, %v1761
        %v1826 = vpack.c.b16 %v1762, %v1762
        %v1827 = vpack.c.b16 %v1763, %v1763
        %v1828 = vpack.c.b16 %v1764, %v1764
        %v1829 = vpack.c.b16 %v1765, %v1765
        %v1830 = vpack.c.b16 %v1766, %v1766
        %v1831 = vpack.c.b16 %v1767, %v1767
        %v1832 = vpack.c.b16 %v1768, %v1768
        %v1833 = vpack.c.b16 %v1769, %v1769
        %v1834 = vpack.c.b16 %v1770, %v1770
        %v1835 = vpack.c.b16 %v1771, %v1771
        %v1836 = vpack.c.b16 %v1772, %v1772
        %v1837 = vpack.c.b16 %v1773, %v1773
        %v1838 = vpack.c.b16 %v1774, %v1774
        %v1839 = vpack.c.b16 %v1775, %v1775
        %v1840 = vpack.c.b16 %v1776, %v1776
        %v1841 = vpack.c.b16 %v1777, %v1777
        %v1842 = vpack.c.b16 %v1778, %v1778
        %v1843 = vpack.c.b16 %v1779, %v1779
        %v1844 = vpack.c.b16 %v1780, %v1780
        %v1845 = vpack.c.b16 %v1781, %v1781
        %v1846 = vpack.c.b16 %v1782, %v1782
        %v1847 = vpack.c.b16 %v1783, %v1783
        %v1848 = vpack.c.b16 %v1784, %v1784
        %v1849 = vpack.c.b16 %v1785, %v1785
        %v1850 = vpack.c.b16 %v1786, %v1786
        %v1851 = vpack.c.b16 %v1787, %v1787
        %v1852 = vpack.c.b16 %v1788, %v1788
        %v1853 = vpack.c.b16 %v1789, %v1789
        %v1854 = vpack.c.b16 %v1790, %v1790
        %v1855 = vpack.c.b16 %v1791, %v1791
        %v1856 = vpack.c.b16 %v1792, %v1792
        %v1857 = vpack.c.b16 %v1793, %v1793
        %v1858 = vpack.c.b16 %v1794, %v1794
        %v1859 = vpack.c.b16 %v1795, %v1795
        %v1860 = vpack.c.b16 %v1796, %v1796
        %v1861 = vpack.c.b16 %v1797, %v1797
        %v1862 = vpack.c.b16 %v1798, %v1798
        %v1863 = vpack.c.b16 %v1799, %v1799
        %v1864 = vpack.c.b16 %v1800, %v1800
        %v1865 = vpack.c.b16 %v1801, %v1801
        %1930 = vst [vmem:[%s266] sm:$0xf] %v1802
        %1931 = vst [vmem:[%s266 + $0x4] sm:$0xf] %v1803
        %1932 = vst [vmem:[%s266 + $0x8] sm:$0xf] %v1804
        %1933 = vst [vmem:[%s266 + $0xc] sm:$0xf] %v1805
        %1934 = vst [vmem:[%s266 + $0x10] sm:$0xf] %v1806
        %1935 = vst [vmem:[%s266 + $0x14] sm:$0xf] %v1807
        %1936 = vst [vmem:[%s266 + $0x18] sm:$0xf] %v1808
        %1937 = vst [vmem:[%s266 + $0x1c] sm:$0xf] %v1809
        %1938 = vst [vmem:[%s266 + $0x20] sm:$0xf] %v1810
        %1939 = vst [vmem:[%s266 + $0x24] sm:$0xf] %v1811
        %1940 = vst [vmem:[%s266 + $0x28] sm:$0xf] %v1812
        %1941 = vst [vmem:[%s266 + $0x2c] sm:$0xf] %v1813
        %1942 = vst [vmem:[%s266 + $0x30] sm:$0xf] %v1814
        %1943 = vst [vmem:[%s266 + $0x34] sm:$0xf] %v1815
        %1944 = vst [vmem:[%s266 + $0x38] sm:$0xf] %v1816
        %1945 = vst [vmem:[%s266 + $0x3c] sm:$0xf] %v1817
        %1946 = vst [vmem:[%s266 + $0x40] sm:$0xf] %v1818
        %1947 = vst [vmem:[%s266 + $0x44] sm:$0xf] %v1819
        %1948 = vst [vmem:[%s266 + $0x48] sm:$0xf] %v1820
        %1949 = vst [vmem:[%s266 + $0x4c] sm:$0xf] %v1821
        %1950 = vst [vmem:[%s266 + $0x50] sm:$0xf] %v1822
        %1951 = vst [vmem:[%s266 + $0x54] sm:$0xf] %v1823
        %1952 = vst [vmem:[%s266 + $0x58] sm:$0xf] %v1824
        %1953 = vst [vmem:[%s266 + $0x5c] sm:$0xf] %v1825
        %1954 = vst [vmem:[%s266 + $0x60] sm:$0xf] %v1826
        %1955 = vst [vmem:[%s266 + $0x64] sm:$0xf] %v1827
        %1956 = vst [vmem:[%s266 + $0x68] sm:$0xf] %v1828
        %1957 = vst [vmem:[%s266 + $0x6c] sm:$0xf] %v1829
        %1958 = vst [vmem:[%s266 + $0x70] sm:$0xf] %v1830
        %1959 = vst [vmem:[%s266 + $0x74] sm:$0xf] %v1831
        %1960 = vst [vmem:[%s266 + $0x78] sm:$0xf] %v1832
        %1961 = vst [vmem:[%s266 + $0x7c] sm:$0xf] %v1833
        %1962 = vst [vmem:[%s266 + $0x80] sm:$0xf] %v1834
        %1963 = vst [vmem:[%s266 + $0x84] sm:$0xf] %v1835
        %1964 = vst [vmem:[%s266 + $0x88] sm:$0xf] %v1836
        %1965 = vst [vmem:[%s266 + $0x8c] sm:$0xf] %v1837
        %1966 = vst [vmem:[%s266 + $0x90] sm:$0xf] %v1838
        %1967 = vst [vmem:[%s266 + $0x94] sm:$0xf] %v1839
        %1968 = vst [vmem:[%s266 + $0x98] sm:$0xf] %v1840
        %1969 = vst [vmem:[%s266 + $0x9c] sm:$0xf] %v1841
        %1970 = vst [vmem:[%s266 + $0xa0] sm:$0xf] %v1842
        %1971 = vst [vmem:[%s266 + $0xa4] sm:$0xf] %v1843
        %1972 = vst [vmem:[%s266 + $0xa8] sm:$0xf] %v1844
        %1973 = vst [vmem:[%s266 + $0xac] sm:$0xf] %v1845
        %1974 = vst [vmem:[%s266 + $0xb0] sm:$0xf] %v1846
        %1975 = vst [vmem:[%s266 + $0xb4] sm:$0xf] %v1847
        %1976 = vst [vmem:[%s266 + $0xb8] sm:$0xf] %v1848
        %1977 = vst [vmem:[%s266 + $0xbc] sm:$0xf] %v1849
        %1978 = vst [vmem:[%s266 + $0xc0] sm:$0xf] %v1850
        %1979 = vst [vmem:[%s266 + $0xc4] sm:$0xf] %v1851
        %1980 = vst [vmem:[%s266 + $0xc8] sm:$0xf] %v1852
        %1981 = vst [vmem:[%s266 + $0xcc] sm:$0xf] %v1853
        %1982 = vst [vmem:[%s266 + $0xd0] sm:$0xf] %v1854
        %1983 = vst [vmem:[%s266 + $0xd4] sm:$0xf] %v1855
        %1984 = vst [vmem:[%s266 + $0xd8] sm:$0xf] %v1856
        %1985 = vst [vmem:[%s266 + $0xdc] sm:$0xf] %v1857
        %1986 = vst [vmem:[%s266 + $0xe0] sm:$0xf] %v1858
        %1987 = vst [vmem:[%s266 + $0xe4] sm:$0xf] %v1859
        %1988 = vst [vmem:[%s266 + $0xe8] sm:$0xf] %v1860
        %1989 = vst [vmem:[%s266 + $0xec] sm:$0xf] %v1861
        %1990 = vst [vmem:[%s266 + $0xf0] sm:$0xf] %v1862
        %1991 = vst [vmem:[%s266 + $0xf4] sm:$0xf] %v1863
        %1992 = vst [vmem:[%s266 + $0xf8] sm:$0xf] %v1864
        %1993 = vst [vmem:[%s266 + $0xfc] sm:$0xf] %v1865
        %s1994 = sand.u32 %s160, 1
        %s1995 = sand.u32 %s160, 1
        %s1996 = smul.addr %s1995, 256
        %s1997 = scalar_lea.vmem [#allocation2], %s1996
        // Predicated region
        $region41: #{_lambda_.2} parent=39 // pred_check
          %p1998 = pneg %p170
        $region42: #{_lambda_.2} parent=39 // pred_check_branch
          %2000 = sbr.rel (%p1998) target = $region44
        $region43: #{_lambda_.2} parent=39 // pred_region
          %s2001 = smul.u32 64, %s21
          %s2002 = smul.addr %s2001, 2
          %s2003 = sadd.s32 %s20, %s2002
          %s2004 = smul.addr %s2003, 4
          %s2005 = scalar_lea.vmem %s5, %s2004
          // Predicated region
          $region45: #{_lambda_.2} parent=43 // pred_check
            _
          $region46: #{_lambda_.2} parent=43 // pred_check_branch
            %2007 = sbr.rel (0) target = $region48
          $region47: #{_lambda_.2} parent=43 // pred_region
            // Predicated region
            $region49: #{_lambda_.2} parent=47 // pred_check
              _
            $region50: #{_lambda_.2} parent=47 // pred_check_branch
              %2009 = sbr.rel target = $region52
            $region51: #{_lambda_.2} parent=47 // pred_region
              // Predicated region
              $region64: #{_lambda_.2} parent=51 // pred_check
                _
              $region65: #{_lambda_.2} parent=51 // pred_check_branch
                %2150 = sbr.rel (0) target = $region67
              $region66: #{_lambda_.2} parent=51 // pred_region
                loop: start=0, step=1, limit=1
                $region68: #{_lambda_.2} parent=66 // loop_pre_header
                  _
                $region69: #{_lambda_.2} parent=66 // loop_header
                  %s2152 = sphi 0, %s2156
                  %p2153 = scmp.ge.s32.totalorder %s2152, 1
                  %s2157 = sphi %s1997, %s1997
                  %s2158 = sphi %s2005, %s2005
                $region70: #{_lambda_.2} parent=66 // loop_header_branch
                  %2155 = sbr.rel (%p2153) target = $region74
                $region71: #{_lambda_.2} parent=66 // loop_body
                  _
                $region72: #{_lambda_.2} parent=66 // loop_footer
                  %s2156 = sadd.s32 1, %s2152
                $region73: #{_lambda_.2} parent=66 // loop_footer_branch
                  %2151 = sbr.rel target = $region69
                $region74: #{_lambda_.2} parent=66 // loop_exit
                  _
                loop: start=0, step=1, limit=1
                $region75: #{_lambda_.2} parent=66 // loop_pre_header
                  _
                $region76: #{_lambda_.2} parent=66 // loop_header
                  %s2161 = sphi 0, %s2165
                  %p2162 = scmp.ge.s32.totalorder %s2161, 1
                  %s2166 = sphi %s1997, %s1997
                  %s2167 = sphi %s2005, %s2005
                $region77: #{_lambda_.2} parent=66 // loop_header_branch
                  %2164 = sbr.rel (%p2162) target = $region81
                $region78: #{_lambda_.2} parent=66 // loop_body
                  %v2168 = vld [vmem:[%s2166] sm:$0xf]
                  %2169 = vst [vmem:[%s2167] sm:$0xf] %v2168
                  %v2170 = vld [vmem:[%s2166 + $0x4] sm:$0xf]
                  %2171 = vst [vmem:[%s2167 + $0x8] sm:$0xf] %v2170
                  %v2172 = vld [vmem:[%s2166 + $0x8] sm:$0xf]
                  %2173 = vst [vmem:[%s2167 + $0x10] sm:$0xf] %v2172
                  %v2174 = vld [vmem:[%s2166 + $0xc] sm:$0xf]
                  %2175 = vst [vmem:[%s2167 + $0x18] sm:$0xf] %v2174
                  %v2176 = vld [vmem:[%s2166 + $0x10] sm:$0xf]
                  %2177 = vst [vmem:[%s2167 + $0x20] sm:$0xf] %v2176
                  %v2178 = vld [vmem:[%s2166 + $0x14] sm:$0xf]
                  %2179 = vst [vmem:[%s2167 + $0x28] sm:$0xf] %v2178
                  %v2180 = vld [vmem:[%s2166 + $0x18] sm:$0xf]
                  %2181 = vst [vmem:[%s2167 + $0x30] sm:$0xf] %v2180
                  %v2182 = vld [vmem:[%s2166 + $0x1c] sm:$0xf]
                  %2183 = vst [vmem:[%s2167 + $0x38] sm:$0xf] %v2182
                  %v2184 = vld [vmem:[%s2166 + $0x20] sm:$0xf]
                  %2185 = vst [vmem:[%s2167 + $0x40] sm:$0xf] %v2184
                  %v2186 = vld [vmem:[%s2166 + $0x24] sm:$0xf]
                  %2187 = vst [vmem:[%s2167 + $0x48] sm:$0xf] %v2186
                  %v2188 = vld [vmem:[%s2166 + $0x28] sm:$0xf]
                  %2189 = vst [vmem:[%s2167 + $0x50] sm:$0xf] %v2188
                  %v2190 = vld [vmem:[%s2166 + $0x2c] sm:$0xf]
                  %2191 = vst [vmem:[%s2167 + $0x58] sm:$0xf] %v2190
                  %v2192 = vld [vmem:[%s2166 + $0x30] sm:$0xf]
                  %2193 = vst [vmem:[%s2167 + $0x60] sm:$0xf] %v2192
                  %v2194 = vld [vmem:[%s2166 + $0x34] sm:$0xf]
                  %2195 = vst [vmem:[%s2167 + $0x68] sm:$0xf] %v2194
                  %v2196 = vld [vmem:[%s2166 + $0x38] sm:$0xf]
                  %2197 = vst [vmem:[%s2167 + $0x70] sm:$0xf] %v2196
                  %v2198 = vld [vmem:[%s2166 + $0x3c] sm:$0xf]
                  %2199 = vst [vmem:[%s2167 + $0x78] sm:$0xf] %v2198
                  %v2200 = vld [vmem:[%s2166 + $0x40] sm:$0xf]
                  %2201 = vst [vmem:[%s2167 + $0x80] sm:$0xf] %v2200
                  %v2202 = vld [vmem:[%s2166 + $0x44] sm:$0xf]
                  %2203 = vst [vmem:[%s2167 + $0x88] sm:$0xf] %v2202
                  %v2204 = vld [vmem:[%s2166 + $0x48] sm:$0xf]
                  %2205 = vst [vmem:[%s2167 + $0x90] sm:$0xf] %v2204
                  %v2206 = vld [vmem:[%s2166 + $0x4c] sm:$0xf]
                  %2207 = vst [vmem:[%s2167 + $0x98] sm:$0xf] %v2206
                  %v2208 = vld [vmem:[%s2166 + $0x50] sm:$0xf]
                  %2209 = vst [vmem:[%s2167 + $0xa0] sm:$0xf] %v2208
                  %v2210 = vld [vmem:[%s2166 + $0x54] sm:$0xf]
                  %2211 = vst [vmem:[%s2167 + $0xa8] sm:$0xf] %v2210
                  %v2212 = vld [vmem:[%s2166 + $0x58] sm:$0xf]
                  %2213 = vst [vmem:[%s2167 + $0xb0] sm:$0xf] %v2212
                  %v2214 = vld [vmem:[%s2166 + $0x5c] sm:$0xf]
                  %2215 = vst [vmem:[%s2167 + $0xb8] sm:$0xf] %v2214
                  %v2216 = vld [vmem:[%s2166 + $0x60] sm:$0xf]
                  %2217 = vst [vmem:[%s2167 + $0xc0] sm:$0xf] %v2216
                  %v2218 = vld [vmem:[%s2166 + $0x64] sm:$0xf]
                  %2219 = vst [vmem:[%s2167 + $0xc8] sm:$0xf] %v2218
                  %v2220 = vld [vmem:[%s2166 + $0x68] sm:$0xf]
                  %2221 = vst [vmem:[%s2167 + $0xd0] sm:$0xf] %v2220
                  %v2222 = vld [vmem:[%s2166 + $0x6c] sm:$0xf]
                  %2223 = vst [vmem:[%s2167 + $0xd8] sm:$0xf] %v2222
                  %v2224 = vld [vmem:[%s2166 + $0x70] sm:$0xf]
                  %2225 = vst [vmem:[%s2167 + $0xe0] sm:$0xf] %v2224
                  %v2226 = vld [vmem:[%s2166 + $0x74] sm:$0xf]
                  %2227 = vst [vmem:[%s2167 + $0xe8] sm:$0xf] %v2226
                  %v2228 = vld [vmem:[%s2166 + $0x78] sm:$0xf]
                  %2229 = vst [vmem:[%s2167 + $0xf0] sm:$0xf] %v2228
                  %v2230 = vld [vmem:[%s2166 + $0x7c] sm:$0xf]
                  %2231 = vst [vmem:[%s2167 + $0xf8] sm:$0xf] %v2230
                  %v2232 = vld [vmem:[%s2166 + $0x80] sm:$0xf]
                  %2233 = vst [vmem:[%s2167 + $0x100] sm:$0xf] %v2232
                  %v2234 = vld [vmem:[%s2166 + $0x84] sm:$0xf]
                  %2235 = vst [vmem:[%s2167 + $0x108] sm:$0xf] %v2234
                  %v2236 = vld [vmem:[%s2166 + $0x88] sm:$0xf]
                  %2237 = vst [vmem:[%s2167 + $0x110] sm:$0xf] %v2236
                  %v2238 = vld [vmem:[%s2166 + $0x8c] sm:$0xf]
                  %2239 = vst [vmem:[%s2167 + $0x118] sm:$0xf] %v2238
                  %v2240 = vld [vmem:[%s2166 + $0x90] sm:$0xf]
                  %2241 = vst [vmem:[%s2167 + $0x120] sm:$0xf] %v2240
                  %v2242 = vld [vmem:[%s2166 + $0x94] sm:$0xf]
                  %2243 = vst [vmem:[%s2167 + $0x128] sm:$0xf] %v2242
                  %v2244 = vld [vmem:[%s2166 + $0x98] sm:$0xf]
                  %2245 = vst [vmem:[%s2167 + $0x130] sm:$0xf] %v2244
                  %v2246 = vld [vmem:[%s2166 + $0x9c] sm:$0xf]
                  %2247 = vst [vmem:[%s2167 + $0x138] sm:$0xf] %v2246
                  %v2248 = vld [vmem:[%s2166 + $0xa0] sm:$0xf]
                  %2249 = vst [vmem:[%s2167 + $0x140] sm:$0xf] %v2248
                  %v2250 = vld [vmem:[%s2166 + $0xa4] sm:$0xf]
                  %2251 = vst [vmem:[%s2167 + $0x148] sm:$0xf] %v2250
                  %v2252 = vld [vmem:[%s2166 + $0xa8] sm:$0xf]
                  %2253 = vst [vmem:[%s2167 + $0x150] sm:$0xf] %v2252
                  %v2254 = vld [vmem:[%s2166 + $0xac] sm:$0xf]
                  %2255 = vst [vmem:[%s2167 + $0x158] sm:$0xf] %v2254
                  %v2256 = vld [vmem:[%s2166 + $0xb0] sm:$0xf]
                  %2257 = vst [vmem:[%s2167 + $0x160] sm:$0xf] %v2256
                  %v2258 = vld [vmem:[%s2166 + $0xb4] sm:$0xf]
                  %2259 = vst [vmem:[%s2167 + $0x168] sm:$0xf] %v2258
                  %v2260 = vld [vmem:[%s2166 + $0xb8] sm:$0xf]
                  %2261 = vst [vmem:[%s2167 + $0x170] sm:$0xf] %v2260
                  %v2262 = vld [vmem:[%s2166 + $0xbc] sm:$0xf]
                  %2263 = vst [vmem:[%s2167 + $0x178] sm:$0xf] %v2262
                  %v2264 = vld [vmem:[%s2166 + $0xc0] sm:$0xf]
                  %2265 = vst [vmem:[%s2167 + $0x180] sm:$0xf] %v2264
                  %v2266 = vld [vmem:[%s2166 + $0xc4] sm:$0xf]
                  %2267 = vst [vmem:[%s2167 + $0x188] sm:$0xf] %v2266
                  %v2268 = vld [vmem:[%s2166 + $0xc8] sm:$0xf]
                  %2269 = vst [vmem:[%s2167 + $0x190] sm:$0xf] %v2268
                  %v2270 = vld [vmem:[%s2166 + $0xcc] sm:$0xf]
                  %2271 = vst [vmem:[%s2167 + $0x198] sm:$0xf] %v2270
                  %v2272 = vld [vmem:[%s2166 + $0xd0] sm:$0xf]
                  %2273 = vst [vmem:[%s2167 + $0x1a0] sm:$0xf] %v2272
                  %v2274 = vld [vmem:[%s2166 + $0xd4] sm:$0xf]
                  %2275 = vst [vmem:[%s2167 + $0x1a8] sm:$0xf] %v2274
                  %v2276 = vld [vmem:[%s2166 + $0xd8] sm:$0xf]
                  %2277 = vst [vmem:[%s2167 + $0x1b0] sm:$0xf] %v2276
                  %v2278 = vld [vmem:[%s2166 + $0xdc] sm:$0xf]
                  %2279 = vst [vmem:[%s2167 + $0x1b8] sm:$0xf] %v2278
                  %v2280 = vld [vmem:[%s2166 + $0xe0] sm:$0xf]
                  %2281 = vst [vmem:[%s2167 + $0x1c0] sm:$0xf] %v2280
                  %v2282 = vld [vmem:[%s2166 + $0xe4] sm:$0xf]
                  %2283 = vst [vmem:[%s2167 + $0x1c8] sm:$0xf] %v2282
                  %v2284 = vld [vmem:[%s2166 + $0xe8] sm:$0xf]
                  %2285 = vst [vmem:[%s2167 + $0x1d0] sm:$0xf] %v2284
                  %v2286 = vld [vmem:[%s2166 + $0xec] sm:$0xf]
                  %2287 = vst [vmem:[%s2167 + $0x1d8] sm:$0xf] %v2286
                  %v2288 = vld [vmem:[%s2166 + $0xf0] sm:$0xf]
                  %2289 = vst [vmem:[%s2167 + $0x1e0] sm:$0xf] %v2288
                  %v2290 = vld [vmem:[%s2166 + $0xf4] sm:$0xf]
                  %2291 = vst [vmem:[%s2167 + $0x1e8] sm:$0xf] %v2290
                  %v2292 = vld [vmem:[%s2166 + $0xf8] sm:$0xf]
                  %2293 = vst [vmem:[%s2167 + $0x1f0] sm:$0xf] %v2292
                  %v2294 = vld [vmem:[%s2166 + $0xfc] sm:$0xf]
                  %2295 = vst [vmem:[%s2167 + $0x1f8] sm:$0xf] %v2294
                $region79: #{_lambda_.2} parent=66 // loop_footer
                  %s2165 = sadd.s32 1, %s2161
                $region80: #{_lambda_.2} parent=66 // loop_footer_branch
                  %2160 = sbr.rel target = $region76
                $region81: #{_lambda_.2} parent=66 // loop_exit
                  _
              $region67: #{_lambda_.2} parent=51 // pred_fallthru
                _
            $region52: #{_lambda_.2} parent=47 // pred_fallthru
              _
            // Predicated region
            $region53: #{_lambda_.2} parent=47 // pred_check
              _
            $region54: #{_lambda_.2} parent=47 // pred_check_branch
              %2011 = sbr.rel (0) target = $region56
            $region55: #{_lambda_.2} parent=47 // pred_region
              loop: start=0, step=1, limit=1
              $region57: #{_lambda_.2} parent=55 // loop_pre_header
                _
              $region58: #{_lambda_.2} parent=55 // loop_header
                %s2014 = sphi 0, %s2018
                %p2015 = scmp.ge.s32.totalorder %s2014, 1
                %s2019 = sphi %s1997, %s1997
                %s2020 = sphi %s2005, %s2005
              $region59: #{_lambda_.2} parent=55 // loop_header_branch
                %2017 = sbr.rel (%p2015) target = $region63
              $region60: #{_lambda_.2} parent=55 // loop_body
                %v2021 = vld [vmem:[%s2019] sm:$0xf]
                %2022 = vst [vmem:[%s2020] sm:$0xf] %v2021
                %v2023 = vld [vmem:[%s2019 + $0x4] sm:$0xf]
                %2024 = vst [vmem:[%s2020 + $0x8] sm:$0xf] %v2023
                %v2025 = vld [vmem:[%s2019 + $0x8] sm:$0xf]
                %2026 = vst [vmem:[%s2020 + $0x10] sm:$0xf] %v2025
                %v2027 = vld [vmem:[%s2019 + $0xc] sm:$0xf]
                %2028 = vst [vmem:[%s2020 + $0x18] sm:$0xf] %v2027
                %v2029 = vld [vmem:[%s2019 + $0x10] sm:$0xf]
                %2030 = vst [vmem:[%s2020 + $0x20] sm:$0xf] %v2029
                %v2031 = vld [vmem:[%s2019 + $0x14] sm:$0xf]
                %2032 = vst [vmem:[%s2020 + $0x28] sm:$0xf] %v2031
                %v2033 = vld [vmem:[%s2019 + $0x18] sm:$0xf]
                %2034 = vst [vmem:[%s2020 + $0x30] sm:$0xf] %v2033
                %v2035 = vld [vmem:[%s2019 + $0x1c] sm:$0xf]
                %2036 = vst [vmem:[%s2020 + $0x38] sm:$0xf] %v2035
                %v2037 = vld [vmem:[%s2019 + $0x20] sm:$0xf]
                %2038 = vst [vmem:[%s2020 + $0x40] sm:$0xf] %v2037
                %v2039 = vld [vmem:[%s2019 + $0x24] sm:$0xf]
                %2040 = vst [vmem:[%s2020 + $0x48] sm:$0xf] %v2039
                %v2041 = vld [vmem:[%s2019 + $0x28] sm:$0xf]
                %2042 = vst [vmem:[%s2020 + $0x50] sm:$0xf] %v2041
                %v2043 = vld [vmem:[%s2019 + $0x2c] sm:$0xf]
                %2044 = vst [vmem:[%s2020 + $0x58] sm:$0xf] %v2043
                %v2045 = vld [vmem:[%s2019 + $0x30] sm:$0xf]
                %2046 = vst [vmem:[%s2020 + $0x60] sm:$0xf] %v2045
                %v2047 = vld [vmem:[%s2019 + $0x34] sm:$0xf]
                %2048 = vst [vmem:[%s2020 + $0x68] sm:$0xf] %v2047
                %v2049 = vld [vmem:[%s2019 + $0x38] sm:$0xf]
                %2050 = vst [vmem:[%s2020 + $0x70] sm:$0xf] %v2049
                %v2051 = vld [vmem:[%s2019 + $0x3c] sm:$0xf]
                %2052 = vst [vmem:[%s2020 + $0x78] sm:$0xf] %v2051
                %v2053 = vld [vmem:[%s2019 + $0x40] sm:$0xf]
                %2054 = vst [vmem:[%s2020 + $0x80] sm:$0xf] %v2053
                %v2055 = vld [vmem:[%s2019 + $0x44] sm:$0xf]
                %2056 = vst [vmem:[%s2020 + $0x88] sm:$0xf] %v2055
                %v2057 = vld [vmem:[%s2019 + $0x48] sm:$0xf]
                %2058 = vst [vmem:[%s2020 + $0x90] sm:$0xf] %v2057
                %v2059 = vld [vmem:[%s2019 + $0x4c] sm:$0xf]
                %2060 = vst [vmem:[%s2020 + $0x98] sm:$0xf] %v2059
                %v2061 = vld [vmem:[%s2019 + $0x50] sm:$0xf]
                %2062 = vst [vmem:[%s2020 + $0xa0] sm:$0xf] %v2061
                %v2063 = vld [vmem:[%s2019 + $0x54] sm:$0xf]
                %2064 = vst [vmem:[%s2020 + $0xa8] sm:$0xf] %v2063
                %v2065 = vld [vmem:[%s2019 + $0x58] sm:$0xf]
                %2066 = vst [vmem:[%s2020 + $0xb0] sm:$0xf] %v2065
                %v2067 = vld [vmem:[%s2019 + $0x5c] sm:$0xf]
                %2068 = vst [vmem:[%s2020 + $0xb8] sm:$0xf] %v2067
                %v2069 = vld [vmem:[%s2019 + $0x60] sm:$0xf]
                %2070 = vst [vmem:[%s2020 + $0xc0] sm:$0xf] %v2069
                %v2071 = vld [vmem:[%s2019 + $0x64] sm:$0xf]
                %2072 = vst [vmem:[%s2020 + $0xc8] sm:$0xf] %v2071
                %v2073 = vld [vmem:[%s2019 + $0x68] sm:$0xf]
                %2074 = vst [vmem:[%s2020 + $0xd0] sm:$0xf] %v2073
                %v2075 = vld [vmem:[%s2019 + $0x6c] sm:$0xf]
                %2076 = vst [vmem:[%s2020 + $0xd8] sm:$0xf] %v2075
                %v2077 = vld [vmem:[%s2019 + $0x70] sm:$0xf]
                %2078 = vst [vmem:[%s2020 + $0xe0] sm:$0xf] %v2077
                %v2079 = vld [vmem:[%s2019 + $0x74] sm:$0xf]
                %2080 = vst [vmem:[%s2020 + $0xe8] sm:$0xf] %v2079
                %v2081 = vld [vmem:[%s2019 + $0x78] sm:$0xf]
                %2082 = vst [vmem:[%s2020 + $0xf0] sm:$0xf] %v2081
                %v2083 = vld [vmem:[%s2019 + $0x7c] sm:$0xf]
                %2084 = vst [vmem:[%s2020 + $0xf8] sm:$0xf] %v2083
                %v2085 = vld [vmem:[%s2019 + $0x80] sm:$0xf]
                %2086 = vst [vmem:[%s2020 + $0x100] sm:$0xf] %v2085
                %v2087 = vld [vmem:[%s2019 + $0x84] sm:$0xf]
                %2088 = vst [vmem:[%s2020 + $0x108] sm:$0xf] %v2087
                %v2089 = vld [vmem:[%s2019 + $0x88] sm:$0xf]
                %2090 = vst [vmem:[%s2020 + $0x110] sm:$0xf] %v2089
                %v2091 = vld [vmem:[%s2019 + $0x8c] sm:$0xf]
                %2092 = vst [vmem:[%s2020 + $0x118] sm:$0xf] %v2091
                %v2093 = vld [vmem:[%s2019 + $0x90] sm:$0xf]
                %2094 = vst [vmem:[%s2020 + $0x120] sm:$0xf] %v2093
                %v2095 = vld [vmem:[%s2019 + $0x94] sm:$0xf]
                %2096 = vst [vmem:[%s2020 + $0x128] sm:$0xf] %v2095
                %v2097 = vld [vmem:[%s2019 + $0x98] sm:$0xf]
                %2098 = vst [vmem:[%s2020 + $0x130] sm:$0xf] %v2097
                %v2099 = vld [vmem:[%s2019 + $0x9c] sm:$0xf]
                %2100 = vst [vmem:[%s2020 + $0x138] sm:$0xf] %v2099
                %v2101 = vld [vmem:[%s2019 + $0xa0] sm:$0xf]
                %2102 = vst [vmem:[%s2020 + $0x140] sm:$0xf] %v2101
                %v2103 = vld [vmem:[%s2019 + $0xa4] sm:$0xf]
                %2104 = vst [vmem:[%s2020 + $0x148] sm:$0xf] %v2103
                %v2105 = vld [vmem:[%s2019 + $0xa8] sm:$0xf]
                %2106 = vst [vmem:[%s2020 + $0x150] sm:$0xf] %v2105
                %v2107 = vld [vmem:[%s2019 + $0xac] sm:$0xf]
                %2108 = vst [vmem:[%s2020 + $0x158] sm:$0xf] %v2107
                %v2109 = vld [vmem:[%s2019 + $0xb0] sm:$0xf]
                %2110 = vst [vmem:[%s2020 + $0x160] sm:$0xf] %v2109
                %v2111 = vld [vmem:[%s2019 + $0xb4] sm:$0xf]
                %2112 = vst [vmem:[%s2020 + $0x168] sm:$0xf] %v2111
                %v2113 = vld [vmem:[%s2019 + $0xb8] sm:$0xf]
                %2114 = vst [vmem:[%s2020 + $0x170] sm:$0xf] %v2113
                %v2115 = vld [vmem:[%s2019 + $0xbc] sm:$0xf]
                %2116 = vst [vmem:[%s2020 + $0x178] sm:$0xf] %v2115
                %v2117 = vld [vmem:[%s2019 + $0xc0] sm:$0xf]
                %2118 = vst [vmem:[%s2020 + $0x180] sm:$0xf] %v2117
                %v2119 = vld [vmem:[%s2019 + $0xc4] sm:$0xf]
                %2120 = vst [vmem:[%s2020 + $0x188] sm:$0xf] %v2119
                %v2121 = vld [vmem:[%s2019 + $0xc8] sm:$0xf]
                %2122 = vst [vmem:[%s2020 + $0x190] sm:$0xf] %v2121
                %v2123 = vld [vmem:[%s2019 + $0xcc] sm:$0xf]
                %2124 = vst [vmem:[%s2020 + $0x198] sm:$0xf] %v2123
                %v2125 = vld [vmem:[%s2019 + $0xd0] sm:$0xf]
                %2126 = vst [vmem:[%s2020 + $0x1a0] sm:$0xf] %v2125
                %v2127 = vld [vmem:[%s2019 + $0xd4] sm:$0xf]
                %2128 = vst [vmem:[%s2020 + $0x1a8] sm:$0xf] %v2127
                %v2129 = vld [vmem:[%s2019 + $0xd8] sm:$0xf]
                %2130 = vst [vmem:[%s2020 + $0x1b0] sm:$0xf] %v2129
                %v2131 = vld [vmem:[%s2019 + $0xdc] sm:$0xf]
                %2132 = vst [vmem:[%s2020 + $0x1b8] sm:$0xf] %v2131
                %v2133 = vld [vmem:[%s2019 + $0xe0] sm:$0xf]
                %2134 = vst [vmem:[%s2020 + $0x1c0] sm:$0xf] %v2133
                %v2135 = vld [vmem:[%s2019 + $0xe4] sm:$0xf]
                %2136 = vst [vmem:[%s2020 + $0x1c8] sm:$0xf] %v2135
                %v2137 = vld [vmem:[%s2019 + $0xe8] sm:$0xf]
                %2138 = vst [vmem:[%s2020 + $0x1d0] sm:$0xf] %v2137
                %v2139 = vld [vmem:[%s2019 + $0xec] sm:$0xf]
                %2140 = vst [vmem:[%s2020 + $0x1d8] sm:$0xf] %v2139
                %v2141 = vld [vmem:[%s2019 + $0xf0] sm:$0xf]
                %2142 = vst [vmem:[%s2020 + $0x1e0] sm:$0xf] %v2141
                %v2143 = vld [vmem:[%s2019 + $0xf4] sm:$0xf]
                %2144 = vst [vmem:[%s2020 + $0x1e8] sm:$0xf] %v2143
                %v2145 = vld [vmem:[%s2019 + $0xf8] sm:$0xf]
                %2146 = vst [vmem:[%s2020 + $0x1f0] sm:$0xf] %v2145
                %v2147 = vld [vmem:[%s2019 + $0xfc] sm:$0xf]
                %2148 = vst [vmem:[%s2020 + $0x1f8] sm:$0xf] %v2147
              $region61: #{_lambda_.2} parent=55 // loop_footer
                %s2018 = sadd.s32 1, %s2014
              $region62: #{_lambda_.2} parent=55 // loop_footer_branch
                %2013 = sbr.rel target = $region58
              $region63: #{_lambda_.2} parent=55 // loop_exit
                _
            $region56: #{_lambda_.2} parent=47 // pred_fallthru
              _
          $region48: #{_lambda_.2} parent=43 // pred_fallthru
            _
          %2296 = vnop
        $region44: #{_lambda_.2} parent=39 // pred_fallthru
          _
      $region40: #{_lambda_.2} parent=5 // pred_fallthru
        _
      %p2297 = scmp.le.s32.totalorder 2, %s11
      // Predicated region
      $region82: #{_lambda_.2} parent=5 // pred_check
        %p2298 = pneg %p2297
      $region83: #{_lambda_.2} parent=5 // pred_check_branch
        %2300 = sbr.rel (%p2298) target = $region85
      $region84: #{_lambda_.2} parent=5 // pred_region
        %s2301 = ssub.s32 %s11, 2
        // Predicated region
        $region86: #{_lambda_.2} parent=84 // pred_check
          %p2302 = pneg %p176
        $region87: #{_lambda_.2} parent=84 // pred_check_branch
          %2304 = sbr.rel (%p2302) target = $region89
        $region88: #{_lambda_.2} parent=84 // pred_region
          %s2305 = sand.u32 %s161, 1
          %s2306 = sand.u32 %s161, 1
          %s2307 = smul.addr %s2306, 256
          %s2308 = scalar_lea.vmem [#allocation2], %s2307
        $region89: #{_lambda_.2} parent=84 // pred_fallthru
          _
      $region85: #{_lambda_.2} parent=5 // pred_fallthru
        _
    $region6: #{_lambda_.2} parent=1 // loop_footer
      %s15 = sadd.s32 1, %s11
    $region7: #{_lambda_.2} parent=1 // loop_footer_branch
      %10 = sbr.rel target = $region3
    $region8: #{_lambda_.2} parent=1 // loop_exit
      _

// kernel: _lambda_.3
$region0: #{_lambda_.3}
  #allocation0 [shape = 'u32[]', space=smem, size = 0x4, offset = 0x4, fixed_abs, tag = 'smem constant byte address 0x4 - core index']
  #allocation1 [shape = 'u32[144,128]{1,0:T(1,128)}', space=vmem, size = 0x12000, scoped, tag = 'internal scratch']
  #allocation2 [shape = 'f32[2,256]{1,0:T(2,128)}', space=vmem, size = 0x800, scoped, tag = 'scratch operand']
  %s0 = inlined_call_operand.vmem [shape: bf16[2,256,256], index: 0, kind: input, shape index: {}]
  %s1 = inlined_call_operand.vmem [shape: bf16[2,256], index: 1, kind: input, shape index: {}]
  %s2 = inlined_call_operand.vmem [shape: f32[2,256], index: 2, kind: input, shape index: {}]
  %s3 = inlined_call_operand.vmem [shape: f32[256,2], index: 3, kind: input, shape index: {}]
  %s4 = inlined_call_operand.hbm [shape: f32[2,2], index: 4, kind: output, shape index: {}]
  %s5 = sld [smem:[#allocation0]]
  $region34: #{_lambda_.3} parent=0
    _
  %s7 = ssub.s32 1, %s5
  %s8 = scalar_select 0, %s7, %s5
  $region1: #{_lambda_.3} parent=0
    #allocation3 [shape = 'u8[1024]{0}', space=vmem, size = 0x400, scoped, tag = 'output window, operand 0, single buffered']
    #allocation4 [shape = 's32[1]{0}', space=sflag, size = 0x4, scoped, tag = 'scoped memory for _lambda_.3']
    %9 = vsyncpa [#allocation4], 0
    // Predicated region
    $region2: #{_lambda_.3} parent=1 // pred_check
      _
    $region3: #{_lambda_.3} parent=1 // pred_check_branch
      %11 = sbr.rel (0) target = $region5
    $region4: #{_lambda_.3} parent=1 // pred_region
      _
    $region5: #{_lambda_.3} parent=1 // pred_fallthru
      _
    // Predicated region
    $region6: #{_lambda_.3} parent=1 // pred_check
      _
    $region7: #{_lambda_.3} parent=1 // pred_check_branch
      %13 = sbr.rel (0) target = $region9
    $region8: #{_lambda_.3} parent=1 // pred_region
      _
    $region9: #{_lambda_.3} parent=1 // pred_fallthru
      _
    // Predicated region
    $region10: #{_lambda_.3} parent=1 // pred_check
      _
    $region11: #{_lambda_.3} parent=1 // pred_check_branch
      %15 = sbr.rel (0) target = $region13
    $region12: #{_lambda_.3} parent=1 // pred_region
      _
    $region13: #{_lambda_.3} parent=1 // pred_fallthru
      _
    // Predicated region
    $region14: #{_lambda_.3} parent=1 // pred_check
      _
    $region15: #{_lambda_.3} parent=1 // pred_check_branch
      %17 = sbr.rel (0) target = $region17
    $region16: #{_lambda_.3} parent=1 // pred_region
      _
    $region17: #{_lambda_.3} parent=1 // pred_fallthru
      _
    %p18 = scmp.eq.s32.totalorder 0, 0
    // Predicated region
    $region18: #{_lambda_.3} parent=1 // pred_check
      %p19 = pneg %p18
    $region19: #{_lambda_.3} parent=1 // pred_check_branch
      %21 = sbr.rel (%p19) target = $region21
    $region20: #{_lambda_.3} parent=1 // pred_region
      %22 = vst [vmem:[#allocation2] sm:$0xf] 0.0
    $region21: #{_lambda_.3} parent=1 // pred_fallthru
      _
    %v23 = vld [vmem:[#allocation2] ss:$2 sm:$0x3]
    %v24 = vld [vmem:[%s1] sm:$0x3]
    %v25 = vld [vmem:[%s0] sm:$0xff]
    %v26 = vld [vmem:[%s0 + $0x8] sm:$0xff]
    %v27 = vld [vmem:[%s0 + $0x10] sm:$0xff]
    %v28 = vld [vmem:[%s0 + $0x18] sm:$0xff]
    %v29 = vld [vmem:[%s0 + $0x20] sm:$0xff]
    %v30 = vld [vmem:[%s0 + $0x28] sm:$0xff]
    %v31 = vld [vmem:[%s0 + $0x30] sm:$0xff]
    %v32 = vld [vmem:[%s0 + $0x38] sm:$0xff]
    %v33 = vld [vmem:[%s0 + $0x40] sm:$0xff]
    %v34 = vld [vmem:[%s0 + $0x48] sm:$0xff]
    %v35 = vld [vmem:[%s0 + $0x50] sm:$0xff]
    %v36 = vld [vmem:[%s0 + $0x58] sm:$0xff]
    %v37 = vld [vmem:[%s0 + $0x60] sm:$0xff]
    %v38 = vld [vmem:[%s0 + $0x68] sm:$0xff]
    %v39 = vld [vmem:[%s0 + $0x70] sm:$0xff]
    %v40 = vld [vmem:[%s0 + $0x78] sm:$0xff]
    %v41 = vld [vmem:[%s0 + $0x80] sm:$0xff]
    %v42 = vld [vmem:[%s0 + $0x88] sm:$0xff]
    %v43 = vld [vmem:[%s0 + $0x90] sm:$0xff]
    %v44 = vld [vmem:[%s0 + $0x98] sm:$0xff]
    %v45 = vld [vmem:[%s0 + $0xa0] sm:$0xff]
    %v46 = vld [vmem:[%s0 + $0xa8] sm:$0xff]
    %v47 = vld [vmem:[%s0 + $0xb0] sm:$0xff]
    %v48 = vld [vmem:[%s0 + $0xb8] sm:$0xff]
    %v49 = vld [vmem:[%s0 + $0xc0] sm:$0xff]
    %v50 = vld [vmem:[%s0 + $0xc8] sm:$0xff]
    %v51 = vld [vmem:[%s0 + $0xd0] sm:$0xff]
    %v52 = vld [vmem:[%s0 + $0xd8] sm:$0xff]
    %v53 = vld [vmem:[%s0 + $0xe0] sm:$0xff]
    %v54 = vld [vmem:[%s0 + $0xe8] sm:$0xff]
    %v55 = vld [vmem:[%s0 + $0xf0] sm:$0xff]
    %v56 = vld [vmem:[%s0 + $0xf8] sm:$0xff]
    %v59 = vunpack.c.l.s4 1966171168
    %v60 = vunpack.c.0.s8 %v59
    %v61 = vlaneseq
    %v62 = vshrl.u32 %v61, 7
    %v63 = vsub.s32 %v60, %v62
    %v64 = vrot.slane %v24, %v63
    %v65 = vcombine.high %v64, %v64
    %v67 = vunpack.c.l.s4 1966171168
    %v68 = vunpack.c.0.s8 %v67
    %v69 = vlaneseq
    %v70 = vshrl.u32 %v69, 7
    %v71 = vsub.s32 %v68, %v70
    %v72 = vrot.slane %v64, %v71
    %v74 = vunpack.c.l.s4 1966171168
    %v75 = vunpack.c.0.s8 %v74
    %v76 = vlaneseq
    %v77 = vshrl.u32 %v76, 7
    %v78 = vsub.s32 %v75, %v77
    %v79 = vrot.slane %v65, %v78
    %v114 = vunpack.c.l.b16 %v25
    %v115 = vunpack.c.h.b16 %v25
    %v116 = vunpack.c.l.b16 %v26
    %v117 = vunpack.c.h.b16 %v26
    %v118 = vunpack.c.l.b16 %v27
    %v119 = vunpack.c.h.b16 %v27
    %v120 = vunpack.c.l.b16 %v28
    %v121 = vunpack.c.h.b16 %v28
    %v122 = vunpack.c.l.b16 %v29
    %v123 = vunpack.c.h.b16 %v29
    %v124 = vunpack.c.l.b16 %v30
    %v125 = vunpack.c.h.b16 %v30
    %v126 = vunpack.c.l.b16 %v31
    %v127 = vunpack.c.h.b16 %v31
    %v128 = vunpack.c.l.b16 %v32
    %v129 = vunpack.c.h.b16 %v32
    %v130 = vunpack.c.l.b16 %v33
    %v131 = vunpack.c.h.b16 %v33
    %v132 = vunpack.c.l.b16 %v34
    %v133 = vunpack.c.h.b16 %v34
    %v134 = vunpack.c.l.b16 %v35
    %v135 = vunpack.c.h.b16 %v35
    %v136 = vunpack.c.l.b16 %v36
    %v137 = vunpack.c.h.b16 %v36
    %v138 = vunpack.c.l.b16 %v37
    %v139 = vunpack.c.h.b16 %v37
    %v140 = vunpack.c.l.b16 %v38
    %v141 = vunpack.c.h.b16 %v38
    %v142 = vunpack.c.l.b16 %v39
    %v143 = vunpack.c.h.b16 %v39
    %v144 = vunpack.c.l.b16 %v40
    %v145 = vunpack.c.h.b16 %v40
    %v146 = vunpack.c.l.b16 %v41
    %v147 = vunpack.c.h.b16 %v41
    %v148 = vunpack.c.l.b16 %v42
    %v149 = vunpack.c.h.b16 %v42
    %v150 = vunpack.c.l.b16 %v43
    %v151 = vunpack.c.h.b16 %v43
    %v152 = vunpack.c.l.b16 %v44
    %v153 = vunpack.c.h.b16 %v44
    %v154 = vunpack.c.l.b16 %v45
    %v155 = vunpack.c.h.b16 %v45
    %v156 = vunpack.c.l.b16 %v46
    %v157 = vunpack.c.h.b16 %v46
    %v158 = vunpack.c.l.b16 %v47
    %v159 = vunpack.c.h.b16 %v47
    %v160 = vunpack.c.l.b16 %v48
    %v161 = vunpack.c.h.b16 %v48
    %v162 = vunpack.c.l.b16 %v49
    %v163 = vunpack.c.h.b16 %v49
    %v164 = vunpack.c.l.b16 %v50
    %v165 = vunpack.c.h.b16 %v50
    %v166 = vunpack.c.l.b16 %v51
    %v167 = vunpack.c.h.b16 %v51
    %v168 = vunpack.c.l.b16 %v52
    %v169 = vunpack.c.h.b16 %v52
    %v170 = vunpack.c.l.b16 %v53
    %v171 = vunpack.c.h.b16 %v53
    %v172 = vunpack.c.l.b16 %v54
    %v173 = vunpack.c.h.b16 %v54
    %v174 = vunpack.c.l.b16 %v55
    %v175 = vunpack.c.h.b16 %v55
    %v176 = vunpack.c.l.b16 %v56
    %v177 = vunpack.c.h.b16 %v56
    %v178 = vpack.c.b16 %v116, %v114
    %v179 = vpack.c.b16 %v117, %v115
    %v180 = vpack.c.b16 %v120, %v118
    %v181 = vpack.c.b16 %v121, %v119
    %v182 = vpack.c.b16 %v124, %v122
    %v183 = vpack.c.b16 %v125, %v123
    %v184 = vpack.c.b16 %v128, %v126
    %v185 = vpack.c.b16 %v129, %v127
    %v186 = vpack.c.b16 %v132, %v130
    %v187 = vpack.c.b16 %v133, %v131
    %v188 = vpack.c.b16 %v136, %v134
    %v189 = vpack.c.b16 %v137, %v135
    %v190 = vpack.c.b16 %v140, %v138
    %v191 = vpack.c.b16 %v141, %v139
    %v192 = vpack.c.b16 %v144, %v142
    %v193 = vpack.c.b16 %v145, %v143
    %v194 = vpack.c.b16 %v148, %v146
    %v195 = vpack.c.b16 %v149, %v147
    %v196 = vpack.c.b16 %v152, %v150
    %v197 = vpack.c.b16 %v153, %v151
    %v198 = vpack.c.b16 %v156, %v154
    %v199 = vpack.c.b16 %v157, %v155
    %v200 = vpack.c.b16 %v160, %v158
    %v201 = vpack.c.b16 %v161, %v159
    %v202 = vpack.c.b16 %v164, %v162
    %v203 = vpack.c.b16 %v165, %v163
    %v204 = vpack.c.b16 %v168, %v166
    %v205 = vpack.c.b16 %v169, %v167
    %v206 = vpack.c.b16 %v172, %v170
    %v207 = vpack.c.b16 %v173, %v171
    %v208 = vpack.c.b16 %v176, %v174
    %v209 = vpack.c.b16 %v177, %v175
    %242 = vmatprep.subr.bf16.mxu0 %v179
    %243 = vmatpush1.bf16.msra.mxu0 %v178
    %244 = vmatprep.subr.bf16.mxu0 %v181
    %245 = vmatpush1.bf16.msra.mxu0 %v180
    %246 = vmatprep.subr.bf16.mxu0 %v183
    %247 = vmatpush1.bf16.msra.mxu0 %v182
    %248 = vmatprep.subr.bf16.mxu0 %v185
    %249 = vmatpush1.bf16.msra.mxu0 %v184
    %250 = vmatprep.subr.bf16.mxu0 %v187
    %251 = vmatpush1.bf16.msra.mxu0 %v186
    %252 = vmatprep.subr.bf16.mxu0 %v189
    %253 = vmatpush1.bf16.msra.mxu0 %v188
    %254 = vmatprep.subr.bf16.mxu0 %v191
    %255 = vmatpush1.bf16.msra.mxu0 %v190
    %256 = vmatprep.subr.bf16.mxu0 %v193
    %257 = vmatpush1.bf16.msra.mxu0 %v192
    %258 = vmatprep.subr.bf16.mxu0 %v195
    %259 = vmatpush1.bf16.msra.mxu0 %v194
    %260 = vmatprep.subr.bf16.mxu0 %v197
    %261 = vmatpush1.bf16.msra.mxu0 %v196
    %262 = vmatprep.subr.bf16.mxu0 %v199
    %263 = vmatpush1.bf16.msra.mxu0 %v198
    %264 = vmatprep.subr.bf16.mxu0 %v201
    %265 = vmatpush1.bf16.msra.mxu0 %v200
    %266 = vmatprep.subr.bf16.mxu0 %v203
    %267 = vmatpush1.bf16.msra.mxu0 %v202
    %268 = vmatprep.subr.bf16.mxu0 %v205
    %269 = vmatpush1.bf16.msra.mxu0 %v204
    %270 = vmatprep.subr.bf16.mxu0 %v207
    %271 = vmatpush1.bf16.msra.mxu0 %v206
    %272 = vmatprep.subr.bf16.mxu0 %v209
    %273 = vmatpush1.bf16.msra.mxu0 %v208
    %274 = vmatprep.mubr.bf16.mxu0 %v79
    %275 = vmatmul.mubr.bf16.gmra.mrb[0].mxu0 %v72
    %v276 = vpop.f32.mrb[0].mxu0
    %v277 = vadd.f32 0.0, %v276
    %v278 = vpop.f32.mrb[0].mxu0
    %v279 = vadd.f32 0.0, %v278
    %v280 = vpop.f32.mrb[0].mxu0
    %v281 = vpop.f32.mrb[0].mxu0
    %282 = vdwg.mxu0
    %v285 = vcombine.low %v277, %v279
    %v287 = vunpack.c.l.s4 1966171168
    %v288 = vunpack.c.0.s8 %v287
    %v289 = vlaneseq
    %v290 = vshrl.u32 %v289, 7
    %v291 = vsub.s32 %v288, %v290
    %v292 = vrot.slane %v285, %v291
    %v294 = vunpack.c.l.s4 1966171168
    %v295 = vunpack.c.0.s8 %v294
    %v296 = vlaneseq
    %v297 = vshrl.u32 %v296, 7
    %v298 = vsub.s32 %v295, %v297
    %v299 = vrot.slane %v292, %v298
    %v301 = vadd.f32 %v23, %v299
    %v302 = vlaneseq
    %vm303 = vcmp.ge.s32.totalorder %v302, 0
    %vm304 = vcmp.lt.s32.totalorder %v302, 256
    %vm305 = vmand %vm303, %vm304
    %306 = vst.msk [vmem:[#allocation2] ss:$2 sm:$0x3] %vm305, %v301
    %s307 = scalar_lea.vmem [#allocation2], 1
    %v308 = vld [vmem:[%s307] ss:$2 sm:$0x3]
    %v309 = vld [vmem:[%s1] sm:$0x3]
    %s310 = scalar_lea.vmem %s0, 256
    %v311 = vld [vmem:[%s310] sm:$0xff]
    %v312 = vld [vmem:[%s310 + $0x8] sm:$0xff]
    %v313 = vld [vmem:[%s310 + $0x10] sm:$0xff]
    %v314 = vld [vmem:[%s310 + $0x18] sm:$0xff]
    %v315 = vld [vmem:[%s310 + $0x20] sm:$0xff]
    %v316 = vld [vmem:[%s310 + $0x28] sm:$0xff]
    %v317 = vld [vmem:[%s310 + $0x30] sm:$0xff]
    %v318 = vld [vmem:[%s310 + $0x38] sm:$0xff]
    %v319 = vld [vmem:[%s310 + $0x40] sm:$0xff]
    %v320 = vld [vmem:[%s310 + $0x48] sm:$0xff]
    %v321 = vld [vmem:[%s310 + $0x50] sm:$0xff]
    %v322 = vld [vmem:[%s310 + $0x58] sm:$0xff]
    %v323 = vld [vmem:[%s310 + $0x60] sm:$0xff]
    %v324 = vld [vmem:[%s310 + $0x68] sm:$0xff]
    %v325 = vld [vmem:[%s310 + $0x70] sm:$0xff]
    %v326 = vld [vmem:[%s310 + $0x78] sm:$0xff]
    %v327 = vld [vmem:[%s310 + $0x80] sm:$0xff]
    %v328 = vld [vmem:[%s310 + $0x88] sm:$0xff]
    %v329 = vld [vmem:[%s310 + $0x90] sm:$0xff]
    %v330 = vld [vmem:[%s310 + $0x98] sm:$0xff]
    %v331 = vld [vmem:[%s310 + $0xa0] sm:$0xff]
    %v332 = vld [vmem:[%s310 + $0xa8] sm:$0xff]
    %v333 = vld [vmem:[%s310 + $0xb0] sm:$0xff]
    %v334 = vld [vmem:[%s310 + $0xb8] sm:$0xff]
    %v335 = vld [vmem:[%s310 + $0xc0] sm:$0xff]
    %v336 = vld [vmem:[%s310 + $0xc8] sm:$0xff]
    %v337 = vld [vmem:[%s310 + $0xd0] sm:$0xff]
    %v338 = vld [vmem:[%s310 + $0xd8] sm:$0xff]
    %v339 = vld [vmem:[%s310 + $0xe0] sm:$0xff]
    %v340 = vld [vmem:[%s310 + $0xe8] sm:$0xff]
    %v341 = vld [vmem:[%s310 + $0xf0] sm:$0xff]
    %v342 = vld [vmem:[%s310 + $0xf8] sm:$0xff]
    %v345 = vunpack.c.l.s4 1966171168
    %v346 = vunpack.c.0.s8 %v345
    %v347 = vlaneseq
    %v348 = vshrl.u32 %v347, 7
    %v349 = vsub.s32 %v346, %v348
    %v350 = vrot.slane %v309, %v349
    %v351 = vcombine.high %v350, %v350
    %v353 = vunpack.c.l.s4 1966171168
    %v354 = vunpack.c.0.s8 %v353
    %v355 = vlaneseq
    %v356 = vshrl.u32 %v355, 7
    %v357 = vsub.s32 %v354, %v356
    %v358 = vrot.slane %v350, %v357
    %v360 = vunpack.c.l.s4 1966171168
    %v361 = vunpack.c.0.s8 %v360
    %v362 = vlaneseq
    %v363 = vshrl.u32 %v362, 7
    %v364 = vsub.s32 %v361, %v363
    %v365 = vrot.slane %v351, %v364
    %v367 = vshrl.u32 %v358, 16
    %v370 = vshrl.u32 %v365, 16
    %v406 = vunpack.c.l.b16 %v311
    %v407 = vunpack.c.h.b16 %v311
    %v408 = vunpack.c.l.b16 %v312
    %v409 = vunpack.c.h.b16 %v312
    %v410 = vunpack.c.l.b16 %v313
    %v411 = vunpack.c.h.b16 %v313
    %v412 = vunpack.c.l.b16 %v314
    %v413 = vunpack.c.h.b16 %v314
    %v414 = vunpack.c.l.b16 %v315
    %v415 = vunpack.c.h.b16 %v315
    %v416 = vunpack.c.l.b16 %v316
    %v417 = vunpack.c.h.b16 %v316
    %v418 = vunpack.c.l.b16 %v317
    %v419 = vunpack.c.h.b16 %v317
    %v420 = vunpack.c.l.b16 %v318
    %v421 = vunpack.c.h.b16 %v318
    %v422 = vunpack.c.l.b16 %v319
    %v423 = vunpack.c.h.b16 %v319
    %v424 = vunpack.c.l.b16 %v320
    %v425 = vunpack.c.h.b16 %v320
    %v426 = vunpack.c.l.b16 %v321
    %v427 = vunpack.c.h.b16 %v321
    %v428 = vunpack.c.l.b16 %v322
    %v429 = vunpack.c.h.b16 %v322
    %v430 = vunpack.c.l.b16 %v323
    %v431 = vunpack.c.h.b16 %v323
    %v432 = vunpack.c.l.b16 %v324
    %v433 = vunpack.c.h.b16 %v324
    %v434 = vunpack.c.l.b16 %v325
    %v435 = vunpack.c.h.b16 %v325
    %v436 = vunpack.c.l.b16 %v326
    %v437 = vunpack.c.h.b16 %v326
    %v438 = vunpack.c.l.b16 %v327
    %v439 = vunpack.c.h.b16 %v327
    %v440 = vunpack.c.l.b16 %v328
    %v441 = vunpack.c.h.b16 %v328
    %v442 = vunpack.c.l.b16 %v329
    %v443 = vunpack.c.h.b16 %v329
    %v444 = vunpack.c.l.b16 %v330
    %v445 = vunpack.c.h.b16 %v330
    %v446 = vunpack.c.l.b16 %v331
    %v447 = vunpack.c.h.b16 %v331
    %v448 = vunpack.c.l.b16 %v332
    %v449 = vunpack.c.h.b16 %v332
    %v450 = vunpack.c.l.b16 %v333
    %v451 = vunpack.c.h.b16 %v333
    %v452 = vunpack.c.l.b16 %v334
    %v453 = vunpack.c.h.b16 %v334
    %v454 = vunpack.c.l.b16 %v335
    %v455 = vunpack.c.h.b16 %v335
    %v456 = vunpack.c.l.b16 %v336
    %v457 = vunpack.c.h.b16 %v336
    %v458 = vunpack.c.l.b16 %v337
    %v459 = vunpack.c.h.b16 %v337
    %v460 = vunpack.c.l.b16 %v338
    %v461 = vunpack.c.h.b16 %v338
    %v462 = vunpack.c.l.b16 %v339
    %v463 = vunpack.c.h.b16 %v339
    %v464 = vunpack.c.l.b16 %v340
    %v465 = vunpack.c.h.b16 %v340
    %v466 = vunpack.c.l.b16 %v341
    %v467 = vunpack.c.h.b16 %v341
    %v468 = vunpack.c.l.b16 %v342
    %v469 = vunpack.c.h.b16 %v342
    %v470 = vpack.c.b16 %v408, %v406
    %v471 = vpack.c.b16 %v409, %v407
    %v472 = vpack.c.b16 %v412, %v410
    %v473 = vpack.c.b16 %v413, %v411
    %v474 = vpack.c.b16 %v416, %v414
    %v475 = vpack.c.b16 %v417, %v415
    %v476 = vpack.c.b16 %v420, %v418
    %v477 = vpack.c.b16 %v421, %v419
    %v478 = vpack.c.b16 %v424, %v422
    %v479 = vpack.c.b16 %v425, %v423
    %v480 = vpack.c.b16 %v428, %v426
    %v481 = vpack.c.b16 %v429, %v427
    %v482 = vpack.c.b16 %v432, %v430
    %v483 = vpack.c.b16 %v433, %v431
    %v484 = vpack.c.b16 %v436, %v434
    %v485 = vpack.c.b16 %v437, %v435
    %v486 = vpack.c.b16 %v440, %v438
    %v487 = vpack.c.b16 %v441, %v439
    %v488 = vpack.c.b16 %v444, %v442
    %v489 = vpack.c.b16 %v445, %v443
    %v490 = vpack.c.b16 %v448, %v446
    %v491 = vpack.c.b16 %v449, %v447
    %v492 = vpack.c.b16 %v452, %v450
    %v493 = vpack.c.b16 %v453, %v451
    %v494 = vpack.c.b16 %v456, %v454
    %v495 = vpack.c.b16 %v457, %v455
    %v496 = vpack.c.b16 %v460, %v458
    %v497 = vpack.c.b16 %v461, %v459
    %v498 = vpack.c.b16 %v464, %v462
    %v499 = vpack.c.b16 %v465, %v463
    %v500 = vpack.c.b16 %v468, %v466
    %v501 = vpack.c.b16 %v469, %v467
    %534 = vmatprep.subr.bf16.mxu0 %v471
    %535 = vmatpush1.bf16.msra.mxu0 %v470
    %536 = vmatprep.subr.bf16.mxu0 %v473
    %537 = vmatpush1.bf16.msra.mxu0 %v472
    %538 = vmatprep.subr.bf16.mxu0 %v475
    %539 = vmatpush1.bf16.msra.mxu0 %v474
    %540 = vmatprep.subr.bf16.mxu0 %v477
    %541 = vmatpush1.bf16.msra.mxu0 %v476
    %542 = vmatprep.subr.bf16.mxu0 %v479
    %543 = vmatpush1.bf16.msra.mxu0 %v478
    %544 = vmatprep.subr.bf16.mxu0 %v481
    %545 = vmatpush1.bf16.msra.mxu0 %v480
    %546 = vmatprep.subr.bf16.mxu0 %v483
    %547 = vmatpush1.bf16.msra.mxu0 %v482
    %548 = vmatprep.subr.bf16.mxu0 %v485
    %549 = vmatpush1.bf16.msra.mxu0 %v484
    %550 = vmatprep.subr.bf16.mxu0 %v487
    %551 = vmatpush1.bf16.msra.mxu0 %v486
    %552 = vmatprep.subr.bf16.mxu0 %v489
    %553 = vmatpush1.bf16.msra.mxu0 %v488
    %554 = vmatprep.subr.bf16.mxu0 %v491
    %555 = vmatpush1.bf16.msra.mxu0 %v490
    %556 = vmatprep.subr.bf16.mxu0 %v493
    %557 = vmatpush1.bf16.msra.mxu0 %v492
    %558 = vmatprep.subr.bf16.mxu0 %v495
    %559 = vmatpush1.bf16.msra.mxu0 %v494
    %560 = vmatprep.subr.bf16.mxu0 %v497
    %561 = vmatpush1.bf16.msra.mxu0 %v496
    %562 = vmatprep.subr.bf16.mxu0 %v499
    %563 = vmatpush1.bf16.msra.mxu0 %v498
    %564 = vmatprep.subr.bf16.mxu0 %v501
    %565 = vmatpush1.bf16.msra.mxu0 %v500
    %566 = vmatprep.mubr.bf16.mxu0 %v370
    %567 = vmatmul.mubr.bf16.gmra.mrb[0].mxu0 %v367
    %v568 = vpop.f32.mrb[0].mxu0
    %v569 = vadd.f32 0.0, %v568
    %v570 = vpop.f32.mrb[0].mxu0
    %v571 = vadd.f32 0.0, %v570
    %v572 = vpop.f32.mrb[0].mxu0
    %v573 = vpop.f32.mrb[0].mxu0
    %574 = vdwg.mxu0
    %v577 = vcombine.low %v569, %v571
    %v579 = vunpack.c.l.s4 1966171168
    %v580 = vunpack.c.0.s8 %v579
    %v581 = vlaneseq
    %v582 = vshrl.u32 %v581, 7
    %v583 = vsub.s32 %v580, %v582
    %v584 = vrot.slane %v577, %v583
    %v586 = vunpack.c.l.s4 1966171168
    %v587 = vunpack.c.0.s8 %v586
    %v588 = vlaneseq
    %v589 = vshrl.u32 %v588, 7
    %v590 = vsub.s32 %v587, %v589
    %v591 = vrot.slane %v584, %v590
    %v593 = vadd.f32 %v308, %v591
    %594 = vst.msk [vmem:[%s307] ss:$2 sm:$0x3] %vm305, %v593
    // Predicated region
    $region22: #{_lambda_.3} parent=1 // pred_check
      %p595 = pneg %p18
    $region23: #{_lambda_.3} parent=1 // pred_check_branch
      %597 = sbr.rel (%p595) target = $region25
    $region24: #{_lambda_.3} parent=1 // pred_region
      %v598 = vld [vmem:[#allocation2] sm:$0xf]
      %v599 = vld [vmem:[%s2] sm:$0xf]
      %v600 = vmul.f32 %v598, %v599
      %v601 = vmul.f32 %v600, 0.00390625
      %v602 = vld [vmem:[%s3] sm:$0xff]
      %v603 = vld [vmem:[%s3 + $0x8] sm:$0xff]
      %v604 = vld [vmem:[%s3 + $0x10] sm:$0xff]
      %v605 = vld [vmem:[%s3 + $0x18] sm:$0xff]
      %v606 = vld [vmem:[%s3 + $0x20] sm:$0xff]
      %v607 = vld [vmem:[%s3 + $0x28] sm:$0xff]
      %v608 = vld [vmem:[%s3 + $0x30] sm:$0xff]
      %v609 = vld [vmem:[%s3 + $0x38] sm:$0xff]
      %v610 = vld [vmem:[%s3 + $0x40] sm:$0xff]
      %v611 = vld [vmem:[%s3 + $0x48] sm:$0xff]
      %v612 = vld [vmem:[%s3 + $0x50] sm:$0xff]
      %v613 = vld [vmem:[%s3 + $0x58] sm:$0xff]
      %v614 = vld [vmem:[%s3 + $0x60] sm:$0xff]
      %v615 = vld [vmem:[%s3 + $0x68] sm:$0xff]
      %v616 = vld [vmem:[%s3 + $0x70] sm:$0xff]
      %v617 = vld [vmem:[%s3 + $0x78] sm:$0xff]
      %v618 = vld [vmem:[%s3 + $0x80] sm:$0xff]
      %v619 = vld [vmem:[%s3 + $0x88] sm:$0xff]
      %v620 = vld [vmem:[%s3 + $0x90] sm:$0xff]
      %v621 = vld [vmem:[%s3 + $0x98] sm:$0xff]
      %v622 = vld [vmem:[%s3 + $0xa0] sm:$0xff]
      %v623 = vld [vmem:[%s3 + $0xa8] sm:$0xff]
      %v624 = vld [vmem:[%s3 + $0xb0] sm:$0xff]
      %v625 = vld [vmem:[%s3 + $0xb8] sm:$0xff]
      %v626 = vld [vmem:[%s3 + $0xc0] sm:$0xff]
      %v627 = vld [vmem:[%s3 + $0xc8] sm:$0xff]
      %v628 = vld [vmem:[%s3 + $0xd0] sm:$0xff]
      %v629 = vld [vmem:[%s3 + $0xd8] sm:$0xff]
      %v630 = vld [vmem:[%s3 + $0xe0] sm:$0xff]
      %v631 = vld [vmem:[%s3 + $0xe8] sm:$0xff]
      %v632 = vld [vmem:[%s3 + $0xf0] sm:$0xff]
      %v633 = vld [vmem:[%s3 + $0xf8] sm:$0xff]
      %v636 = vunpack.c.l.s4 1983009808
      %v637 = vunpack.c.0.s8 %v636
      %v638 = vlaneseq
      %v639 = vshrl.u32 %v638, 7
      %v640 = vsub.s32 %v637, %v639
      %v641 = vrot.slane %v601, %v640
      %v642 = vcombine.high %v641, %v641
      %645 = vmatprep.subr.mxu0 0.0
      %646 = vmatpush1.msra.mxu0 %v602
      %647 = vmatprep.subr.mxu0 0.0
      %648 = vmatpush1.msra.mxu0 %v603
      %649 = vmatprep.subr.mxu0 0.0
      %650 = vmatpush1.msra.mxu0 %v604
      %651 = vmatprep.subr.mxu0 0.0
      %652 = vmatpush1.msra.mxu0 %v605
      %653 = vmatprep.subr.mxu0 0.0
      %654 = vmatpush1.msra.mxu0 %v606
      %655 = vmatprep.subr.mxu0 0.0
      %656 = vmatpush1.msra.mxu0 %v607
      %657 = vmatprep.subr.mxu0 0.0
      %658 = vmatpush1.msra.mxu0 %v608
      %659 = vmatprep.subr.mxu0 0.0
      %660 = vmatpush1.msra.mxu0 %v609
      %661 = vmatprep.subr.mxu0 0.0
      %662 = vmatpush1.msra.mxu0 %v610
      %663 = vmatprep.subr.mxu0 0.0
      %664 = vmatpush1.msra.mxu0 %v611
      %665 = vmatprep.subr.mxu0 0.0
      %666 = vmatpush1.msra.mxu0 %v612
      %667 = vmatprep.subr.mxu0 0.0
      %668 = vmatpush1.msra.mxu0 %v613
      %669 = vmatprep.subr.mxu0 0.0
      %670 = vmatpush1.msra.mxu0 %v614
      %671 = vmatprep.subr.mxu0 0.0
      %672 = vmatpush1.msra.mxu0 %v615
      %673 = vmatprep.subr.mxu0 0.0
      %674 = vmatpush1.msra.mxu0 %v616
      %675 = vmatprep.subr.mxu0 0.0
      %676 = vmatpush1.msra.mxu0 %v617
      %677 = vmatprep.subr.mxu0 0.0
      %678 = vmatpush1.msra.mxu0 %v618
      %679 = vmatprep.subr.mxu0 0.0
      %680 = vmatpush1.msra.mxu0 %v619
      %681 = vmatprep.subr.mxu0 0.0
      %682 = vmatpush1.msra.mxu0 %v620
      %683 = vmatprep.subr.mxu0 0.0
      %684 = vmatpush1.msra.mxu0 %v621
      %685 = vmatprep.subr.mxu0 0.0
      %686 = vmatpush1.msra.mxu0 %v622
      %687 = vmatprep.subr.mxu0 0.0
      %688 = vmatpush1.msra.mxu0 %v623
      %689 = vmatprep.subr.mxu0 0.0
      %690 = vmatpush1.msra.mxu0 %v624
      %691 = vmatprep.subr.mxu0 0.0
      %692 = vmatpush1.msra.mxu0 %v625
      %693 = vmatprep.subr.mxu0 0.0
      %694 = vmatpush1.msra.mxu0 %v626
      %695 = vmatprep.subr.mxu0 0.0
      %696 = vmatpush1.msra.mxu0 %v627
      %697 = vmatprep.subr.mxu0 0.0
      %698 = vmatpush1.msra.mxu0 %v628
      %699 = vmatprep.subr.mxu0 0.0
      %700 = vmatpush1.msra.mxu0 %v629
      %701 = vmatprep.subr.mxu0 0.0
      %702 = vmatpush1.msra.mxu0 %v630
      %703 = vmatprep.subr.mxu0 0.0
      %704 = vmatpush1.msra.mxu0 %v631
      %705 = vmatprep.subr.mxu0 0.0
      %706 = vmatpush1.msra.mxu0 %v632
      %707 = vmatprep.subr.mxu0 0.0
      %708 = vmatpush1.msra.mxu0 %v633
      %709 = vmatprep.mubr.f32.mxu0 %v642
      %710 = vmatmul.mubr.f32.gmra.mrb[0].mxu0 %v641
      %v711 = vpop.f32.mrb[0].mxu0
      %v712 = vadd.f32 0.0, %v711
      %v713 = vpop.f32.mrb[0].mxu0
      %714 = vdwg.mxu0
      %vm715 = vcmask 9216
      %v716 = vsel %vm715, %v712, -inf
      %717 = vmax.xlane.f32.xlu0 %v716
      %v718 = vpop.xlane.xlu0 %717
      %v719 = vsub.f32 %v712, %v718
      %v720 = vmul.f32 %v719, 1.442695
      %v721 = vpow.pop %v720
      %v722 = vsel %vm715, %v721, 0.0
      %723 = vadd.xlane.f32.xlu0 %v722
      %v724 = vpop.xlane.xlu0 %723
      %v725 = vrcp.pop %v724
      %v726 = vmul.f32 %v721, %v725
      %v727 = vmul.f32 %v726, 2.0
      %v728 = vsel %vm715, %v727, 0.0
      %729 = vadd.xlane.f32.xlu0 %v728
      %v730 = vpop.xlane.xlu0 %729
      %v731 = vrcp.pop 2.0
      %v732 = vmul.f32 %v730, %v731
      %v733 = vsub.f32 %v727, %v732
      %v734 = vmul.f32 %v733, %v733
      %v735 = vsel %vm715, %v734, 0.0
      %736 = vadd.xlane.f32.xlu0 %v735
      %v737 = vpop.xlane.xlu0 %736
      %v738 = vrsqrt.pop %v737
      %v739 = vmul.f32 %v733, %v738
      %v740 = vadd.f32 %v739, 1.0
      %741 = vst.msk [vmem:[#allocation3] sm:$0x3] %vm715, %v740
    $region25: #{_lambda_.3} parent=1 // pred_fallthru
      _
    // Predicated region
    $region26: #{_lambda_.3} parent=1 // pred_check
      _
    $region27: #{_lambda_.3} parent=1 // pred_check_branch
      %743 = sbr.rel (0) target = $region29
    $region28: #{_lambda_.3} parent=1 // pred_region
      %s745 = ssub.s32 32, 32
      %746 = vsyncadd [#allocation4], %s745
      %s748 = sshll.u32 [#allocation3], 4
      %s749 = int_to_ptr.vmem [resolvable:$true] %s748
      %751 = dma.vmem_to_hbm [thread:$0]  %s749, 32, %s4, [#allocation4]
    $region29: #{_lambda_.3} parent=1 // pred_fallthru
      _
    // Predicated region
    $region30: #{_lambda_.3} parent=1 // pred_check
      _
    $region31: #{_lambda_.3} parent=1 // pred_check_branch
      %753 = sbr.rel (0) target = $region33
    $region32: #{_lambda_.3} parent=1 // pred_region
      %754 = dma.done [#allocation4], 32
    $region33: #{_lambda_.3} parent=1 // pred_fallthru
      _
    %755 = vsyncpa [#allocation4], 1

</llo_original>
